<compile_context>
chip_gen: v7x
topology: tpu7x:2x2x1
jax: 0.10.0
libtpu: 0.0.40
codegen_flags: <defaults>
</compile_context>

<pallas_src>
import functools
import math

import jax
import jax.numpy as jnp
from jax.experimental import pallas as pl
from jax.experimental.pallas import tpu as pltpu

# ----------------------------- small config ---------------------------------
B = 2
IMG_SIZE, PATCH, CHANNELS = 16, 8, 3
NUM_PATCHES = (IMG_SIZE // PATCH) ** 2            # 4 image tokens per image
V_HIDDEN, V_HEADS, V_INTER, V_LAYERS = 32, 2, 64, 2
V_HEAD_DIM = V_HIDDEN // V_HEADS                  # 16

VOCAB = 128
HIDDEN, INTER, N_LAYERS = 32, 64, 2
N_HEADS, KV_HEADS, HEAD_DIM = 2, 1, 16
SEQ = 8
IMG_TOKEN = 100
PAD_ID = -1                                       # pad_token_id None -> -1
RMS_EPS = 1e-6
LN_EPS = 1e-6
ROPE_THETA = 10000.0

# --------------------------- in-kernel helpers --------------------------------


def _mm(a, b):
    """bf16 MXU matmul with f32 accumulation."""
    return jnp.dot(a.astype(jnp.bfloat16), b.astype(jnp.bfloat16),
                   preferred_element_type=jnp.float32)


def _mm_nt(a, b):
    """a @ b.T (contract last dims of both), bf16 inputs, f32 accumulation."""
    return jax.lax.dot_general(
        a.astype(jnp.bfloat16), b.astype(jnp.bfloat16),
        (((1,), (1,)), ((), ())), preferred_element_type=jnp.float32)


def _rms(x, w, eps):
    var = jnp.mean(x * x, axis=-1, keepdims=True)
    return x * jax.lax.rsqrt(var + eps) * (1.0 + w)      # Gemma RMSNorm: (1+w)


def _ln(x, g, b, eps):
    mu = jnp.mean(x, axis=-1, keepdims=True)
    var = jnp.mean((x - mu) * (x - mu), axis=-1, keepdims=True)
    return (x - mu) * jax.lax.rsqrt(var + eps) * g + b


def _softmax_rows(s):
    s = s - jnp.max(s, axis=-1, keepdims=True)
    p = jnp.exp(s)
    return p * pl.reciprocal(jnp.sum(p, axis=-1, keepdims=True), approx=True)


def _attn_head(q, k, v, scale):
    """Single-head attention; prefix-LM (no mask <=> all-ones attn mask)."""
    p = _softmax_rows(_mm_nt(q, k) * scale)
    return _mm(p, v)


def _rope_halves(x, c, s):
    """Rotate-half RoPE, returned as two (S, D/2) halves (no lane concat)."""
    d = x.shape[-1]
    x1, x2 = x[:, : d // 2], x[:, d // 2:]
    return x1 * c - x2 * s, x2 * c + x1 * s


# ----------------------------- Pallas kernels --------------------------------


def _vision_stack_kernel(patches_ref, patch_w_ref, patch_b_ref, pos_ref,
                         ln1_g_ref, ln1_b_ref, qkv_w_ref, qkv_b_ref,
                         o_w_ref, o_b_ref, ln2_g_ref, ln2_b_ref,
                         fc1_w_ref, fc1_b_ref, fc2_w_ref, fc2_b_ref,
                         post_g_ref, post_b_ref, proj_w_ref, proj_b_ref,
                         o_ref, h_ref,
                         *, batch, tokens, n_heads, head_dim, eps, scale):
    """Whole SigLIP tower: grid axis = layer; hidden state lives in h_ref."""
    l = pl.program_id(0)
    dv = n_heads * head_dim

    @pl.when(l == 0)
    def _():  # patch embedding (conv == matmul) + learned position embeddings
        h_ref[...] = (_mm(patches_ref[...], patch_w_ref[...])
                      + patch_b_ref[...] + pos_ref[...])

    x = h_ref[...]                                        # (B*P, DV)
    # ---- attention block ----
    xn = _ln(x, ln1_g_ref[0], ln1_b_ref[0], eps)
    qkv = _mm(xn, qkv_w_ref[0]) + qkv_b_ref[0]            # (B*P, 3*DV)
    o_w = o_w_ref[0]
    rows = []
    for bi in range(batch):                               # per-image attention
        sl = slice(bi * tokens, (bi + 1) * tokens)
        acc = None
        # TODO(synk): at real sizes fold heads into fewer, larger MXU pushes.
        for h in range(n_heads):
            qh = qkv[sl, h * head_dim:(h + 1) * head_dim]
            kh = qkv[sl, dv + h * head_dim: dv + (h + 1) * head_dim]
            vh = qkv[sl, 2 * dv + h * head_dim: 2 * dv + (h + 1) * head_dim]
            ctx = _attn_head(qh, kh, vh, scale)
            contrib = _mm(ctx, o_w[h * head_dim:(h + 1) * head_dim, :])
            acc = contrib if acc is None else acc + contrib
        rows.append(acc)
    h1 = x + jnp.concatenate(rows, axis=0) + o_b_ref[0]
    # ---- MLP block ----
    xn2 = _ln(h1, ln2_g_ref[0], ln2_b_ref[0], eps)
    mlp = jax.nn.gelu(_mm(xn2, fc1_w_ref[0]) + fc1_b_ref[0], approximate=True)
    h2 = h1 + _mm(mlp, fc2_w_ref[0]) + fc2_b_ref[0]
    h_ref[...] = h2

    @pl.when(l == pl.num_programs(0) - 1)
    def _():  # fused post-LayerNorm + multimodal projector
        xo = _ln(h2, post_g_ref[...], post_b_ref[...], eps)
        o_ref[...] = _mm(xo, proj_w_ref[...]) + proj_b_ref[...]


def _gemma_stack_kernel(ids_ref, txt_ref, img_ref, cos_ref, sin_ref,
                        in_ln_ref, qkv_w_ref, o_w_ref,
                        post_ln_ref, gu_w_ref, down_w_ref,
                        final_ln_ref, embed_ref,
                        o_ref, h_ref,
                        *, batch, seq, n_heads, kv_heads, head_dim, inter,
                        rms_eps, scale, img_token, pad_id, inv_scale,
                        normalizer):
    """Merge + Gemma decoder stack + final norm + tied lm_head in one kernel."""
    l = pl.program_id(0)
    qd = n_heads * head_dim
    kvd = kv_heads * head_dim
    group = n_heads // kv_heads

    @pl.when(l == 0)
    def _():  # in-kernel token merge (masks built from int ids), fused sqrt(H)
        ids = ids_ref[...]                                # (B*S, 1) int32
        is_img = ids == img_token
        is_pad = ids == pad_id
        text_f = jnp.logical_and(jnp.logical_not(is_img),
                                 jnp.logical_not(is_pad)).astype(jnp.float32)
        img_f = is_img.astype(jnp.float32)
        merged = txt_ref[...] * text_f + img_ref[...] * (inv_scale * img_f)
        h_ref[...] = merged * normalizer                  # pad rows stay zero

    x = h_ref[...]                                        # (B*S, H)
    cos = cos_ref[...]                                    # (B*S, D/2)
    sin = sin_ref[...]
    # ---- attention block ----
    xn = _rms(x, in_ln_ref[0], rms_eps)
    qkv = _mm(xn, qkv_w_ref[0])                           # (B*S, qd + 2*kvd)
    o_w = o_w_ref[0]
    rows = []
    for bi in range(batch):                               # per-sequence attention
        sl = slice(bi * seq, (bi + 1) * seq)
        cb, sb = cos[sl], sin[sl]
        k_rot, v_heads = [], []
        for g in range(kv_heads):                         # GQA: rope K once
            kh = qkv[sl, qd + g * head_dim: qd + (g + 1) * head_dim]
            k_rot.append(_rope_halves(kh, cb, sb))
            v_heads.append(
                qkv[sl, qd + kvd + g * head_dim: qd + kvd + (g + 1) * head_dim])
        acc = None
        # TODO(synk): at real head_dim=256 fold heads into fewer MXU pushes.
        for h in range(n_heads):
            g = h // group
            qr1, qr2 = _rope_halves(qkv[sl, h * head_dim:(h + 1) * head_dim],
                                    cb, sb)
            kr1, kr2 = k_rot[g]
            # rotate-half RoPE folded into the score contraction (no concat)
            p = _softmax_rows((_mm_nt(qr1, kr1) + _mm_nt(qr2, kr2)) * scale)
            ctx = _mm(p, v_heads[g])
            contrib = _mm(ctx, o_w[h * head_dim:(h + 1) * head_dim, :])
            acc = contrib if acc is None else acc + contrib
        rows.append(acc)
    h1 = x + jnp.concatenate(rows, axis=0)
    # ---- GeGLU MLP block (gate|up fused into one matmul) ----
    xn2 = _rms(h1, post_ln_ref[0], rms_eps)
    gu = _mm(xn2, gu_w_ref[0])                            # (B*S, 2*inter)
    act = jax.nn.gelu(gu[:, :inter], approximate=True) * gu[:, inter:]
    h2 = h1 + _mm(act, down_w_ref[0])
    h_ref[...] = h2

    @pl.when(l == pl.num_programs(0) - 1)
    def _():  # final RMSNorm + tied lm_head (transposed contraction, no .T)
        xo = _rms(h2, final_ln_ref[...], rms_eps)
        o_ref[...] = _mm_nt(xo, embed_ref[...])           # (B*S, VOCAB) lane-dense


# --------------------------- pallas_call helper -------------------------------


def _resident_spec(shape):
    nd = len(shape)
    return pl.BlockSpec(tuple(shape), lambda l, _z=(0,) * nd: _z)


def _per_layer_spec(shape):
    nd = len(shape)
    return pl.BlockSpec((1,) + tuple(shape[1:]),
                        lambda l, _n=nd: (l,) + (0,) * (_n - 1))


def _stack_call(kernel, resident_in, per_layer_in, resident_tail, out_shape,
                scratch_shapes, n_layers):
    """One pallas_call over the layer axis; activations resident in scratch."""
    in_specs = ([_resident_spec(a.shape) for a in resident_in]
                + [_per_layer_spec(a.shape) for a in per_layer_in]
                + [_resident_spec(a.shape) for a in resident_tail])
    return pl.pallas_call(
        kernel,
        out_shape=out_shape,
        grid=(n_layers,),
        in_specs=in_specs,
        out_specs=_resident_spec(out_shape.shape),
        scratch_shapes=scratch_shapes,
        compiler_params=pltpu.CompilerParams(
            dimension_semantics=("arbitrary",)),          # sequential over layers
    )(*resident_in, *per_layer_in, *resident_tail)


# ------------------------------- model parts ----------------------------------


def vision_tower(pixel_values, params):
    """Patchify (glue) + fused SigLIP stack + projector (one kernel)."""
    vp = params['vision']
    b, c, h, w = pixel_values.shape
    hp, wp = h // PATCH, w // PATCH
    patches = pixel_values.reshape(b, c, hp, PATCH, wp, PATCH)
    patches = patches.transpose(0, 2, 4, 1, 3, 5).reshape(
        b * hp * wp, c * PATCH * PATCH)                   # (B*P, C*ph*pw)
    pos = jnp.tile(vp['pos_emb'], (b, 1))                 # (B*P, DV)

    resident = [patches, vp['patch_w'], vp['patch_b'], pos]
    per_layer = [vp['ln1_g'], vp['ln1_b'], vp['qkv_w'], vp['qkv_b'],
                 vp['o_w'], vp['o_b'], vp['ln2_g'], vp['ln2_b'],
                 vp['fc1_w'], vp['fc1_b'], vp['fc2_w'], vp['fc2_b']]
    tail = [vp['post_ln_g'], vp['post_ln_b'], params['proj_w'], params['proj_b']]

    out = _stack_call(
        functools.partial(_vision_stack_kernel, batch=b, tokens=NUM_PATCHES,
                          n_heads=V_HEADS, head_dim=V_HEAD_DIM, eps=LN_EPS,
                          scale=V_HEAD_DIM ** -0.5),
        resident, per_layer, tail,
        jax.ShapeDtypeStruct((b * NUM_PATCHES, HIDDEN), jnp.float32),
        [pltpu.VMEM((b * NUM_PATCHES, V_HIDDEN), jnp.float32)],
        V_LAYERS)
    return out.reshape(b, NUM_PATCHES, HIDDEN)


def gemma_stack(ids2, txt2, img2, cos_h, sin_h, tp, embed):
    bs = ids2.shape[0]
    batch = bs // SEQ
    resident = [ids2, txt2, img2, cos_h, sin_h]
    per_layer = [tp['input_ln'], tp['qkv_w'], tp['o_w'],
                 tp['post_ln'], tp['gu_w'], tp['down_w']]
    tail = [tp['final_ln'], embed]
    return _stack_call(
        functools.partial(_gemma_stack_kernel, batch=batch, seq=SEQ,
                          n_heads=N_HEADS, kv_heads=KV_HEADS,
                          head_dim=HEAD_DIM, inter=INTER, rms_eps=RMS_EPS,
                          scale=HEAD_DIM ** -0.5, img_token=IMG_TOKEN,
                          pad_id=PAD_ID, inv_scale=1.0 / math.sqrt(HIDDEN),
                          normalizer=math.sqrt(HIDDEN)),
        resident, per_layer, tail,
        jax.ShapeDtypeStruct((bs, VOCAB), jnp.float32),
        [pltpu.VMEM((bs, HIDDEN), jnp.float32)],
        N_LAYERS)


def paligemma_forward(params, input_ids, pixel_values, attention_mask):
    b, s = input_ids.shape

    # TODO(synk): embedding lookup is a gather -> plain JAX.
    txt_emb = jnp.take(params['embed'], input_ids, axis=0).astype(jnp.float32)

    # vision tower + multimodal projector: one fused kernel
    img = vision_tower(pixel_values.astype(jnp.float32), params)  # (B,P,HIDDEN)

    # masked_scatter alignment (glue gather): j-th image token of each row
    # receives img[b, j]; merge itself happens inside the Gemma kernel.
    img_mask = input_ids == IMG_TOKEN
    idx = jnp.clip(jnp.cumsum(img_mask.astype(jnp.int32), axis=-1) - 1, 0,
                   NUM_PATCHES - 1)
    img_aligned = jnp.take_along_axis(img, idx[..., None], axis=1)

    # prefix-LM positions (all-ones mask) + half-width RoPE trig tables (glue)
    position_ids = jnp.where(attention_mask == 0, 1,
                             jnp.cumsum(attention_mask, axis=-1))
    inv_freq = 1.0 / (ROPE_THETA ** (
        jnp.arange(0, HEAD_DIM, 2, dtype=jnp.float32) / HEAD_DIM))
    freqs = position_ids[..., None].astype(jnp.float32) * inv_freq
    cos_h = jnp.cos(freqs).reshape(b * s, HEAD_DIM // 2)
    sin_h = jnp.sin(freqs).reshape(b * s, HEAD_DIM // 2)

    # flatten batch into sublanes for the fused language-model kernel
    ids2 = input_ids.reshape(b * s, 1).astype(jnp.int32)
    txt2 = txt_emb.reshape(b * s, HIDDEN)
    img2 = img_aligned.reshape(b * s, HIDDEN)

    logits = gemma_stack(ids2, txt2, img2, cos_h, sin_h, params['text'],
                         params['embed'])
    return logits.reshape(b, s, VOCAB)


# ------------------------------ parameter init ---------------------------------


def init_params(key):
    ks = iter(jax.random.split(key, 64))
    bf = jnp.bfloat16

    def nrm(shape, s=0.02, dtype=jnp.float32):
        return (jax.random.normal(next(ks), shape, jnp.float32) * s).astype(dtype)

    vision = dict(
        patch_w=nrm((CHANNELS * PATCH * PATCH, V_HIDDEN), dtype=bf),
        patch_b=jnp.zeros((1, V_HIDDEN), jnp.float32),
        pos_emb=nrm((NUM_PATCHES, V_HIDDEN)),
        # per-layer weights stacked on a leading L axis (streamed by BlockSpec)
        ln1_g=jnp.ones((V_LAYERS, 1, V_HIDDEN), jnp.float32),
        ln1_b=jnp.zeros((V_LAYERS, 1, V_HIDDEN), jnp.float32),
        qkv_w=nrm((V_LAYERS, V_HIDDEN, 3 * V_HIDDEN), dtype=bf),   # q|k|v concat
        qkv_b=jnp.zeros((V_LAYERS, 1, 3 * V_HIDDEN), jnp.float32),
        o_w=nrm((V_LAYERS, V_HIDDEN, V_HIDDEN), dtype=bf),
        o_b=jnp.zeros((V_LAYERS, 1, V_HIDDEN), jnp.float32),
        ln2_g=jnp.ones((V_LAYERS, 1, V_HIDDEN), jnp.float32),
        ln2_b=jnp.zeros((V_LAYERS, 1, V_HIDDEN), jnp.float32),
        fc1_w=nrm((V_LAYERS, V_HIDDEN, V_INTER), dtype=bf),
        fc1_b=jnp.zeros((V_LAYERS, 1, V_INTER), jnp.float32),
        fc2_w=nrm((V_LAYERS, V_INTER, V_HIDDEN), dtype=bf),
        fc2_b=jnp.zeros((V_LAYERS, 1, V_HIDDEN), jnp.float32),
        post_ln_g=jnp.ones((1, V_HIDDEN), jnp.float32),
        post_ln_b=jnp.zeros((1, V_HIDDEN), jnp.float32),
    )
    qd, kvd = N_HEADS * HEAD_DIM, KV_HEADS * HEAD_DIM
    text = dict(
        input_ln=jnp.zeros((N_LAYERS, 1, HIDDEN), jnp.float32),
        qkv_w=nrm((N_LAYERS, HIDDEN, qd + 2 * kvd), dtype=bf),     # q|k|v concat
        o_w=nrm((N_LAYERS, qd, HIDDEN), dtype=bf),
        post_ln=jnp.zeros((N_LAYERS, 1, HIDDEN), jnp.float32),
        gu_w=nrm((N_LAYERS, HIDDEN, 2 * INTER), dtype=bf),         # gate|up concat
        down_w=nrm((N_LAYERS, INTER, HIDDEN), dtype=bf),
        final_ln=jnp.zeros((1, HIDDEN), jnp.float32),
    )
    return dict(
        embed=nrm((VOCAB, HIDDEN), dtype=bf),        # tied embed / lm_head (bf16)
        proj_w=nrm((V_HIDDEN, HIDDEN), dtype=bf),
        proj_b=jnp.zeros((1, HIDDEN), jnp.float32),
        vision=vision,
        text=text,
    )


# ----------------------------------- main --------------------------------------

if __name__ == "__main__":
    root = jax.random.PRNGKey(0)
    k_params, k_ids, k_pix = jax.random.split(root, 3)

    params = init_params(k_params)

    # image placeholder tokens first (PaliGemma convention), then text tokens
    text_ids = jax.random.randint(k_ids, (B, SEQ - NUM_PATCHES), 0, IMG_TOKEN,
                                  dtype=jnp.int32)
    input_ids = jnp.concatenate(
        [jnp.full((B, NUM_PATCHES), IMG_TOKEN, jnp.int32), text_ids], axis=1)
    pixel_values = jax.random.normal(k_pix, (B, CHANNELS, IMG_SIZE, IMG_SIZE),
                                     jnp.float32)
    attention_mask = jnp.ones((B, SEQ), jnp.int32)

    fwd = jax.jit(paligemma_forward)
    logits = fwd(params, input_ids, pixel_values, attention_mask)
    jax.block_until_ready(logits)
    assert logits.shape == (B, SEQ, VOCAB)
    assert bool(jnp.all(jnp.isfinite(logits)))
    print("KERNEL_OK")
</pallas_src>

<mosaic_0001>
module attributes {stable_mosaic.version = 11 : i64} {
  func.func @_vision_stack_kernel(%arg0: i32, %arg1: memref<8x192xf32, #tpu.memory_space<vmem>>, %arg2: memref<192x32xbf16, #tpu.memory_space<vmem>>, %arg3: memref<1x32xf32, #tpu.memory_space<vmem>>, %arg4: memref<8x32xf32, #tpu.memory_space<vmem>>, %arg5: memref<1x1x32xf32, #tpu.memory_space<vmem>>, %arg6: memref<1x1x32xf32, #tpu.memory_space<vmem>>, %arg7: memref<1x32x96xbf16, #tpu.memory_space<vmem>>, %arg8: memref<1x1x96xf32, #tpu.memory_space<vmem>>, %arg9: memref<1x32x32xbf16, #tpu.memory_space<vmem>>, %arg10: memref<1x1x32xf32, #tpu.memory_space<vmem>>, %arg11: memref<1x1x32xf32, #tpu.memory_space<vmem>>, %arg12: memref<1x1x32xf32, #tpu.memory_space<vmem>>, %arg13: memref<1x32x64xbf16, #tpu.memory_space<vmem>>, %arg14: memref<1x1x64xf32, #tpu.memory_space<vmem>>, %arg15: memref<1x64x32xbf16, #tpu.memory_space<vmem>>, %arg16: memref<1x1x32xf32, #tpu.memory_space<vmem>>, %arg17: memref<1x32xf32, #tpu.memory_space<vmem>>, %arg18: memref<1x32xf32, #tpu.memory_space<vmem>>, %arg19: memref<32x32xbf16, #tpu.memory_space<vmem>>, %arg20: memref<1x32xf32, #tpu.memory_space<vmem>>, %arg21: memref<8x32xf32, #tpu.memory_space<vmem>>, %arg22: memref<8x32xf32, #tpu.memory_space<vmem>>) attributes {dimension_semantics = [#tpu.dimension_semantics<arbitrary>], iteration_bounds = array<i64: 2>, scalar_prefetch = 0 : i64, scratch_operands = 1 : i64, tpu.core_type = #tpu.core_type<tc>, window_params = [{pipeline_mode = #tpu.pipeline_mode<synchronous>, transform_indices = @transform_0, window_bounds = array<i64: 8, 192>}, {pipeline_mode = #tpu.pipeline_mode<synchronous>, transform_indices = @transform_1, window_bounds = array<i64: 192, 32>}, {pipeline_mode = #tpu.pipeline_mode<synchronous>, transform_indices = @transform_2, window_bounds = array<i64: 1, 32>}, {pipeline_mode = #tpu.pipeline_mode<synchronous>, transform_indices = @transform_3, window_bounds = array<i64: 8, 32>}, {transform_indices = @transform_4, window_bounds = array<i64: 1, 1, 32>}, {transform_indices = @transform_5, window_bounds = array<i64: 1, 1, 32>}, {transform_indices = @transform_6, window_bounds = array<i64: 1, 32, 96>}, {transform_indices = @transform_7, window_bounds = array<i64: 1, 1, 96>}, {transform_indices = @transform_8, window_bounds = array<i64: 1, 32, 32>}, {transform_indices = @transform_9, window_bounds = array<i64: 1, 1, 32>}, {transform_indices = @transform_10, window_bounds = array<i64: 1, 1, 32>}, {transform_indices = @transform_11, window_bounds = array<i64: 1, 1, 32>}, {transform_indices = @transform_12, window_bounds = array<i64: 1, 32, 64>}, {transform_indices = @transform_13, window_bounds = array<i64: 1, 1, 64>}, {transform_indices = @transform_14, window_bounds = array<i64: 1, 64, 32>}, {transform_indices = @transform_15, window_bounds = array<i64: 1, 1, 32>}, {pipeline_mode = #tpu.pipeline_mode<synchronous>, transform_indices = @transform_16, window_bounds = array<i64: 1, 32>}, {pipeline_mode = #tpu.pipeline_mode<synchronous>, transform_indices = @transform_17, window_bounds = array<i64: 1, 32>}, {pipeline_mode = #tpu.pipeline_mode<synchronous>, transform_indices = @transform_18, window_bounds = array<i64: 32, 32>}, {pipeline_mode = #tpu.pipeline_mode<synchronous>, transform_indices = @transform_19, window_bounds = array<i64: 1, 32>}, {pipeline_mode = #tpu.pipeline_mode<synchronous>, transform_indices = @transform_20, window_bounds = array<i64: 8, 32>}]} {
    %c0_i32 = arith.constant 0 : i32
    %0 = arith.cmpi eq, %arg0, %c0_i32 : i32
    %1 = arith.extui %0 : i1 to i32
    %c0_i32_0 = arith.constant 0 : i32
    %2 = arith.cmpi ne, %1, %c0_i32_0 : i32
    scf.if %2 {
      %c0_81 = arith.constant 0 : index
      %c0_82 = arith.constant 0 : index
      %208 = vector.load %arg1[%c0_81, %c0_82] : memref<8x192xf32, #tpu.memory_space<vmem>>, vector<8x192xf32>
      %c0_83 = arith.constant 0 : index
      %c0_84 = arith.constant 0 : index
      %209 = vector.load %arg2[%c0_83, %c0_84] : memref<192x32xbf16, #tpu.memory_space<vmem>>, vector<192x32xbf16>
      %210 = arith.truncf %208 : vector<8x192xf32> to vector<8x192xbf16>
      %cst_85 = arith.constant dense<0.000000e+00> : vector<8x32xf32>
      %211 = tpu.matmul %210, %209, %cst_85 {dimension_numbers = #tpu.dot_dimension_numbers<[1], [0], [0], [1], [0, 0, 1, 1], [], []>} : vector<8x192xbf16>, vector<192x32xbf16>, vector<8x32xf32> -> vector<8x32xf32>
      %c0_86 = arith.constant 0 : index
      %c0_87 = arith.constant 0 : index
      %212 = vector.load %arg3[%c0_86, %c0_87] : memref<1x32xf32, #tpu.memory_space<vmem>>, vector<1x32xf32>
      %213 = vector.broadcast %212 : vector<1x32xf32> to vector<8x32xf32>
      %214 = arith.addf %211, %213 : vector<8x32xf32>
      %c0_88 = arith.constant 0 : index
      %c0_89 = arith.constant 0 : index
      %215 = vector.load %arg4[%c0_88, %c0_89] : memref<8x32xf32, #tpu.memory_space<vmem>>, vector<8x32xf32>
      %216 = arith.addf %214, %215 : vector<8x32xf32>
      %c0_90 = arith.constant 0 : index
      %c0_91 = arith.constant 0 : index
      %217 = vector.load %arg22[%c0_90, %c0_91] : memref<8x32xf32, #tpu.memory_space<vmem>>, vector<8x32xf32>
      tpu.vector_store %arg22[%c0_90, %c0_91], %216 {strides = array<i32>} : memref<8x32xf32, #tpu.memory_space<vmem>>, vector<8x32xf32>,
    } else {
    }
    %c0 = arith.constant 0 : index
    %c0_1 = arith.constant 0 : index
    %3 = vector.load %arg22[%c0, %c0_1] : memref<8x32xf32, #tpu.memory_space<vmem>>, vector<8x32xf32>
    %c0_2 = arith.constant 0 : index
    %c0_3 = arith.constant 0 : index
    %c0_4 = arith.constant 0 : index
    %4 = vector.load %arg5[%c0_2, %c0_3, %c0_4] : memref<1x1x32xf32, #tpu.memory_space<vmem>>, vector<1x1x32xf32>
    %5 = vector.shape_cast %4 : vector<1x1x32xf32> to vector<1x32xf32>
    %c0_5 = arith.constant 0 : index
    %c0_6 = arith.constant 0 : index
    %c0_7 = arith.constant 0 : index
    %6 = vector.load %arg6[%c0_5, %c0_6, %c0_7] : memref<1x1x32xf32, #tpu.memory_space<vmem>>, vector<1x1x32xf32>
    %7 = vector.shape_cast %6 : vector<1x1x32xf32> to vector<1x32xf32>
    %cst = arith.constant dense<0.000000e+00> : vector<8xf32>
    %8 = vector.multi_reduction <add>, %3, %cst [1] : vector<8x32xf32> to vector<8xf32>
    %9 = vector.shape_cast %8 : vector<8xf32> to vector<8x1xf32>
    %cst_8 = arith.constant 3.200000e+01 : f32
    %10 = vector.broadcast %cst_8 : f32 to vector<8x1xf32>
    %11 = arith.divf %9, %10 : vector<8x1xf32>
    %12 = vector.broadcast %11 : vector<8x1xf32> to vector<8x32xf32>
    %13 = arith.subf %3, %12 : vector<8x32xf32>
    %14 = vector.broadcast %11 : vector<8x1xf32> to vector<8x32xf32>
    %15 = arith.subf %3, %14 : vector<8x32xf32>
    %16 = arith.mulf %13, %15 : vector<8x32xf32>
    %cst_9 = arith.constant dense<0.000000e+00> : vector<8xf32>
    %17 = vector.multi_reduction <add>, %16, %cst_9 [1] : vector<8x32xf32> to vector<8xf32>
    %18 = vector.shape_cast %17 : vector<8xf32> to vector<8x1xf32>
    %cst_10 = arith.constant 3.200000e+01 : f32
    %19 = vector.broadcast %cst_10 : f32 to vector<8x1xf32>
    %20 = arith.divf %18, %19 : vector<8x1xf32>
    %21 = vector.broadcast %11 : vector<8x1xf32> to vector<8x32xf32>
    %22 = arith.subf %3, %21 : vector<8x32xf32>
    %cst_11 = arith.constant 9.99999997E-7 : f32
    %23 = vector.broadcast %cst_11 : f32 to vector<8x1xf32>
    %24 = arith.addf %20, %23 : vector<8x1xf32>
    %25 = math.rsqrt %24 : vector<8x1xf32>
    %26 = vector.broadcast %25 : vector<8x1xf32> to vector<8x32xf32>
    %27 = arith.mulf %22, %26 : vector<8x32xf32>
    %28 = vector.broadcast %5 : vector<1x32xf32> to vector<8x32xf32>
    %29 = arith.mulf %27, %28 : vector<8x32xf32>
    %30 = vector.broadcast %7 : vector<1x32xf32> to vector<8x32xf32>
    %31 = arith.addf %29, %30 : vector<8x32xf32>
    %c0_12 = arith.constant 0 : index
    %c0_13 = arith.constant 0 : index
    %c0_14 = arith.constant 0 : index
    %32 = vector.load %arg7[%c0_12, %c0_13, %c0_14] : memref<1x32x96xbf16, #tpu.memory_space<vmem>>, vector<1x32x96xbf16>
    %33 = vector.shape_cast %32 : vector<1x32x96xbf16> to vector<32x96xbf16>
    %34 = arith.truncf %31 : vector<8x32xf32> to vector<8x32xbf16>
    %cst_15 = arith.constant dense<0.000000e+00> : vector<8x96xf32>
    %35 = tpu.matmul %34, %33, %cst_15 {dimension_numbers = #tpu.dot_dimension_numbers<[1], [0], [0], [1], [0, 0, 1, 1], [], []>} : vector<8x32xbf16>, vector<32x96xbf16>, vector<8x96xf32> -> vector<8x96xf32>
    %c0_16 = arith.constant 0 : index
    %c0_17 = arith.constant 0 : index
    %c0_18 = arith.constant 0 : index
    %36 = vector.load %arg8[%c0_16, %c0_17, %c0_18] : memref<1x1x96xf32, #tpu.memory_space<vmem>>, vector<1x1x96xf32>
    %37 = vector.shape_cast %36 : vector<1x1x96xf32> to vector<1x96xf32>
    %38 = vector.broadcast %37 : vector<1x96xf32> to vector<8x96xf32>
    %39 = arith.addf %35, %38 : vector<8x96xf32>
    %c0_19 = arith.constant 0 : index
    %c0_20 = arith.constant 0 : index
    %c0_21 = arith.constant 0 : index
    %40 = vector.load %arg9[%c0_19, %c0_20, %c0_21] : memref<1x32x32xbf16, #tpu.memory_space<vmem>>, vector<1x32x32xbf16>
    %41 = vector.shape_cast %40 : vector<1x32x32xbf16> to vector<32x32xbf16>
    %42 = vector.extract_strided_slice %39 {offsets = [0, 0], sizes = [4, 16], strides = [1, 1]} : vector<8x96xf32> to vector<4x16xf32>
    %43 = vector.extract_strided_slice %39 {offsets = [0, 32], sizes = [4, 16], strides = [1, 1]} : vector<8x96xf32> to vector<4x16xf32>
    %44 = vector.extract_strided_slice %39 {offsets = [0, 64], sizes = [4, 16], strides = [1, 1]} : vector<8x96xf32> to vector<4x16xf32>
    %45 = arith.truncf %42 : vector<4x16xf32> to vector<4x16xbf16>
    %46 = arith.truncf %43 : vector<4x16xf32> to vector<4x16xbf16>
    %cst_22 = arith.constant dense<0.000000e+00> : vector<4x4xf32>
    %47 = tpu.matmul %45, %46, %cst_22 {dimension_numbers = #tpu.dot_dimension_numbers<[1], [1], [0], [0], [0, 0, 1, 0], [], []>} : vector<4x16xbf16>, vector<4x16xbf16>, vector<4x4xf32> -> vector<4x4xf32>
    %cst_23 = arith.constant 2.500000e-01 : f32
    %48 = vector.broadcast %cst_23 : f32 to vector<4x4xf32>
    %49 = arith.mulf %47, %48 : vector<4x4xf32>
    %cst_24 = arith.constant dense<0xFF800000> : vector<4xf32>
    %50 = vector.multi_reduction <maximumf>, %49, %cst_24 [1] : vector<4x4xf32> to vector<4xf32>
    %51 = vector.shape_cast %50 : vector<4xf32> to vector<4x1xf32>
    %52 = vector.broadcast %51 : vector<4x1xf32> to vector<4x4xf32>
    %53 = arith.subf %49, %52 : vector<4x4xf32>
    %54 = math.exp %53 : vector<4x4xf32>
    %cst_25 = arith.constant dense<0.000000e+00> : vector<4xf32>
    %55 = vector.multi_reduction <add>, %54, %cst_25 [1] : vector<4x4xf32> to vector<4xf32>
    %56 = vector.shape_cast %55 : vector<4xf32> to vector<4x1xf32>
    %57 = tpu.reciprocal %56 {approx = true} : vector<4x1xf32> -> vector<4x1xf32>
    %58 = vector.broadcast %57 : vector<4x1xf32> to vector<4x4xf32>
    %59 = arith.mulf %54, %58 : vector<4x4xf32>
    %60 = arith.truncf %59 : vector<4x4xf32> to vector<4x4xbf16>
    %61 = arith.truncf %44 : vector<4x16xf32> to vector<4x16xbf16>
    %cst_26 = arith.constant dense<0.000000e+00> : vector<4x16xf32>
    %62 = tpu.matmul %60, %61, %cst_26 {dimension_numbers = #tpu.dot_dimension_numbers<[1], [0], [0], [1], [0, 0, 1, 1], [], []>} : vector<4x4xbf16>, vector<4x16xbf16>, vector<4x16xf32> -> vector<4x16xf32>
    %63 = vector.extract_strided_slice %41 {offsets = [0, 0], sizes = [16, 32], strides = [1, 1]} : vector<32x32xbf16> to vector<16x32xbf16>
    %64 = arith.truncf %62 : vector<4x16xf32> to vector<4x16xbf16>
    %cst_27 = arith.constant dense<0.000000e+00> : vector<4x32xf32>
    %65 = tpu.matmul %64, %63, %cst_27 {dimension_numbers = #tpu.dot_dimension_numbers<[1], [0], [0], [1], [0, 0, 1, 1], [], []>} : vector<4x16xbf16>, vector<16x32xbf16>, vector<4x32xf32> -> vector<4x32xf32>
    %66 = vector.extract_strided_slice %39 {offsets = [0, 16], sizes = [4, 16], strides = [1, 1]} : vector<8x96xf32> to vector<4x16xf32>
    %67 = vector.extract_strided_slice %39 {offsets = [0, 48], sizes = [4, 16], strides = [1, 1]} : vector<8x96xf32> to vector<4x16xf32>
    %68 = vector.extract_strided_slice %39 {offsets = [0, 80], sizes = [4, 16], strides = [1, 1]} : vector<8x96xf32> to vector<4x16xf32>
    %69 = arith.truncf %66 : vector<4x16xf32> to vector<4x16xbf16>
    %70 = arith.truncf %67 : vector<4x16xf32> to vector<4x16xbf16>
    %cst_28 = arith.constant dense<0.000000e+00> : vector<4x4xf32>
    %71 = tpu.matmul %69, %70, %cst_28 {dimension_numbers = #tpu.dot_dimension_numbers<[1], [1], [0], [0], [0, 0, 1, 0], [], []>} : vector<4x16xbf16>, vector<4x16xbf16>, vector<4x4xf32> -> vector<4x4xf32>
    %cst_29 = arith.constant 2.500000e-01 : f32
    %72 = vector.broadcast %cst_29 : f32 to vector<4x4xf32>
    %73 = arith.mulf %71, %72 : vector<4x4xf32>
    %cst_30 = arith.constant dense<0xFF800000> : vector<4xf32>
    %74 = vector.multi_reduction <maximumf>, %73, %cst_30 [1] : vector<4x4xf32> to vector<4xf32>
    %75 = vector.shape_cast %74 : vector<4xf32> to vector<4x1xf32>
    %76 = vector.broadcast %75 : vector<4x1xf32> to vector<4x4xf32>
    %77 = arith.subf %73, %76 : vector<4x4xf32>
    %78 = math.exp %77 : vector<4x4xf32>
    %cst_31 = arith.constant dense<0.000000e+00> : vector<4xf32>
    %79 = vector.multi_reduction <add>, %78, %cst_31 [1] : vector<4x4xf32> to vector<4xf32>
    %80 = vector.shape_cast %79 : vector<4xf32> to vector<4x1xf32>
    %81 = tpu.reciprocal %80 {approx = true} : vector<4x1xf32> -> vector<4x1xf32>
    %82 = vector.broadcast %81 : vector<4x1xf32> to vector<4x4xf32>
    %83 = arith.mulf %78, %82 : vector<4x4xf32>
    %84 = arith.truncf %83 : vector<4x4xf32> to vector<4x4xbf16>
    %85 = arith.truncf %68 : vector<4x16xf32> to vector<4x16xbf16>
    %cst_32 = arith.constant dense<0.000000e+00> : vector<4x16xf32>
    %86 = tpu.matmul %84, %85, %cst_32 {dimension_numbers = #tpu.dot_dimension_numbers<[1], [0], [0], [1], [0, 0, 1, 1], [], []>} : vector<4x4xbf16>, vector<4x16xbf16>, vector<4x16xf32> -> vector<4x16xf32>
    %87 = vector.extract_strided_slice %41 {offsets = [16, 0], sizes = [16, 32], strides = [1, 1]} : vector<32x32xbf16> to vector<16x32xbf16>
    %88 = arith.truncf %86 : vector<4x16xf32> to vector<4x16xbf16>
    %cst_33 = arith.constant dense<0.000000e+00> : vector<4x32xf32>
    %89 = tpu.matmul %88, %87, %cst_33 {dimension_numbers = #tpu.dot_dimension_numbers<[1], [0], [0], [1], [0, 0, 1, 1], [], []>} : vector<4x16xbf16>, vector<16x32xbf16>, vector<4x32xf32> -> vector<4x32xf32>
    %90 = arith.addf %65, %89 : vector<4x32xf32>
    %91 = vector.extract_strided_slice %39 {offsets = [4, 0], sizes = [4, 16], strides = [1, 1]} : vector<8x96xf32> to vector<4x16xf32>
    %92 = vector.extract_strided_slice %39 {offsets = [4, 32], sizes = [4, 16], strides = [1, 1]} : vector<8x96xf32> to vector<4x16xf32>
    %93 = vector.extract_strided_slice %39 {offsets = [4, 64], sizes = [4, 16], strides = [1, 1]} : vector<8x96xf32> to vector<4x16xf32>
    %94 = arith.truncf %91 : vector<4x16xf32> to vector<4x16xbf16>
    %95 = arith.truncf %92 : vector<4x16xf32> to vector<4x16xbf16>
    %cst_34 = arith.constant dense<0.000000e+00> : vector<4x4xf32>
    %96 = tpu.matmul %94, %95, %cst_34 {dimension_numbers = #tpu.dot_dimension_numbers<[1], [1], [0], [0], [0, 0, 1, 0], [], []>} : vector<4x16xbf16>, vector<4x16xbf16>, vector<4x4xf32> -> vector<4x4xf32>
    %cst_35 = arith.constant 2.500000e-01 : f32
    %97 = vector.broadcast %cst_35 : f32 to vector<4x4xf32>
    %98 = arith.mulf %96, %97 : vector<4x4xf32>
    %cst_36 = arith.constant dense<0xFF800000> : vector<4xf32>
    %99 = vector.multi_reduction <maximumf>, %98, %cst_36 [1] : vector<4x4xf32> to vector<4xf32>
    %100 = vector.shape_cast %99 : vector<4xf32> to vector<4x1xf32>
    %101 = vector.broadcast %100 : vector<4x1xf32> to vector<4x4xf32>
    %102 = arith.subf %98, %101 : vector<4x4xf32>
    %103 = math.exp %102 : vector<4x4xf32>
    %cst_37 = arith.constant dense<0.000000e+00> : vector<4xf32>
    %104 = vector.multi_reduction <add>, %103, %cst_37 [1] : vector<4x4xf32> to vector<4xf32>
    %105 = vector.shape_cast %104 : vector<4xf32> to vector<4x1xf32>
    %106 = tpu.reciprocal %105 {approx = true} : vector<4x1xf32> -> vector<4x1xf32>
    %107 = vector.broadcast %106 : vector<4x1xf32> to vector<4x4xf32>
    %108 = arith.mulf %103, %107 : vector<4x4xf32>
    %109 = arith.truncf %108 : vector<4x4xf32> to vector<4x4xbf16>
    %110 = arith.truncf %93 : vector<4x16xf32> to vector<4x16xbf16>
    %cst_38 = arith.constant dense<0.000000e+00> : vector<4x16xf32>
    %111 = tpu.matmul %109, %110, %cst_38 {dimension_numbers = #tpu.dot_dimension_numbers<[1], [0], [0], [1], [0, 0, 1, 1], [], []>} : vector<4x4xbf16>, vector<4x16xbf16>, vector<4x16xf32> -> vector<4x16xf32>
    %112 = vector.extract_strided_slice %41 {offsets = [0, 0], sizes = [16, 32], strides = [1, 1]} : vector<32x32xbf16> to vector<16x32xbf16>
    %113 = arith.truncf %111 : vector<4x16xf32> to vector<4x16xbf16>
    %cst_39 = arith.constant dense<0.000000e+00> : vector<4x32xf32>
    %114 = tpu.matmul %113, %112, %cst_39 {dimension_numbers = #tpu.dot_dimension_numbers<[1], [0], [0], [1], [0, 0, 1, 1], [], []>} : vector<4x16xbf16>, vector<16x32xbf16>, vector<4x32xf32> -> vector<4x32xf32>
    %115 = vector.extract_strided_slice %39 {offsets = [4, 16], sizes = [4, 16], strides = [1, 1]} : vector<8x96xf32> to vector<4x16xf32>
    %116 = vector.extract_strided_slice %39 {offsets = [4, 48], sizes = [4, 16], strides = [1, 1]} : vector<8x96xf32> to vector<4x16xf32>
    %117 = vector.extract_strided_slice %39 {offsets = [4, 80], sizes = [4, 16], strides = [1, 1]} : vector<8x96xf32> to vector<4x16xf32>
    %118 = arith.truncf %115 : vector<4x16xf32> to vector<4x16xbf16>
    %119 = arith.truncf %116 : vector<4x16xf32> to vector<4x16xbf16>
    %cst_40 = arith.constant dense<0.000000e+00> : vector<4x4xf32>
    %120 = tpu.matmul %118, %119, %cst_40 {dimension_numbers = #tpu.dot_dimension_numbers<[1], [1], [0], [0], [0, 0, 1, 0], [], []>} : vector<4x16xbf16>, vector<4x16xbf16>, vector<4x4xf32> -> vector<4x4xf32>
    %cst_41 = arith.constant 2.500000e-01 : f32
    %121 = vector.broadcast %cst_41 : f32 to vector<4x4xf32>
    %122 = arith.mulf %120, %121 : vector<4x4xf32>
    %cst_42 = arith.constant dense<0xFF800000> : vector<4xf32>
    %123 = vector.multi_reduction <maximumf>, %122, %cst_42 [1] : vector<4x4xf32> to vector<4xf32>
    %124 = vector.shape_cast %123 : vector<4xf32> to vector<4x1xf32>
    %125 = vector.broadcast %124 : vector<4x1xf32> to vector<4x4xf32>
    %126 = arith.subf %122, %125 : vector<4x4xf32>
    %127 = math.exp %126 : vector<4x4xf32>
    %cst_43 = arith.constant dense<0.000000e+00> : vector<4xf32>
    %128 = vector.multi_reduction <add>, %127, %cst_43 [1] : vector<4x4xf32> to vector<4xf32>
    %129 = vector.shape_cast %128 : vector<4xf32> to vector<4x1xf32>
    %130 = tpu.reciprocal %129 {approx = true} : vector<4x1xf32> -> vector<4x1xf32>
    %131 = vector.broadcast %130 : vector<4x1xf32> to vector<4x4xf32>
    %132 = arith.mulf %127, %131 : vector<4x4xf32>
    %133 = arith.truncf %132 : vector<4x4xf32> to vector<4x4xbf16>
    %134 = arith.truncf %117 : vector<4x16xf32> to vector<4x16xbf16>
    %cst_44 = arith.constant dense<0.000000e+00> : vector<4x16xf32>
    %135 = tpu.matmul %133, %134, %cst_44 {dimension_numbers = #tpu.dot_dimension_numbers<[1], [0], [0], [1], [0, 0, 1, 1], [], []>} : vector<4x4xbf16>, vector<4x16xbf16>, vector<4x16xf32> -> vector<4x16xf32>
    %136 = vector.extract_strided_slice %41 {offsets = [16, 0], sizes = [16, 32], strides = [1, 1]} : vector<32x32xbf16> to vector<16x32xbf16>
    %137 = arith.truncf %135 : vector<4x16xf32> to vector<4x16xbf16>
    %cst_45 = arith.constant dense<0.000000e+00> : vector<4x32xf32>
    %138 = tpu.matmul %137, %136, %cst_45 {dimension_numbers = #tpu.dot_dimension_numbers<[1], [0], [0], [1], [0, 0, 1, 1], [], []>} : vector<4x16xbf16>, vector<16x32xbf16>, vector<4x32xf32> -> vector<4x32xf32>
    %139 = arith.addf %114, %138 : vector<4x32xf32>
    %140 = tpu.concatenate %90, %139 in 0 : vector<4x32xf32>, vector<4x32xf32> -> vector<8x32xf32>
    %141 = arith.addf %3, %140 : vector<8x32xf32>
    %c0_46 = arith.constant 0 : index
    %c0_47 = arith.constant 0 : index
    %c0_48 = arith.constant 0 : index
    %142 = vector.load %arg10[%c0_46, %c0_47, %c0_48] : memref<1x1x32xf32, #tpu.memory_space<vmem>>, vector<1x1x32xf32>
    %143 = vector.shape_cast %142 : vector<1x1x32xf32> to vector<1x32xf32>
    %144 = vector.broadcast %143 : vector<1x32xf32> to vector<8x32xf32>
    %145 = arith.addf %141, %144 : vector<8x32xf32>
    %c0_49 = arith.constant 0 : index
    %c0_50 = arith.constant 0 : index
    %c0_51 = arith.constant 0 : index
    %146 = vector.load %arg11[%c0_49, %c0_50, %c0_51] : memref<1x1x32xf32, #tpu.memory_space<vmem>>, vector<1x1x32xf32>
    %147 = vector.shape_cast %146 : vector<1x1x32xf32> to vector<1x32xf32>
    %c0_52 = arith.constant 0 : index
    %c0_53 = arith.constant 0 : index
    %c0_54 = arith.constant 0 : index
    %148 = vector.load %arg12[%c0_52, %c0_53, %c0_54] : memref<1x1x32xf32, #tpu.memory_space<vmem>>, vector<1x1x32xf32>
    %149 = vector.shape_cast %148 : vector<1x1x32xf32> to vector<1x32xf32>
    %cst_55 = arith.constant dense<0.000000e+00> : vector<8xf32>
    %150 = vector.multi_reduction <add>, %145, %cst_55 [1] : vector<8x32xf32> to vector<8xf32>
    %151 = vector.shape_cast %150 : vector<8xf32> to vector<8x1xf32>
    %cst_56 = arith.constant 3.200000e+01 : f32
    %152 = vector.broadcast %cst_56 : f32 to vector<8x1xf32>
    %153 = arith.divf %151, %152 : vector<8x1xf32>
    %154 = vector.broadcast %153 : vector<8x1xf32> to vector<8x32xf32>
    %155 = arith.subf %145, %154 : vector<8x32xf32>
    %156 = vector.broadcast %153 : vector<8x1xf32> to vector<8x32xf32>
    %157 = arith.subf %145, %156 : vector<8x32xf32>
    %158 = arith.mulf %155, %157 : vector<8x32xf32>
    %cst_57 = arith.constant dense<0.000000e+00> : vector<8xf32>
    %159 = vector.multi_reduction <add>, %158, %cst_57 [1] : vector<8x32xf32> to vector<8xf32>
    %160 = vector.shape_cast %159 : vector<8xf32> to vector<8x1xf32>
    %cst_58 = arith.constant 3.200000e+01 : f32
    %161 = vector.broadcast %cst_58 : f32 to vector<8x1xf32>
    %162 = arith.divf %160, %161 : vector<8x1xf32>
    %163 = vector.broadcast %153 : vector<8x1xf32> to vector<8x32xf32>
    %164 = arith.subf %145, %163 : vector<8x32xf32>
    %cst_59 = arith.constant 9.99999997E-7 : f32
    %165 = vector.broadcast %cst_59 : f32 to vector<8x1xf32>
    %166 = arith.addf %162, %165 : vector<8x1xf32>
    %167 = math.rsqrt %166 : vector<8x1xf32>
    %168 = vector.broadcast %167 : vector<8x1xf32> to vector<8x32xf32>
    %169 = arith.mulf %164, %168 : vector<8x32xf32>
    %170 = vector.broadcast %147 : vector<1x32xf32> to vector<8x32xf32>
    %171 = arith.mulf %169, %170 : vector<8x32xf32>
    %172 = vector.broadcast %149 : vector<1x32xf32> to vector<8x32xf32>
    %173 = arith.addf %171, %172 : vector<8x32xf32>
    %c0_60 = arith.constant 0 : index
    %c0_61 = arith.constant 0 : index
    %c0_62 = arith.constant 0 : index
    %174 = vector.load %arg13[%c0_60, %c0_61, %c0_62] : memref<1x32x64xbf16, #tpu.memory_space<vmem>>, vector<1x32x64xbf16>
    %175 = vector.shape_cast %174 : vector<1x32x64xbf16> to vector<32x64xbf16>
    %176 = arith.truncf %173 : vector<8x32xf32> to vector<8x32xbf16>
    %cst_63 = arith.constant dense<0.000000e+00> : vector<8x64xf32>
    %177 = tpu.matmul %176, %175, %cst_63 {dimension_numbers = #tpu.dot_dimension_numbers<[1], [0], [0], [1], [0, 0, 1, 1], [], []>} : vector<8x32xbf16>, vector<32x64xbf16>, vector<8x64xf32> -> vector<8x64xf32>
    %c0_64 = arith.constant 0 : index
    %c0_65 = arith.constant 0 : index
    %c0_66 = arith.constant 0 : index
    %178 = vector.load %arg14[%c0_64, %c0_65, %c0_66] : memref<1x1x64xf32, #tpu.memory_space<vmem>>, vector<1x1x64xf32>
    %179 = vector.shape_cast %178 : vector<1x1x64xf32> to vector<1x64xf32>
    %180 = vector.broadcast %179 : vector<1x64xf32> to vector<8x64xf32>
    %181 = arith.addf %177, %180 : vector<8x64xf32>
    %182 = arith.mulf %181, %181 : vector<8x64xf32>
    %183 = arith.mulf %181, %182 : vector<8x64xf32>
    %cst_67 = arith.constant 4.471500e-02 : f32
    %184 = vector.broadcast %cst_67 : f32 to vector<8x64xf32>
    %185 = arith.mulf %184, %183 : vector<8x64xf32>
    %186 = arith.addf %181, %185 : vector<8x64xf32>
    %cst_68 = arith.constant 0.797884583 : f32
    %187 = vector.broadcast %cst_68 : f32 to vector<8x64xf32>
    %188 = arith.mulf %187, %186 : vector<8x64xf32>
    %189 = math.tanh %188 : vector<8x64xf32>
    %cst_69 = arith.constant 1.000000e+00 : f32
    %190 = vector.broadcast %cst_69 : f32 to vector<8x64xf32>
    %191 = arith.addf %190, %189 : vector<8x64xf32>
    %cst_70 = arith.constant 5.000000e-01 : f32
    %192 = vector.broadcast %cst_70 : f32 to vector<8x64xf32>
    %193 = arith.mulf %192, %191 : vector<8x64xf32>
    %194 = arith.mulf %181, %193 : vector<8x64xf32>
    %c0_71 = arith.constant 0 : index
    %c0_72 = arith.constant 0 : index
    %c0_73 = arith.constant 0 : index
    %195 = vector.load %arg15[%c0_71, %c0_72, %c0_73] : memref<1x64x32xbf16, #tpu.memory_space<vmem>>, vector<1x64x32xbf16>
    %196 = vector.shape_cast %195 : vector<1x64x32xbf16> to vector<64x32xbf16>
    %197 = arith.truncf %194 : vector<8x64xf32> to vector<8x64xbf16>
    %cst_74 = arith.constant dense<0.000000e+00> : vector<8x32xf32>
    %198 = tpu.matmul %197, %196, %cst_74 {dimension_numbers = #tpu.dot_dimension_numbers<[1], [0], [0], [1], [0, 0, 1, 1], [], []>} : vector<8x64xbf16>, vector<64x32xbf16>, vector<8x32xf32> -> vector<8x32xf32>
    %199 = arith.addf %145, %198 : vector<8x32xf32>
    %c0_75 = arith.constant 0 : index
    %c0_76 = arith.constant 0 : index
    %c0_77 = arith.constant 0 : index
    %200 = vector.load %arg16[%c0_75, %c0_76, %c0_77] : memref<1x1x32xf32, #tpu.memory_space<vmem>>, vector<1x1x32xf32>
    %201 = vector.shape_cast %200 : vector<1x1x32xf32> to vector<1x32xf32>
    %202 = vector.broadcast %201 : vector<1x32xf32> to vector<8x32xf32>
    %203 = arith.addf %199, %202 : vector<8x32xf32>
    %c0_78 = arith.constant 0 : index
    %c0_79 = arith.constant 0 : index
    %204 = vector.load %arg22[%c0_78, %c0_79] : memref<8x32xf32, #tpu.memory_space<vmem>>, vector<8x32xf32>
    tpu.vector_store %arg22[%c0_78, %c0_79], %203 {strides = array<i32>} : memref<8x32xf32, #tpu.memory_space<vmem>>, vector<8x32xf32>,
    %c1_i32 = arith.constant 1 : i32
    %205 = arith.cmpi eq, %arg0, %c1_i32 : i32
    %206 = arith.extui %205 : i1 to i32
    %c0_i32_80 = arith.constant 0 : i32
    %207 = arith.cmpi ne, %206, %c0_i32_80 : i32
    scf.if %207 {
      %c0_81 = arith.constant 0 : index
      %c0_82 = arith.constant 0 : index
      %208 = vector.load %arg17[%c0_81, %c0_82] : memref<1x32xf32, #tpu.memory_space<vmem>>, vector<1x32xf32>
      %c0_83 = arith.constant 0 : index
      %c0_84 = arith.constant 0 : index
      %209 = vector.load %arg18[%c0_83, %c0_84] : memref<1x32xf32, #tpu.memory_space<vmem>>, vector<1x32xf32>
      %cst_85 = arith.constant dense<0.000000e+00> : vector<8xf32>
      %210 = vector.multi_reduction <add>, %203, %cst_85 [1] : vector<8x32xf32> to vector<8xf32>
      %211 = vector.shape_cast %210 : vector<8xf32> to vector<8x1xf32>
      %cst_86 = arith.constant 3.200000e+01 : f32
      %212 = vector.broadcast %cst_86 : f32 to vector<8x1xf32>
      %213 = arith.divf %211, %212 : vector<8x1xf32>
      %214 = vector.broadcast %213 : vector<8x1xf32> to vector<8x32xf32>
      %215 = arith.subf %203, %214 : vector<8x32xf32>
      %216 = vector.broadcast %213 : vector<8x1xf32> to vector<8x32xf32>
      %217 = arith.subf %203, %216 : vector<8x32xf32>
      %218 = arith.mulf %215, %217 : vector<8x32xf32>
      %cst_87 = arith.constant dense<0.000000e+00> : vector<8xf32>
      %219 = vector.multi_reduction <add>, %218, %cst_87 [1] : vector<8x32xf32> to vector<8xf32>
      %220 = vector.shape_cast %219 : vector<8xf32> to vector<8x1xf32>
      %cst_88 = arith.constant 3.200000e+01 : f32
      %221 = vector.broadcast %cst_88 : f32 to vector<8x1xf32>
      %222 = arith.divf %220, %221 : vector<8x1xf32>
      %223 = vector.broadcast %213 : vector<8x1xf32> to vector<8x32xf32>
      %224 = arith.subf %203, %223 : vector<8x32xf32>
      %cst_89 = arith.constant 9.99999997E-7 : f32
      %225 = vector.broadcast %cst_89 : f32 to vector<8x1xf32>
      %226 = arith.addf %222, %225 : vector<8x1xf32>
      %227 = math.rsqrt %226 : vector<8x1xf32>
      %228 = vector.broadcast %227 : vector<8x1xf32> to vector<8x32xf32>
      %229 = arith.mulf %224, %228 : vector<8x32xf32>
      %230 = vector.broadcast %208 : vector<1x32xf32> to vector<8x32xf32>
      %231 = arith.mulf %229, %230 : vector<8x32xf32>
      %232 = vector.broadcast %209 : vector<1x32xf32> to vector<8x32xf32>
      %233 = arith.addf %231, %232 : vector<8x32xf32>
      %c0_90 = arith.constant 0 : index
      %c0_91 = arith.constant 0 : index
      %234 = vector.load %arg19[%c0_90, %c0_91] : memref<32x32xbf16, #tpu.memory_space<vmem>>, vector<32x32xbf16>
      %235 = arith.truncf %233 : vector<8x32xf32> to vector<8x32xbf16>
      %cst_92 = arith.constant dense<0.000000e+00> : vector<8x32xf32>
      %236 = tpu.matmul %235, %234, %cst_92 {dimension_numbers = #tpu.dot_dimension_numbers<[1], [0], [0], [1], [0, 0, 1, 1], [], []>} : vector<8x32xbf16>, vector<32x32xbf16>, vector<8x32xf32> -> vector<8x32xf32>
      %c0_93 = arith.constant 0 : index
      %c0_94 = arith.constant 0 : index
      %237 = vector.load %arg20[%c0_93, %c0_94] : memref<1x32xf32, #tpu.memory_space<vmem>>, vector<1x32xf32>
      %238 = vector.broadcast %237 : vector<1x32xf32> to vector<8x32xf32>
      %239 = arith.addf %236, %238 : vector<8x32xf32>
      %c0_95 = arith.constant 0 : index
      %c0_96 = arith.constant 0 : index
      %240 = vector.load %arg21[%c0_95, %c0_96] : memref<8x32xf32, #tpu.memory_space<vmem>>, vector<8x32xf32>
      tpu.vector_store %arg21[%c0_95, %c0_96], %239 {strides = array<i32>} : memref<8x32xf32, #tpu.memory_space<vmem>>, vector<8x32xf32>,
    } else {
    }
    return
  }
  func.func @transform_0(%arg0: i32) -> (i32, i32) {
    %c0_i32 = arith.constant 0 : i32
    %c0_i32_0 = arith.constant 0 : i32
    %c0_i32_1 = arith.constant 0 : i32
    return %c0_i32, %c0_i32_0 : i32, i32
  }
  func.func @transform_1(%arg0: i32) -> (i32, i32) {
    %c0_i32 = arith.constant 0 : i32
    %c0_i32_0 = arith.constant 0 : i32
    %c0_i32_1 = arith.constant 0 : i32
    return %c0_i32, %c0_i32_0 : i32, i32
  }
  func.func @transform_2(%arg0: i32) -> (i32, i32) {
    %c0_i32 = arith.constant 0 : i32
    %c0_i32_0 = arith.constant 0 : i32
    %c0_i32_1 = arith.constant 0 : i32
    return %c0_i32, %c0_i32_0 : i32, i32
  }
  func.func @transform_3(%arg0: i32) -> (i32, i32) {
    %c0_i32 = arith.constant 0 : i32
    %c0_i32_0 = arith.constant 0 : i32
    %c0_i32_1 = arith.constant 0 : i32
    return %c0_i32, %c0_i32_0 : i32, i32
  }
  func.func @transform_4(%arg0: i32) -> (i32, i32, i32) {
    %c0_i32 = arith.constant 0 : i32
    %c0_i32_0 = arith.constant 0 : i32
    %c0_i32_1 = arith.constant 0 : i32
    return %arg0, %c0_i32, %c0_i32_0 : i32, i32, i32
  }
  func.func @transform_5(%arg0: i32) -> (i32, i32, i32) {
    %c0_i32 = arith.constant 0 : i32
    %c0_i32_0 = arith.constant 0 : i32
    %c0_i32_1 = arith.constant 0 : i32
    return %arg0, %c0_i32, %c0_i32_0 : i32, i32, i32
  }
  func.func @transform_6(%arg0: i32) -> (i32, i32, i32) {
    %c0_i32 = arith.constant 0 : i32
    %c0_i32_0 = arith.constant 0 : i32
    %c0_i32_1 = arith.constant 0 : i32
    return %arg0, %c0_i32, %c0_i32_0 : i32, i32, i32
  }
  func.func @transform_7(%arg0: i32) -> (i32, i32, i32) {
    %c0_i32 = arith.constant 0 : i32
    %c0_i32_0 = arith.constant 0 : i32
    %c0_i32_1 = arith.constant 0 : i32
    return %arg0, %c0_i32, %c0_i32_0 : i32, i32, i32
  }
  func.func @transform_8(%arg0: i32) -> (i32, i32, i32) {
    %c0_i32 = arith.constant 0 : i32
    %c0_i32_0 = arith.constant 0 : i32
    %c0_i32_1 = arith.constant 0 : i32
    return %arg0, %c0_i32, %c0_i32_0 : i32, i32, i32
  }
  func.func @transform_9(%arg0: i32) -> (i32, i32, i32) {
    %c0_i32 = arith.constant 0 : i32
    %c0_i32_0 = arith.constant 0 : i32
    %c0_i32_1 = arith.constant 0 : i32
    return %arg0, %c0_i32, %c0_i32_0 : i32, i32, i32
  }
  func.func @transform_10(%arg0: i32) -> (i32, i32, i32) {
    %c0_i32 = arith.constant 0 : i32
    %c0_i32_0 = arith.constant 0 : i32
    %c0_i32_1 = arith.constant 0 : i32
    return %arg0, %c0_i32, %c0_i32_0 : i32, i32, i32
  }
  func.func @transform_11(%arg0: i32) -> (i32, i32, i32) {
    %c0_i32 = arith.constant 0 : i32
    %c0_i32_0 = arith.constant 0 : i32
    %c0_i32_1 = arith.constant 0 : i32
    return %arg0, %c0_i32, %c0_i32_0 : i32, i32, i32
  }
  func.func @transform_12(%arg0: i32) -> (i32, i32, i32) {
    %c0_i32 = arith.constant 0 : i32
    %c0_i32_0 = arith.constant 0 : i32
    %c0_i32_1 = arith.constant 0 : i32
    return %arg0, %c0_i32, %c0_i32_0 : i32, i32, i32
  }
  func.func @transform_13(%arg0: i32) -> (i32, i32, i32) {
    %c0_i32 = arith.constant 0 : i32
    %c0_i32_0 = arith.constant 0 : i32
    %c0_i32_1 = arith.constant 0 : i32
    return %arg0, %c0_i32, %c0_i32_0 : i32, i32, i32
  }
  func.func @transform_14(%arg0: i32) -> (i32, i32, i32) {
    %c0_i32 = arith.constant 0 : i32
    %c0_i32_0 = arith.constant 0 : i32
    %c0_i32_1 = arith.constant 0 : i32
    return %arg0, %c0_i32, %c0_i32_0 : i32, i32, i32
  }
  func.func @transform_15(%arg0: i32) -> (i32, i32, i32) {
    %c0_i32 = arith.constant 0 : i32
    %c0_i32_0 = arith.constant 0 : i32
    %c0_i32_1 = arith.constant 0 : i32
    return %arg0, %c0_i32, %c0_i32_0 : i32, i32, i32
  }
  func.func @transform_16(%arg0: i32) -> (i32, i32) {
    %c0_i32 = arith.constant 0 : i32
    %c0_i32_0 = arith.constant 0 : i32
    %c0_i32_1 = arith.constant 0 : i32
    return %c0_i32, %c0_i32_0 : i32, i32
  }
  func.func @transform_17(%arg0: i32) -> (i32, i32) {
    %c0_i32 = arith.constant 0 : i32
    %c0_i32_0 = arith.constant 0 : i32
    %c0_i32_1 = arith.constant 0 : i32
    return %c0_i32, %c0_i32_0 : i32, i32
  }
  func.func @transform_18(%arg0: i32) -> (i32, i32) {
    %c0_i32 = arith.constant 0 : i32
    %c0_i32_0 = arith.constant 0 : i32
    %c0_i32_1 = arith.constant 0 : i32
    return %c0_i32, %c0_i32_0 : i32, i32
  }
  func.func @transform_19(%arg0: i32) -> (i32, i32) {
    %c0_i32 = arith.constant 0 : i32
    %c0_i32_0 = arith.constant 0 : i32
    %c0_i32_1 = arith.constant 0 : i32
    return %c0_i32, %c0_i32_0 : i32, i32
  }
  func.func @transform_20(%arg0: i32) -> (i32, i32) {
    %c0_i32 = arith.constant 0 : i32
    %c0_i32_0 = arith.constant 0 : i32
    %c0_i32_1 = arith.constant 0 : i32
    return %c0_i32, %c0_i32_0 : i32, i32
  }
}

module attributes {stable_mosaic.version = 11 : i64} {
  func.func @_gemma_stack_kernel(%arg0: i32, %arg1: memref<16x1xi32, #tpu.memory_space<vmem>>, %arg2: memref<16x32xf32, #tpu.memory_space<vmem>>, %arg3: memref<16x32xf32, #tpu.memory_space<vmem>>, %arg4: memref<16x8xf32, #tpu.memory_space<vmem>>, %arg5: memref<16x8xf32, #tpu.memory_space<vmem>>, %arg6: memref<1x1x32xf32, #tpu.memory_space<vmem>>, %arg7: memref<1x32x64xbf16, #tpu.memory_space<vmem>>, %arg8: memref<1x32x32xbf16, #tpu.memory_space<vmem>>, %arg9: memref<1x1x32xf32, #tpu.memory_space<vmem>>, %arg10: memref<1x32x128xbf16, #tpu.memory_space<vmem>>, %arg11: memref<1x64x32xbf16, #tpu.memory_space<vmem>>, %arg12: memref<1x32xf32, #tpu.memory_space<vmem>>, %arg13: memref<128x32xbf16, #tpu.memory_space<vmem>>, %arg14: memref<16x128xf32, #tpu.memory_space<vmem>>, %arg15: memref<16x32xf32, #tpu.memory_space<vmem>>) attributes {dimension_semantics = [#tpu.dimension_semantics<arbitrary>], iteration_bounds = array<i64: 2>, scalar_prefetch = 0 : i64, scratch_operands = 1 : i64, tpu.core_type = #tpu.core_type<tc>, window_params = [{pipeline_mode = #tpu.pipeline_mode<synchronous>, transform_indices = @transform_0, window_bounds = array<i64: 16, 1>}, {pipeline_mode = #tpu.pipeline_mode<synchronous>, transform_indices = @transform_1, window_bounds = array<i64: 16, 32>}, {pipeline_mode = #tpu.pipeline_mode<synchronous>, transform_indices = @transform_2, window_bounds = array<i64: 16, 32>}, {pipeline_mode = #tpu.pipeline_mode<synchronous>, transform_indices = @transform_3, window_bounds = array<i64: 16, 8>}, {pipeline_mode = #tpu.pipeline_mode<synchronous>, transform_indices = @transform_4, window_bounds = array<i64: 16, 8>}, {transform_indices = @transform_5, window_bounds = array<i64: 1, 1, 32>}, {transform_indices = @transform_6, window_bounds = array<i64: 1, 32, 64>}, {transform_indices = @transform_7, window_bounds = array<i64: 1, 32, 32>}, {transform_indices = @transform_8, window_bounds = array<i64: 1, 1, 32>}, {transform_indices = @transform_9, window_bounds = array<i64: 1, 32, 128>}, {transform_indices = @transform_10, window_bounds = array<i64: 1, 64, 32>}, {pipeline_mode = #tpu.pipeline_mode<synchronous>, transform_indices = @transform_11, window_bounds = array<i64: 1, 32>}, {pipeline_mode = #tpu.pipeline_mode<synchronous>, transform_indices = @transform_12, window_bounds = array<i64: 128, 32>}, {pipeline_mode = #tpu.pipeline_mode<synchronous>, transform_indices = @transform_13, window_bounds = array<i64: 16, 128>}]} {
    %c0_i32 = arith.constant 0 : i32
    %0 = arith.cmpi eq, %arg0, %c0_i32 : i32
    %1 = arith.extui %0 : i1 to i32
    %c0_i32_0 = arith.constant 0 : i32
    %2 = arith.cmpi ne, %1, %c0_i32_0 : i32
    scf.if %2 {
      %c0_69 = arith.constant 0 : index
      %c0_70 = arith.constant 0 : index
      %237 = vector.load %arg1[%c0_69, %c0_70] : memref<16x1xi32, #tpu.memory_space<vmem>>, vector<16x1xi32>
      %c100_i32 = arith.constant 100 : i32
      %238 = vector.broadcast %c100_i32 : i32 to vector<16x1xi32>
      %239 = arith.cmpi eq, %237, %238 : vector<16x1xi32>
      %c-1_i32 = arith.constant -1 : i32
      %240 = vector.broadcast %c-1_i32 : i32 to vector<16x1xi32>
      %241 = arith.cmpi eq, %237, %240 : vector<16x1xi32>
      %cst_71 = arith.constant dense<true> : vector<16x1xi1>
      %242 = arith.xori %239, %cst_71 : vector<16x1xi1>
      %cst_72 = arith.constant dense<true> : vector<16x1xi1>
      %243 = arith.xori %241, %cst_72 : vector<16x1xi1>
      %244 = arith.andi %242, %243 : vector<16x1xi1>
      %245 = arith.extui %244 : vector<16x1xi1> to vector<16x1xi32>
      %246 = arith.sitofp %245 : vector<16x1xi32> to vector<16x1xf32>
      %247 = arith.extui %239 : vector<16x1xi1> to vector<16x1xi32>
      %248 = arith.sitofp %247 : vector<16x1xi32> to vector<16x1xf32>
      %c0_73 = arith.constant 0 : index
      %c0_74 = arith.constant 0 : index
      %249 = vector.load %arg2[%c0_73, %c0_74] : memref<16x32xf32, #tpu.memory_space<vmem>>, vector<16x32xf32>
      %250 = vector.broadcast %246 : vector<16x1xf32> to vector<16x32xf32>
      %251 = arith.mulf %249, %250 : vector<16x32xf32>
      %c0_75 = arith.constant 0 : index
      %c0_76 = arith.constant 0 : index
      %252 = vector.load %arg3[%c0_75, %c0_76] : memref<16x32xf32, #tpu.memory_space<vmem>>, vector<16x32xf32>
      %cst_77 = arith.constant 0.176776692 : f32
      %253 = vector.broadcast %cst_77 : f32 to vector<16x1xf32>
      %254 = arith.mulf %253, %248 : vector<16x1xf32>
      %255 = vector.broadcast %254 : vector<16x1xf32> to vector<16x32xf32>
      %256 = arith.mulf %252, %255 : vector<16x32xf32>
      %257 = arith.addf %251, %256 : vector<16x32xf32>
      %cst_78 = arith.constant 5.65685415 : f32
      %258 = vector.broadcast %cst_78 : f32 to vector<16x32xf32>
      %259 = arith.mulf %257, %258 : vector<16x32xf32>
      %c0_79 = arith.constant 0 : index
      %c0_80 = arith.constant 0 : index
      %260 = vector.load %arg15[%c0_79, %c0_80] : memref<16x32xf32, #tpu.memory_space<vmem>>, vector<16x32xf32>
      tpu.vector_store %arg15[%c0_79, %c0_80], %259 {strides = array<i32>} : memref<16x32xf32, #tpu.memory_space<vmem>>, vector<16x32xf32>,
    } else {
    }
    %c0 = arith.constant 0 : index
    %c0_1 = arith.constant 0 : index
    %3 = vector.load %arg15[%c0, %c0_1] : memref<16x32xf32, #tpu.memory_space<vmem>>, vector<16x32xf32>
    %c0_2 = arith.constant 0 : index
    %c0_3 = arith.constant 0 : index
    %4 = vector.load %arg4[%c0_2, %c0_3] : memref<16x8xf32, #tpu.memory_space<vmem>>, vector<16x8xf32>
    %c0_4 = arith.constant 0 : index
    %c0_5 = arith.constant 0 : index
    %5 = vector.load %arg5[%c0_4, %c0_5] : memref<16x8xf32, #tpu.memory_space<vmem>>, vector<16x8xf32>
    %c0_6 = arith.constant 0 : index
    %c0_7 = arith.constant 0 : index
    %c0_8 = arith.constant 0 : index
    %6 = vector.load %arg6[%c0_6, %c0_7, %c0_8] : memref<1x1x32xf32, #tpu.memory_space<vmem>>, vector<1x1x32xf32>
    %7 = vector.shape_cast %6 : vector<1x1x32xf32> to vector<1x32xf32>
    %8 = arith.mulf %3, %3 : vector<16x32xf32>
    %cst = arith.constant dense<0.000000e+00> : vector<16xf32>
    %9 = vector.multi_reduction <add>, %8, %cst [1] : vector<16x32xf32> to vector<16xf32>
    %10 = vector.shape_cast %9 : vector<16xf32> to vector<16x1xf32>
    %cst_9 = arith.constant 3.200000e+01 : f32
    %11 = vector.broadcast %cst_9 : f32 to vector<16x1xf32>
    %12 = arith.divf %10, %11 : vector<16x1xf32>
    %cst_10 = arith.constant 9.99999997E-7 : f32
    %13 = vector.broadcast %cst_10 : f32 to vector<16x1xf32>
    %14 = arith.addf %12, %13 : vector<16x1xf32>
    %15 = math.rsqrt %14 : vector<16x1xf32>
    %16 = vector.broadcast %15 : vector<16x1xf32> to vector<16x32xf32>
    %17 = arith.mulf %3, %16 : vector<16x32xf32>
    %cst_11 = arith.constant 1.000000e+00 : f32
    %18 = vector.broadcast %cst_11 : f32 to vector<1x32xf32>
    %19 = arith.addf %18, %7 : vector<1x32xf32>
    %20 = vector.broadcast %19 : vector<1x32xf32> to vector<16x32xf32>
    %21 = arith.mulf %17, %20 : vector<16x32xf32>
    %c0_12 = arith.constant 0 : index
    %c0_13 = arith.constant 0 : index
    %c0_14 = arith.constant 0 : index
    %22 = vector.load %arg7[%c0_12, %c0_13, %c0_14] : memref<1x32x64xbf16, #tpu.memory_space<vmem>>, vector<1x32x64xbf16>
    %23 = vector.shape_cast %22 : vector<1x32x64xbf16> to vector<32x64xbf16>
    %24 = arith.truncf %21 : vector<16x32xf32> to vector<16x32xbf16>
    %cst_15 = arith.constant dense<0.000000e+00> : vector<16x64xf32>
    %25 = tpu.matmul %24, %23, %cst_15 {dimension_numbers = #tpu.dot_dimension_numbers<[1], [0], [0], [1], [0, 0, 1, 1], [], []>} : vector<16x32xbf16>, vector<32x64xbf16>, vector<16x64xf32> -> vector<16x64xf32>
    %c0_16 = arith.constant 0 : index
    %c0_17 = arith.constant 0 : index
    %c0_18 = arith.constant 0 : index
    %26 = vector.load %arg8[%c0_16, %c0_17, %c0_18] : memref<1x32x32xbf16, #tpu.memory_space<vmem>>, vector<1x32x32xbf16>
    %27 = vector.shape_cast %26 : vector<1x32x32xbf16> to vector<32x32xbf16>
    %28 = vector.extract_strided_slice %4 {offsets = [0, 0], sizes = [8, 8], strides = [1, 1]} : vector<16x8xf32> to vector<8x8xf32>
    %29 = vector.extract_strided_slice %5 {offsets = [0, 0], sizes = [8, 8], strides = [1, 1]} : vector<16x8xf32> to vector<8x8xf32>
    %30 = vector.extract_strided_slice %25 {offsets = [0, 32], sizes = [8, 16], strides = [1, 1]} : vector<16x64xf32> to vector<8x16xf32>
    %31 = vector.extract_strided_slice %30 {offsets = [0, 0], sizes = [8, 8], strides = [1, 1]} : vector<8x16xf32> to vector<8x8xf32>
    %32 = vector.extract_strided_slice %30 {offsets = [0, 8], sizes = [8, 8], strides = [1, 1]} : vector<8x16xf32> to vector<8x8xf32>
    %33 = arith.mulf %31, %28 : vector<8x8xf32>
    %34 = arith.mulf %32, %29 : vector<8x8xf32>
    %35 = arith.subf %33, %34 : vector<8x8xf32>
    %36 = arith.mulf %32, %28 : vector<8x8xf32>
    %37 = arith.mulf %31, %29 : vector<8x8xf32>
    %38 = arith.addf %36, %37 : vector<8x8xf32>
    %39 = vector.extract_strided_slice %25 {offsets = [0, 48], sizes = [8, 16], strides = [1, 1]} : vector<16x64xf32> to vector<8x16xf32>
    %40 = vector.extract_strided_slice %25 {offsets = [0, 0], sizes = [8, 16], strides = [1, 1]} : vector<16x64xf32> to vector<8x16xf32>
    %41 = vector.extract_strided_slice %40 {offsets = [0, 0], sizes = [8, 8], strides = [1, 1]} : vector<8x16xf32> to vector<8x8xf32>
    %42 = vector.extract_strided_slice %40 {offsets = [0, 8], sizes = [8, 8], strides = [1, 1]} : vector<8x16xf32> to vector<8x8xf32>
    %43 = arith.mulf %41, %28 : vector<8x8xf32>
    %44 = arith.mulf %42, %29 : vector<8x8xf32>
    %45 = arith.subf %43, %44 : vector<8x8xf32>
    %46 = arith.mulf %42, %28 : vector<8x8xf32>
    %47 = arith.mulf %41, %29 : vector<8x8xf32>
    %48 = arith.addf %46, %47 : vector<8x8xf32>
    %49 = arith.truncf %45 : vector<8x8xf32> to vector<8x8xbf16>
    %50 = arith.truncf %35 : vector<8x8xf32> to vector<8x8xbf16>
    %cst_19 = arith.constant dense<0.000000e+00> : vector<8x8xf32>
    %51 = tpu.matmul %49, %50, %cst_19 {dimension_numbers = #tpu.dot_dimension_numbers<[1], [1], [0], [0], [0, 0, 1, 0], [], []>} : vector<8x8xbf16>, vector<8x8xbf16>, vector<8x8xf32> -> vector<8x8xf32>
    %52 = arith.truncf %48 : vector<8x8xf32> to vector<8x8xbf16>
    %53 = arith.truncf %38 : vector<8x8xf32> to vector<8x8xbf16>
    %cst_20 = arith.constant dense<0.000000e+00> : vector<8x8xf32>
    %54 = tpu.matmul %52, %53, %cst_20 {dimension_numbers = #tpu.dot_dimension_numbers<[1], [1], [0], [0], [0, 0, 1, 0], [], []>} : vector<8x8xbf16>, vector<8x8xbf16>, vector<8x8xf32> -> vector<8x8xf32>
    %55 = arith.addf %51, %54 : vector<8x8xf32>
    %cst_21 = arith.constant 2.500000e-01 : f32
    %56 = vector.broadcast %cst_21 : f32 to vector<8x8xf32>
    %57 = arith.mulf %55, %56 : vector<8x8xf32>
    %cst_22 = arith.constant dense<0xFF800000> : vector<8xf32>
    %58 = vector.multi_reduction <maximumf>, %57, %cst_22 [1] : vector<8x8xf32> to vector<8xf32>
    %59 = vector.shape_cast %58 : vector<8xf32> to vector<8x1xf32>
    %60 = vector.broadcast %59 : vector<8x1xf32> to vector<8x8xf32>
    %61 = arith.subf %57, %60 : vector<8x8xf32>
    %62 = math.exp %61 : vector<8x8xf32>
    %cst_23 = arith.constant dense<0.000000e+00> : vector<8xf32>
    %63 = vector.multi_reduction <add>, %62, %cst_23 [1] : vector<8x8xf32> to vector<8xf32>
    %64 = vector.shape_cast %63 : vector<8xf32> to vector<8x1xf32>
    %65 = tpu.reciprocal %64 {approx = true} : vector<8x1xf32> -> vector<8x1xf32>
    %66 = vector.broadcast %65 : vector<8x1xf32> to vector<8x8xf32>
    %67 = arith.mulf %62, %66 : vector<8x8xf32>
    %68 = arith.truncf %67 : vector<8x8xf32> to vector<8x8xbf16>
    %69 = arith.truncf %39 : vector<8x16xf32> to vector<8x16xbf16>
    %cst_24 = arith.constant dense<0.000000e+00> : vector<8x16xf32>
    %70 = tpu.matmul %68, %69, %cst_24 {dimension_numbers = #tpu.dot_dimension_numbers<[1], [0], [0], [1], [0, 0, 1, 1], [], []>} : vector<8x8xbf16>, vector<8x16xbf16>, vector<8x16xf32> -> vector<8x16xf32>
    %71 = vector.extract_strided_slice %27 {offsets = [0, 0], sizes = [16, 32], strides = [1, 1]} : vector<32x32xbf16> to vector<16x32xbf16>
    %72 = arith.truncf %70 : vector<8x16xf32> to vector<8x16xbf16>
    %cst_25 = arith.constant dense<0.000000e+00> : vector<8x32xf32>
    %73 = tpu.matmul %72, %71, %cst_25 {dimension_numbers = #tpu.dot_dimension_numbers<[1], [0], [0], [1], [0, 0, 1, 1], [], []>} : vector<8x16xbf16>, vector<16x32xbf16>, vector<8x32xf32> -> vector<8x32xf32>
    %74 = vector.extract_strided_slice %25 {offsets = [0, 16], sizes = [8, 16], strides = [1, 1]} : vector<16x64xf32> to vector<8x16xf32>
    %75 = vector.extract_strided_slice %74 {offsets = [0, 0], sizes = [8, 8], strides = [1, 1]} : vector<8x16xf32> to vector<8x8xf32>
    %76 = vector.extract_strided_slice %74 {offsets = [0, 8], sizes = [8, 8], strides = [1, 1]} : vector<8x16xf32> to vector<8x8xf32>
    %77 = arith.mulf %75, %28 : vector<8x8xf32>
    %78 = arith.mulf %76, %29 : vector<8x8xf32>
    %79 = arith.subf %77, %78 : vector<8x8xf32>
    %80 = arith.mulf %76, %28 : vector<8x8xf32>
    %81 = arith.mulf %75, %29 : vector<8x8xf32>
    %82 = arith.addf %80, %81 : vector<8x8xf32>
    %83 = arith.truncf %79 : vector<8x8xf32> to vector<8x8xbf16>
    %84 = arith.truncf %35 : vector<8x8xf32> to vector<8x8xbf16>
    %cst_26 = arith.constant dense<0.000000e+00> : vector<8x8xf32>
    %85 = tpu.matmul %83, %84, %cst_26 {dimension_numbers = #tpu.dot_dimension_numbers<[1], [1], [0], [0], [0, 0, 1, 0], [], []>} : vector<8x8xbf16>, vector<8x8xbf16>, vector<8x8xf32> -> vector<8x8xf32>
    %86 = arith.truncf %82 : vector<8x8xf32> to vector<8x8xbf16>
    %87 = arith.truncf %38 : vector<8x8xf32> to vector<8x8xbf16>
    %cst_27 = arith.constant dense<0.000000e+00> : vector<8x8xf32>
    %88 = tpu.matmul %86, %87, %cst_27 {dimension_numbers = #tpu.dot_dimension_numbers<[1], [1], [0], [0], [0, 0, 1, 0], [], []>} : vector<8x8xbf16>, vector<8x8xbf16>, vector<8x8xf32> -> vector<8x8xf32>
    %89 = arith.addf %85, %88 : vector<8x8xf32>
    %cst_28 = arith.constant 2.500000e-01 : f32
    %90 = vector.broadcast %cst_28 : f32 to vector<8x8xf32>
    %91 = arith.mulf %89, %90 : vector<8x8xf32>
    %cst_29 = arith.constant dense<0xFF800000> : vector<8xf32>
    %92 = vector.multi_reduction <maximumf>, %91, %cst_29 [1] : vector<8x8xf32> to vector<8xf32>
    %93 = vector.shape_cast %92 : vector<8xf32> to vector<8x1xf32>
    %94 = vector.broadcast %93 : vector<8x1xf32> to vector<8x8xf32>
    %95 = arith.subf %91, %94 : vector<8x8xf32>
    %96 = math.exp %95 : vector<8x8xf32>
    %cst_30 = arith.constant dense<0.000000e+00> : vector<8xf32>
    %97 = vector.multi_reduction <add>, %96, %cst_30 [1] : vector<8x8xf32> to vector<8xf32>
    %98 = vector.shape_cast %97 : vector<8xf32> to vector<8x1xf32>
    %99 = tpu.reciprocal %98 {approx = true} : vector<8x1xf32> -> vector<8x1xf32>
    %100 = vector.broadcast %99 : vector<8x1xf32> to vector<8x8xf32>
    %101 = arith.mulf %96, %100 : vector<8x8xf32>
    %102 = arith.truncf %101 : vector<8x8xf32> to vector<8x8xbf16>
    %103 = arith.truncf %39 : vector<8x16xf32> to vector<8x16xbf16>
    %cst_31 = arith.constant dense<0.000000e+00> : vector<8x16xf32>
    %104 = tpu.matmul %102, %103, %cst_31 {dimension_numbers = #tpu.dot_dimension_numbers<[1], [0], [0], [1], [0, 0, 1, 1], [], []>} : vector<8x8xbf16>, vector<8x16xbf16>, vector<8x16xf32> -> vector<8x16xf32>
    %105 = vector.extract_strided_slice %27 {offsets = [16, 0], sizes = [16, 32], strides = [1, 1]} : vector<32x32xbf16> to vector<16x32xbf16>
    %106 = arith.truncf %104 : vector<8x16xf32> to vector<8x16xbf16>
    %cst_32 = arith.constant dense<0.000000e+00> : vector<8x32xf32>
    %107 = tpu.matmul %106, %105, %cst_32 {dimension_numbers = #tpu.dot_dimension_numbers<[1], [0], [0], [1], [0, 0, 1, 1], [], []>} : vector<8x16xbf16>, vector<16x32xbf16>, vector<8x32xf32> -> vector<8x32xf32>
    %108 = arith.addf %73, %107 : vector<8x32xf32>
    %109 = vector.extract_strided_slice %4 {offsets = [8, 0], sizes = [8, 8], strides = [1, 1]} : vector<16x8xf32> to vector<8x8xf32>
    %110 = vector.extract_strided_slice %5 {offsets = [8, 0], sizes = [8, 8], strides = [1, 1]} : vector<16x8xf32> to vector<8x8xf32>
    %111 = vector.extract_strided_slice %25 {offsets = [8, 32], sizes = [8, 16], strides = [1, 1]} : vector<16x64xf32> to vector<8x16xf32>
    %112 = vector.extract_strided_slice %111 {offsets = [0, 0], sizes = [8, 8], strides = [1, 1]} : vector<8x16xf32> to vector<8x8xf32>
    %113 = vector.extract_strided_slice %111 {offsets = [0, 8], sizes = [8, 8], strides = [1, 1]} : vector<8x16xf32> to vector<8x8xf32>
    %114 = arith.mulf %112, %109 : vector<8x8xf32>
    %115 = arith.mulf %113, %110 : vector<8x8xf32>
    %116 = arith.subf %114, %115 : vector<8x8xf32>
    %117 = arith.mulf %113, %109 : vector<8x8xf32>
    %118 = arith.mulf %112, %110 : vector<8x8xf32>
    %119 = arith.addf %117, %118 : vector<8x8xf32>
    %120 = vector.extract_strided_slice %25 {offsets = [8, 48], sizes = [8, 16], strides = [1, 1]} : vector<16x64xf32> to vector<8x16xf32>
    %121 = vector.extract_strided_slice %25 {offsets = [8, 0], sizes = [8, 16], strides = [1, 1]} : vector<16x64xf32> to vector<8x16xf32>
    %122 = vector.extract_strided_slice %121 {offsets = [0, 0], sizes = [8, 8], strides = [1, 1]} : vector<8x16xf32> to vector<8x8xf32>
    %123 = vector.extract_strided_slice %121 {offsets = [0, 8], sizes = [8, 8], strides = [1, 1]} : vector<8x16xf32> to vector<8x8xf32>
    %124 = arith.mulf %122, %109 : vector<8x8xf32>
    %125 = arith.mulf %123, %110 : vector<8x8xf32>
    %126 = arith.subf %124, %125 : vector<8x8xf32>
    %127 = arith.mulf %123, %109 : vector<8x8xf32>
    %128 = arith.mulf %122, %110 : vector<8x8xf32>
    %129 = arith.addf %127, %128 : vector<8x8xf32>
    %130 = arith.truncf %126 : vector<8x8xf32> to vector<8x8xbf16>
    %131 = arith.truncf %116 : vector<8x8xf32> to vector<8x8xbf16>
    %cst_33 = arith.constant dense<0.000000e+00> : vector<8x8xf32>
    %132 = tpu.matmul %130, %131, %cst_33 {dimension_numbers = #tpu.dot_dimension_numbers<[1], [1], [0], [0], [0, 0, 1, 0], [], []>} : vector<8x8xbf16>, vector<8x8xbf16>, vector<8x8xf32> -> vector<8x8xf32>
    %133 = arith.truncf %129 : vector<8x8xf32> to vector<8x8xbf16>
    %134 = arith.truncf %119 : vector<8x8xf32> to vector<8x8xbf16>
    %cst_34 = arith.constant dense<0.000000e+00> : vector<8x8xf32>
    %135 = tpu.matmul %133, %134, %cst_34 {dimension_numbers = #tpu.dot_dimension_numbers<[1], [1], [0], [0], [0, 0, 1, 0], [], []>} : vector<8x8xbf16>, vector<8x8xbf16>, vector<8x8xf32> -> vector<8x8xf32>
    %136 = arith.addf %132, %135 : vector<8x8xf32>
    %cst_35 = arith.constant 2.500000e-01 : f32
    %137 = vector.broadcast %cst_35 : f32 to vector<8x8xf32>
    %138 = arith.mulf %136, %137 : vector<8x8xf32>
    %cst_36 = arith.constant dense<0xFF800000> : vector<8xf32>
    %139 = vector.multi_reduction <maximumf>, %138, %cst_36 [1] : vector<8x8xf32> to vector<8xf32>
    %140 = vector.shape_cast %139 : vector<8xf32> to vector<8x1xf32>
    %141 = vector.broadcast %140 : vector<8x1xf32> to vector<8x8xf32>
    %142 = arith.subf %138, %141 : vector<8x8xf32>
    %143 = math.exp %142 : vector<8x8xf32>
    %cst_37 = arith.constant dense<0.000000e+00> : vector<8xf32>
    %144 = vector.multi_reduction <add>, %143, %cst_37 [1] : vector<8x8xf32> to vector<8xf32>
    %145 = vector.shape_cast %144 : vector<8xf32> to vector<8x1xf32>
    %146 = tpu.reciprocal %145 {approx = true} : vector<8x1xf32> -> vector<8x1xf32>
    %147 = vector.broadcast %146 : vector<8x1xf32> to vector<8x8xf32>
    %148 = arith.mulf %143, %147 : vector<8x8xf32>
    %149 = arith.truncf %148 : vector<8x8xf32> to vector<8x8xbf16>
    %150 = arith.truncf %120 : vector<8x16xf32> to vector<8x16xbf16>
    %cst_38 = arith.constant dense<0.000000e+00> : vector<8x16xf32>
    %151 = tpu.matmul %149, %150, %cst_38 {dimension_numbers = #tpu.dot_dimension_numbers<[1], [0], [0], [1], [0, 0, 1, 1], [], []>} : vector<8x8xbf16>, vector<8x16xbf16>, vector<8x16xf32> -> vector<8x16xf32>
    %152 = vector.extract_strided_slice %27 {offsets = [0, 0], sizes = [16, 32], strides = [1, 1]} : vector<32x32xbf16> to vector<16x32xbf16>
    %153 = arith.truncf %151 : vector<8x16xf32> to vector<8x16xbf16>
    %cst_39 = arith.constant dense<0.000000e+00> : vector<8x32xf32>
    %154 = tpu.matmul %153, %152, %cst_39 {dimension_numbers = #tpu.dot_dimension_numbers<[1], [0], [0], [1], [0, 0, 1, 1], [], []>} : vector<8x16xbf16>, vector<16x32xbf16>, vector<8x32xf32> -> vector<8x32xf32>
    %155 = vector.extract_strided_slice %25 {offsets = [8, 16], sizes = [8, 16], strides = [1, 1]} : vector<16x64xf32> to vector<8x16xf32>
    %156 = vector.extract_strided_slice %155 {offsets = [0, 0], sizes = [8, 8], strides = [1, 1]} : vector<8x16xf32> to vector<8x8xf32>
    %157 = vector.extract_strided_slice %155 {offsets = [0, 8], sizes = [8, 8], strides = [1, 1]} : vector<8x16xf32> to vector<8x8xf32>
    %158 = arith.mulf %156, %109 : vector<8x8xf32>
    %159 = arith.mulf %157, %110 : vector<8x8xf32>
    %160 = arith.subf %158, %159 : vector<8x8xf32>
    %161 = arith.mulf %157, %109 : vector<8x8xf32>
    %162 = arith.mulf %156, %110 : vector<8x8xf32>
    %163 = arith.addf %161, %162 : vector<8x8xf32>
    %164 = arith.truncf %160 : vector<8x8xf32> to vector<8x8xbf16>
    %165 = arith.truncf %116 : vector<8x8xf32> to vector<8x8xbf16>
    %cst_40 = arith.constant dense<0.000000e+00> : vector<8x8xf32>
    %166 = tpu.matmul %164, %165, %cst_40 {dimension_numbers = #tpu.dot_dimension_numbers<[1], [1], [0], [0], [0, 0, 1, 0], [], []>} : vector<8x8xbf16>, vector<8x8xbf16>, vector<8x8xf32> -> vector<8x8xf32>
    %167 = arith.truncf %163 : vector<8x8xf32> to vector<8x8xbf16>
    %168 = arith.truncf %119 : vector<8x8xf32> to vector<8x8xbf16>
    %cst_41 = arith.constant dense<0.000000e+00> : vector<8x8xf32>
    %169 = tpu.matmul %167, %168, %cst_41 {dimension_numbers = #tpu.dot_dimension_numbers<[1], [1], [0], [0], [0, 0, 1, 0], [], []>} : vector<8x8xbf16>, vector<8x8xbf16>, vector<8x8xf32> -> vector<8x8xf32>
    %170 = arith.addf %166, %169 : vector<8x8xf32>
    %cst_42 = arith.constant 2.500000e-01 : f32
    %171 = vector.broadcast %cst_42 : f32 to vector<8x8xf32>
    %172 = arith.mulf %170, %171 : vector<8x8xf32>
    %cst_43 = arith.constant dense<0xFF800000> : vector<8xf32>
    %173 = vector.multi_reduction <maximumf>, %172, %cst_43 [1] : vector<8x8xf32> to vector<8xf32>
    %174 = vector.shape_cast %173 : vector<8xf32> to vector<8x1xf32>
    %175 = vector.broadcast %174 : vector<8x1xf32> to vector<8x8xf32>
    %176 = arith.subf %172, %175 : vector<8x8xf32>
    %177 = math.exp %176 : vector<8x8xf32>
    %cst_44 = arith.constant dense<0.000000e+00> : vector<8xf32>
    %178 = vector.multi_reduction <add>, %177, %cst_44 [1] : vector<8x8xf32> to vector<8xf32>
    %179 = vector.shape_cast %178 : vector<8xf32> to vector<8x1xf32>
    %180 = tpu.reciprocal %179 {approx = true} : vector<8x1xf32> -> vector<8x1xf32>
    %181 = vector.broadcast %180 : vector<8x1xf32> to vector<8x8xf32>
    %182 = arith.mulf %177, %181 : vector<8x8xf32>
    %183 = arith.truncf %182 : vector<8x8xf32> to vector<8x8xbf16>
    %184 = arith.truncf %120 : vector<8x16xf32> to vector<8x16xbf16>
    %cst_45 = arith.constant dense<0.000000e+00> : vector<8x16xf32>
    %185 = tpu.matmul %183, %184, %cst_45 {dimension_numbers = #tpu.dot_dimension_numbers<[1], [0], [0], [1], [0, 0, 1, 1], [], []>} : vector<8x8xbf16>, vector<8x16xbf16>, vector<8x16xf32> -> vector<8x16xf32>
    %186 = vector.extract_strided_slice %27 {offsets = [16, 0], sizes = [16, 32], strides = [1, 1]} : vector<32x32xbf16> to vector<16x32xbf16>
    %187 = arith.truncf %185 : vector<8x16xf32> to vector<8x16xbf16>
    %cst_46 = arith.constant dense<0.000000e+00> : vector<8x32xf32>
    %188 = tpu.matmul %187, %186, %cst_46 {dimension_numbers = #tpu.dot_dimension_numbers<[1], [0], [0], [1], [0, 0, 1, 1], [], []>} : vector<8x16xbf16>, vector<16x32xbf16>, vector<8x32xf32> -> vector<8x32xf32>
    %189 = arith.addf %154, %188 : vector<8x32xf32>
    %190 = tpu.concatenate %108, %189 in 0 : vector<8x32xf32>, vector<8x32xf32> -> vector<16x32xf32>
    %191 = arith.addf %3, %190 : vector<16x32xf32>
    %c0_47 = arith.constant 0 : index
    %c0_48 = arith.constant 0 : index
    %c0_49 = arith.constant 0 : index
    %192 = vector.load %arg9[%c0_47, %c0_48, %c0_49] : memref<1x1x32xf32, #tpu.memory_space<vmem>>, vector<1x1x32xf32>
    %193 = vector.shape_cast %192 : vector<1x1x32xf32> to vector<1x32xf32>
    %194 = arith.mulf %191, %191 : vector<16x32xf32>
    %cst_50 = arith.constant dense<0.000000e+00> : vector<16xf32>
    %195 = vector.multi_reduction <add>, %194, %cst_50 [1] : vector<16x32xf32> to vector<16xf32>
    %196 = vector.shape_cast %195 : vector<16xf32> to vector<16x1xf32>
    %cst_51 = arith.constant 3.200000e+01 : f32
    %197 = vector.broadcast %cst_51 : f32 to vector<16x1xf32>
    %198 = arith.divf %196, %197 : vector<16x1xf32>
    %cst_52 = arith.constant 9.99999997E-7 : f32
    %199 = vector.broadcast %cst_52 : f32 to vector<16x1xf32>
    %200 = arith.addf %198, %199 : vector<16x1xf32>
    %201 = math.rsqrt %200 : vector<16x1xf32>
    %202 = vector.broadcast %201 : vector<16x1xf32> to vector<16x32xf32>
    %203 = arith.mulf %191, %202 : vector<16x32xf32>
    %cst_53 = arith.constant 1.000000e+00 : f32
    %204 = vector.broadcast %cst_53 : f32 to vector<1x32xf32>
    %205 = arith.addf %204, %193 : vector<1x32xf32>
    %206 = vector.broadcast %205 : vector<1x32xf32> to vector<16x32xf32>
    %207 = arith.mulf %203, %206 : vector<16x32xf32>
    %c0_54 = arith.constant 0 : index
    %c0_55 = arith.constant 0 : index
    %c0_56 = arith.constant 0 : index
    %208 = vector.load %arg10[%c0_54, %c0_55, %c0_56] : memref<1x32x128xbf16, #tpu.memory_space<vmem>>, vector<1x32x128xbf16>
    %209 = vector.shape_cast %208 : vector<1x32x128xbf16> to vector<32x128xbf16>
    %210 = arith.truncf %207 : vector<16x32xf32> to vector<16x32xbf16>
    %cst_57 = arith.constant dense<0.000000e+00> : vector<16x128xf32>
    %211 = tpu.matmul %210, %209, %cst_57 {dimension_numbers = #tpu.dot_dimension_numbers<[1], [0], [0], [1], [0, 0, 1, 1], [], []>} : vector<16x32xbf16>, vector<32x128xbf16>, vector<16x128xf32> -> vector<16x128xf32>
    %212 = vector.extract_strided_slice %211 {offsets = [0, 0], sizes = [16, 64], strides = [1, 1]} : vector<16x128xf32> to vector<16x64xf32>
    %213 = arith.mulf %212, %212 : vector<16x64xf32>
    %214 = arith.mulf %212, %213 : vector<16x64xf32>
    %cst_58 = arith.constant 4.471500e-02 : f32
    %215 = vector.broadcast %cst_58 : f32 to vector<16x64xf32>
    %216 = arith.mulf %215, %214 : vector<16x64xf32>
    %217 = arith.addf %212, %216 : vector<16x64xf32>
    %cst_59 = arith.constant 0.797884583 : f32
    %218 = vector.broadcast %cst_59 : f32 to vector<16x64xf32>
    %219 = arith.mulf %218, %217 : vector<16x64xf32>
    %220 = math.tanh %219 : vector<16x64xf32>
    %cst_60 = arith.constant 1.000000e+00 : f32
    %221 = vector.broadcast %cst_60 : f32 to vector<16x64xf32>
    %222 = arith.addf %221, %220 : vector<16x64xf32>
    %cst_61 = arith.constant 5.000000e-01 : f32
    %223 = vector.broadcast %cst_61 : f32 to vector<16x64xf32>
    %224 = arith.mulf %223, %222 : vector<16x64xf32>
    %225 = arith.mulf %212, %224 : vector<16x64xf32>
    %226 = vector.extract_strided_slice %211 {offsets = [0, 64], sizes = [16, 64], strides = [1, 1]} : vector<16x128xf32> to vector<16x64xf32>
    %227 = arith.mulf %225, %226 : vector<16x64xf32>
    %c0_62 = arith.constant 0 : index
    %c0_63 = arith.constant 0 : index
    %c0_64 = arith.constant 0 : index
    %228 = vector.load %arg11[%c0_62, %c0_63, %c0_64] : memref<1x64x32xbf16, #tpu.memory_space<vmem>>, vector<1x64x32xbf16>
    %229 = vector.shape_cast %228 : vector<1x64x32xbf16> to vector<64x32xbf16>
    %230 = arith.truncf %227 : vector<16x64xf32> to vector<16x64xbf16>
    %cst_65 = arith.constant dense<0.000000e+00> : vector<16x32xf32>
    %231 = tpu.matmul %230, %229, %cst_65 {dimension_numbers = #tpu.dot_dimension_numbers<[1], [0], [0], [1], [0, 0, 1, 1], [], []>} : vector<16x64xbf16>, vector<64x32xbf16>, vector<16x32xf32> -> vector<16x32xf32>
    %232 = arith.addf %191, %231 : vector<16x32xf32>
    %c0_66 = arith.constant 0 : index
    %c0_67 = arith.constant 0 : index
    %233 = vector.load %arg15[%c0_66, %c0_67] : memref<16x32xf32, #tpu.memory_space<vmem>>, vector<16x32xf32>
    tpu.vector_store %arg15[%c0_66, %c0_67], %232 {strides = array<i32>} : memref<16x32xf32, #tpu.memory_space<vmem>>, vector<16x32xf32>,
    %c1_i32 = arith.constant 1 : i32
    %234 = arith.cmpi eq, %arg0, %c1_i32 : i32
    %235 = arith.extui %234 : i1 to i32
    %c0_i32_68 = arith.constant 0 : i32
    %236 = arith.cmpi ne, %235, %c0_i32_68 : i32
    scf.if %236 {
      %c0_69 = arith.constant 0 : index
      %c0_70 = arith.constant 0 : index
      %237 = vector.load %arg12[%c0_69, %c0_70] : memref<1x32xf32, #tpu.memory_space<vmem>>, vector<1x32xf32>
      %238 = arith.mulf %232, %232 : vector<16x32xf32>
      %cst_71 = arith.constant dense<0.000000e+00> : vector<16xf32>
      %239 = vector.multi_reduction <add>, %238, %cst_71 [1] : vector<16x32xf32> to vector<16xf32>
      %240 = vector.shape_cast %239 : vector<16xf32> to vector<16x1xf32>
      %cst_72 = arith.constant 3.200000e+01 : f32
      %241 = vector.broadcast %cst_72 : f32 to vector<16x1xf32>
      %242 = arith.divf %240, %241 : vector<16x1xf32>
      %cst_73 = arith.constant 9.99999997E-7 : f32
      %243 = vector.broadcast %cst_73 : f32 to vector<16x1xf32>
      %244 = arith.addf %242, %243 : vector<16x1xf32>
      %245 = math.rsqrt %244 : vector<16x1xf32>
      %246 = vector.broadcast %245 : vector<16x1xf32> to vector<16x32xf32>
      %247 = arith.mulf %232, %246 : vector<16x32xf32>
      %cst_74 = arith.constant 1.000000e+00 : f32
      %248 = vector.broadcast %cst_74 : f32 to vector<1x32xf32>
      %249 = arith.addf %248, %237 : vector<1x32xf32>
      %250 = vector.broadcast %249 : vector<1x32xf32> to vector<16x32xf32>
      %251 = arith.mulf %247, %250 : vector<16x32xf32>
      %c0_75 = arith.constant 0 : index
      %c0_76 = arith.constant 0 : index
      %252 = vector.load %arg13[%c0_75, %c0_76] : memref<128x32xbf16, #tpu.memory_space<vmem>>, vector<128x32xbf16>
      %253 = arith.truncf %251 : vector<16x32xf32> to vector<16x32xbf16>
      %cst_77 = arith.constant dense<0.000000e+00> : vector<16x128xf32>
      %254 = tpu.matmul %253, %252, %cst_77 {dimension_numbers = #tpu.dot_dimension_numbers<[1], [1], [0], [0], [0, 0, 1, 0], [], []>} : vector<16x32xbf16>, vector<128x32xbf16>, vector<16x128xf32> -> vector<16x128xf32>
      %c0_78 = arith.constant 0 : index
      %c0_79 = arith.constant 0 : index
      %255 = vector.load %arg14[%c0_78, %c0_79] : memref<16x128xf32, #tpu.memory_space<vmem>>, vector<16x128xf32>
      tpu.vector_store %arg14[%c0_78, %c0_79], %254 {strides = array<i32>} : memref<16x128xf32, #tpu.memory_space<vmem>>, vector<16x128xf32>,
    } else {
    }
    return
  }
  func.func @transform_0(%arg0: i32) -> (i32, i32) {
    %c0_i32 = arith.constant 0 : i32
    %c0_i32_0 = arith.constant 0 : i32
    %c0_i32_1 = arith.constant 0 : i32
    return %c0_i32, %c0_i32_0 : i32, i32
  }
  func.func @transform_1(%arg0: i32) -> (i32, i32) {
    %c0_i32 = arith.constant 0 : i32
    %c0_i32_0 = arith.constant 0 : i32
    %c0_i32_1 = arith.constant 0 : i32
    return %c0_i32, %c0_i32_0 : i32, i32
  }
  func.func @transform_2(%arg0: i32) -> (i32, i32) {
    %c0_i32 = arith.constant 0 : i32
    %c0_i32_0 = arith.constant 0 : i32
    %c0_i32_1 = arith.constant 0 : i32
    return %c0_i32, %c0_i32_0 : i32, i32
  }
  func.func @transform_3(%arg0: i32) -> (i32, i32) {
    %c0_i32 = arith.constant 0 : i32
    %c0_i32_0 = arith.constant 0 : i32
    %c0_i32_1 = arith.constant 0 : i32
    return %c0_i32, %c0_i32_0 : i32, i32
  }
  func.func @transform_4(%arg0: i32) -> (i32, i32) {
    %c0_i32 = arith.constant 0 : i32
    %c0_i32_0 = arith.constant 0 : i32
    %c0_i32_1 = arith.constant 0 : i32
    return %c0_i32, %c0_i32_0 : i32, i32
  }
  func.func @transform_5(%arg0: i32) -> (i32, i32, i32) {
    %c0_i32 = arith.constant 0 : i32
    %c0_i32_0 = arith.constant 0 : i32
    %c0_i32_1 = arith.constant 0 : i32
    return %arg0, %c0_i32, %c0_i32_0 : i32, i32, i32
  }
  func.func @transform_6(%arg0: i32) -> (i32, i32, i32) {
    %c0_i32 = arith.constant 0 : i32
    %c0_i32_0 = arith.constant 0 : i32
    %c0_i32_1 = arith.constant 0 : i32
    return %arg0, %c0_i32, %c0_i32_0 : i32, i32, i32
  }
  func.func @transform_7(%arg0: i32) -> (i32, i32, i32) {
    %c0_i32 = arith.constant 0 : i32
    %c0_i32_0 = arith.constant 0 : i32
    %c0_i32_1 = arith.constant 0 : i32
    return %arg0, %c0_i32, %c0_i32_0 : i32, i32, i32
  }
  func.func @transform_8(%arg0: i32) -> (i32, i32, i32) {
    %c0_i32 = arith.constant 0 : i32
    %c0_i32_0 = arith.constant 0 : i32
    %c0_i32_1 = arith.constant 0 : i32
    return %arg0, %c0_i32, %c0_i32_0 : i32, i32, i32
  }
  func.func @transform_9(%arg0: i32) -> (i32, i32, i32) {
    %c0_i32 = arith.constant 0 : i32
    %c0_i32_0 = arith.constant 0 : i32
    %c0_i32_1 = arith.constant 0 : i32
    return %arg0, %c0_i32, %c0_i32_0 : i32, i32, i32
  }
  func.func @transform_10(%arg0: i32) -> (i32, i32, i32) {
    %c0_i32 = arith.constant 0 : i32
    %c0_i32_0 = arith.constant 0 : i32
    %c0_i32_1 = arith.constant 0 : i32
    return %arg0, %c0_i32, %c0_i32_0 : i32, i32, i32
  }
  func.func @transform_11(%arg0: i32) -> (i32, i32) {
    %c0_i32 = arith.constant 0 : i32
    %c0_i32_0 = arith.constant 0 : i32
    %c0_i32_1 = arith.constant 0 : i32
    return %c0_i32, %c0_i32_0 : i32, i32
  }
  func.func @transform_12(%arg0: i32) -> (i32, i32) {
    %c0_i32 = arith.constant 0 : i32
    %c0_i32_0 = arith.constant 0 : i32
    %c0_i32_1 = arith.constant 0 : i32
    return %c0_i32, %c0_i32_0 : i32, i32
  }
  func.func @transform_13(%arg0: i32) -> (i32, i32) {
    %c0_i32 = arith.constant 0 : i32
    %c0_i32_0 = arith.constant 0 : i32
    %c0_i32_1 = arith.constant 0 : i32
    return %c0_i32, %c0_i32_0 : i32, i32
  }
}

</mosaic_0001>

<llo_original>
// kernel: paligemma_forward.2
$region0: #{paligemma_forward.2}
  #allocation0 [shape = 'u32[]', space=smem, size = 0x4, offset = 0x4, fixed_abs, tag = 'smem constant byte address 0x4 - core index']
  #allocation1 [shape = 'u32[144,128]{1,0:T(1,128)}', space=vmem, size = 0x12000, scoped, tag = 'internal scratch']
  #allocation2 [shape = 'f32[8,32]{1,0:T(8,128)}', space=vmem, size = 0x1000, scoped, tag = 'scratch operand']
  %s0 = inlined_call_operand.vmem [shape: f32[8,192], index: 0, kind: input, shape index: {}]
  %s1 = inlined_call_operand.vmem [shape: bf16[192,32], index: 1, kind: input, shape index: {}]
  %s2 = inlined_call_operand.vmem [shape: f32[1,32], index: 2, kind: input, shape index: {}]
  %s3 = inlined_call_operand.vmem [shape: f32[8,32], index: 3, kind: input, shape index: {}]
  %s4 = inlined_call_operand.vmem [shape: f32[2,1,32], index: 4, kind: input, shape index: {}]
  %s5 = inlined_call_operand.vmem [shape: f32[2,1,32], index: 5, kind: input, shape index: {}]
  %s6 = inlined_call_operand.vmem [shape: bf16[2,32,96], index: 6, kind: input, shape index: {}]
  %s7 = inlined_call_operand.vmem [shape: f32[2,1,96], index: 7, kind: input, shape index: {}]
  %s8 = inlined_call_operand.vmem [shape: bf16[2,32,32], index: 8, kind: input, shape index: {}]
  %s9 = inlined_call_operand.vmem [shape: f32[2,1,32], index: 9, kind: input, shape index: {}]
  %s10 = inlined_call_operand.vmem [shape: f32[2,1,32], index: 10, kind: input, shape index: {}]
  %s11 = inlined_call_operand.vmem [shape: f32[2,1,32], index: 11, kind: input, shape index: {}]
  %s12 = inlined_call_operand.vmem [shape: bf16[2,32,64], index: 12, kind: input, shape index: {}]
  %s13 = inlined_call_operand.vmem [shape: f32[2,1,64], index: 13, kind: input, shape index: {}]
  %s14 = inlined_call_operand.vmem [shape: bf16[2,64,32], index: 14, kind: input, shape index: {}]
  %s15 = inlined_call_operand.vmem [shape: f32[2,1,32], index: 15, kind: input, shape index: {}]
  %s16 = inlined_call_operand.vmem [shape: f32[1,32], index: 16, kind: input, shape index: {}]
  %s17 = inlined_call_operand.vmem [shape: f32[1,32], index: 17, kind: input, shape index: {}]
  %s18 = inlined_call_operand.vmem [shape: bf16[32,32], index: 18, kind: input, shape index: {}]
  %s19 = inlined_call_operand.vmem [shape: f32[1,32], index: 19, kind: input, shape index: {}]
  %s20 = inlined_call_operand.vmem [shape: f32[8,32], index: 20, kind: output, shape index: {}]
  %s21 = sld [smem:[#allocation0]]
  $region121: #{paligemma_forward.2} parent=0
    _
  %s23 = ssub.s32 1, %s21
  %s24 = scalar_select 0, %s23, %s21
  loop: start=0, step=1, limit=4
  $region2: #{paligemma_forward.2} parent=0 // loop_pre_header
    _
  $region3: #{paligemma_forward.2} parent=0 // loop_header
    %s26 = sphi 0, %s30
    %p27 = scmp.ge.s32.totalorder %s26, 4
    %s34 = sphi 0, %s34
    %s36 = sphi 0, %s34
    %s37 = sphi 0, %s36
    %s51 = sphi 0, %s37
    %s55 = sphi 0, %s55
    %s57 = sphi 0, %s55
    %s58 = sphi 0, %s57
    %s72 = sphi 0, %s58
    %s76 = sphi 0, %s76
    %s78 = sphi 0, %s76
    %s79 = sphi 0, %s78
    %s93 = sphi 0, %s79
    %s97 = sphi 0, %s97
    %s99 = sphi 0, %s97
    %s100 = sphi 0, %s99
    %s114 = sphi 0, %s100
    %s120 = sphi 0, %s122
    %s123 = sphi 0, %s120
    %s124 = sphi 0, %s123
    %s140 = sphi 0, %s124
    %s146 = sphi 0, %s148
    %s149 = sphi 0, %s146
    %s150 = sphi 0, %s149
    %s166 = sphi 0, %s150
    %s172 = sphi 0, %s174
    %s175 = sphi 0, %s172
    %s176 = sphi 0, %s175
    %s192 = sphi 0, %s176
    %s198 = sphi 0, %s200
    %s201 = sphi 0, %s198
    %s202 = sphi 0, %s201
    %s218 = sphi 0, %s202
    %s224 = sphi 0, %s226
    %s227 = sphi 0, %s224
    %s228 = sphi 0, %s227
    %s244 = sphi 0, %s228
    %s250 = sphi 0, %s252
    %s253 = sphi 0, %s250
    %s254 = sphi 0, %s253
    %s270 = sphi 0, %s254
    %s276 = sphi 0, %s278
    %s279 = sphi 0, %s276
    %s280 = sphi 0, %s279
    %s296 = sphi 0, %s280
    %s302 = sphi 0, %s304
    %s305 = sphi 0, %s302
    %s306 = sphi 0, %s305
    %s322 = sphi 0, %s306
    %s328 = sphi 0, %s330
    %s331 = sphi 0, %s328
    %s332 = sphi 0, %s331
    %s348 = sphi 0, %s332
    %s354 = sphi 0, %s356
    %s357 = sphi 0, %s354
    %s358 = sphi 0, %s357
    %s374 = sphi 0, %s358
    %s380 = sphi 0, %s382
    %s383 = sphi 0, %s380
    %s384 = sphi 0, %s383
    %s400 = sphi 0, %s384
    %s406 = sphi 0, %s408
    %s409 = sphi 0, %s406
    %s410 = sphi 0, %s409
    %s426 = sphi 0, %s410
    %s430 = sphi 0, %s430
    %s432 = sphi 0, %s430
    %s433 = sphi 0, %s432
    %s447 = sphi 0, %s433
    %s451 = sphi 0, %s451
    %s453 = sphi 0, %s451
    %s454 = sphi 0, %s453
    %s468 = sphi 0, %s454
    %s472 = sphi 0, %s472
    %s474 = sphi 0, %s472
    %s475 = sphi 0, %s474
    %s489 = sphi 0, %s475
    %s493 = sphi 0, %s493
    %s495 = sphi 0, %s493
    %s496 = sphi 0, %s495
    %s510 = sphi 0, %s496
    %s514 = sphi 0, %s514
    %s516 = sphi 0, %s514
    %s517 = sphi 0, %s516
    %s531 = sphi 0, %s517
  $region4: #{paligemma_forward.2} parent=0 // loop_header_branch
    %29 = sbr.rel (%p27) target = $region8
  $region5: #{paligemma_forward.2} parent=0 // loop_body
    %s31 = ssub.s32 %s26, 1
    %s32 = ssub.s32 %s26, 2
    %s33 = sadd.s32 %s26, 1
    %s35 = sadd.s32 %s34, 1
    %p38 = scmp.eq.s32.totalorder %s26, 1
    %p39 = scmp.ne.s32.totalorder %s34, %s36
    %p40 = scmp.eq.s32.totalorder %s26, 0
    %p41 = por %p39, %p40
    %p42 = scmp.ne.s32.totalorder %s34, %s36
    %p43 = scmp.eq.s32.totalorder %s31, 1
    %p44 = por %p42, %p43
    %p45 = scmp.ne.s32.totalorder %s36, %s37
    %p46 = scmp.eq.s32.totalorder %s31, 0
    %p47 = por %p45, %p46
    %p48 = scmp.ne.s32.totalorder %s36, %s37
    %p49 = scmp.eq.s32.totalorder %s32, 1
    %p50 = por %p48, %p49
    %p52 = scmp.ne.s32.totalorder %s37, %s51
    %p53 = scmp.eq.s32.totalorder %s32, 0
    %p54 = por %p52, %p53
    %s56 = sadd.s32 %s55, 1
    %p59 = scmp.eq.s32.totalorder %s26, 1
    %p60 = scmp.ne.s32.totalorder %s55, %s57
    %p61 = scmp.eq.s32.totalorder %s26, 0
    %p62 = por %p60, %p61
    %p63 = scmp.ne.s32.totalorder %s55, %s57
    %p64 = scmp.eq.s32.totalorder %s31, 1
    %p65 = por %p63, %p64
    %p66 = scmp.ne.s32.totalorder %s57, %s58
    %p67 = scmp.eq.s32.totalorder %s31, 0
    %p68 = por %p66, %p67
    %p69 = scmp.ne.s32.totalorder %s57, %s58
    %p70 = scmp.eq.s32.totalorder %s32, 1
    %p71 = por %p69, %p70
    %p73 = scmp.ne.s32.totalorder %s58, %s72
    %p74 = scmp.eq.s32.totalorder %s32, 0
    %p75 = por %p73, %p74
    %s77 = sadd.s32 %s76, 1
    %p80 = scmp.eq.s32.totalorder %s26, 1
    %p81 = scmp.ne.s32.totalorder %s76, %s78
    %p82 = scmp.eq.s32.totalorder %s26, 0
    %p83 = por %p81, %p82
    %p84 = scmp.ne.s32.totalorder %s76, %s78
    %p85 = scmp.eq.s32.totalorder %s31, 1
    %p86 = por %p84, %p85
    %p87 = scmp.ne.s32.totalorder %s78, %s79
    %p88 = scmp.eq.s32.totalorder %s31, 0
    %p89 = por %p87, %p88
    %p90 = scmp.ne.s32.totalorder %s78, %s79
    %p91 = scmp.eq.s32.totalorder %s32, 1
    %p92 = por %p90, %p91
    %p94 = scmp.ne.s32.totalorder %s79, %s93
    %p95 = scmp.eq.s32.totalorder %s32, 0
    %p96 = por %p94, %p95
    %s98 = sadd.s32 %s97, 1
    %p101 = scmp.eq.s32.totalorder %s26, 1
    %p102 = scmp.ne.s32.totalorder %s97, %s99
    %p103 = scmp.eq.s32.totalorder %s26, 0
    %p104 = por %p102, %p103
    %p105 = scmp.ne.s32.totalorder %s97, %s99
    %p106 = scmp.eq.s32.totalorder %s31, 1
    %p107 = por %p105, %p106
    %p108 = scmp.ne.s32.totalorder %s99, %s100
    %p109 = scmp.eq.s32.totalorder %s31, 0
    %p110 = por %p108, %p109
    %p111 = scmp.ne.s32.totalorder %s99, %s100
    %p112 = scmp.eq.s32.totalorder %s32, 1
    %p113 = por %p111, %p112
    %p115 = scmp.ne.s32.totalorder %s100, %s114
    %p116 = scmp.eq.s32.totalorder %s32, 0
    %p117 = por %p115, %p116
    %s118 = ssub.s32 %s26, %s33
    %p119 = scmp.eq.s32.totalorder %s118, 0
    %s121 = sadd.s32 %s120, 1
    %s122 = scalar_select %p119, %s120, %s121
    %p125 = pneg %p119
    %p126 = scmp.eq.s32.totalorder %s26, 1
    %p127 = por %p125, %p126
    %p128 = scmp.ne.s32.totalorder %s120, %s123
    %p129 = scmp.eq.s32.totalorder %s26, 0
    %p130 = por %p128, %p129
    %p131 = scmp.ne.s32.totalorder %s120, %s123
    %p132 = scmp.eq.s32.totalorder %s31, 1
    %p133 = por %p131, %p132
    %p134 = scmp.ne.s32.totalorder %s123, %s124
    %p135 = scmp.eq.s32.totalorder %s31, 0
    %p136 = por %p134, %p135
    %p137 = scmp.ne.s32.totalorder %s123, %s124
    %p138 = scmp.eq.s32.totalorder %s32, 1
    %p139 = por %p137, %p138
    %p141 = scmp.ne.s32.totalorder %s124, %s140
    %p142 = scmp.eq.s32.totalorder %s32, 0
    %p143 = por %p141, %p142
    %s144 = ssub.s32 %s26, %s33
    %p145 = scmp.eq.s32.totalorder %s144, 0
    %s147 = sadd.s32 %s146, 1
    %s148 = scalar_select %p145, %s146, %s147
    %p151 = pneg %p145
    %p152 = scmp.eq.s32.totalorder %s26, 1
    %p153 = por %p151, %p152
    %p154 = scmp.ne.s32.totalorder %s146, %s149
    %p155 = scmp.eq.s32.totalorder %s26, 0
    %p156 = por %p154, %p155
    %p157 = scmp.ne.s32.totalorder %s146, %s149
    %p158 = scmp.eq.s32.totalorder %s31, 1
    %p159 = por %p157, %p158
    %p160 = scmp.ne.s32.totalorder %s149, %s150
    %p161 = scmp.eq.s32.totalorder %s31, 0
    %p162 = por %p160, %p161
    %p163 = scmp.ne.s32.totalorder %s149, %s150
    %p164 = scmp.eq.s32.totalorder %s32, 1
    %p165 = por %p163, %p164
    %p167 = scmp.ne.s32.totalorder %s150, %s166
    %p168 = scmp.eq.s32.totalorder %s32, 0
    %p169 = por %p167, %p168
    %s170 = ssub.s32 %s26, %s33
    %p171 = scmp.eq.s32.totalorder %s170, 0
    %s173 = sadd.s32 %s172, 1
    %s174 = scalar_select %p171, %s172, %s173
    %p177 = pneg %p171
    %p178 = scmp.eq.s32.totalorder %s26, 1
    %p179 = por %p177, %p178
    %p180 = scmp.ne.s32.totalorder %s172, %s175
    %p181 = scmp.eq.s32.totalorder %s26, 0
    %p182 = por %p180, %p181
    %p183 = scmp.ne.s32.totalorder %s172, %s175
    %p184 = scmp.eq.s32.totalorder %s31, 1
    %p185 = por %p183, %p184
    %p186 = scmp.ne.s32.totalorder %s175, %s176
    %p187 = scmp.eq.s32.totalorder %s31, 0
    %p188 = por %p186, %p187
    %p189 = scmp.ne.s32.totalorder %s175, %s176
    %p190 = scmp.eq.s32.totalorder %s32, 1
    %p191 = por %p189, %p190
    %p193 = scmp.ne.s32.totalorder %s176, %s192
    %p194 = scmp.eq.s32.totalorder %s32, 0
    %p195 = por %p193, %p194
    %s196 = ssub.s32 %s26, %s33
    %p197 = scmp.eq.s32.totalorder %s196, 0
    %s199 = sadd.s32 %s198, 1
    %s200 = scalar_select %p197, %s198, %s199
    %p203 = pneg %p197
    %p204 = scmp.eq.s32.totalorder %s26, 1
    %p205 = por %p203, %p204
    %p206 = scmp.ne.s32.totalorder %s198, %s201
    %p207 = scmp.eq.s32.totalorder %s26, 0
    %p208 = por %p206, %p207
    %p209 = scmp.ne.s32.totalorder %s198, %s201
    %p210 = scmp.eq.s32.totalorder %s31, 1
    %p211 = por %p209, %p210
    %p212 = scmp.ne.s32.totalorder %s201, %s202
    %p213 = scmp.eq.s32.totalorder %s31, 0
    %p214 = por %p212, %p213
    %p215 = scmp.ne.s32.totalorder %s201, %s202
    %p216 = scmp.eq.s32.totalorder %s32, 1
    %p217 = por %p215, %p216
    %p219 = scmp.ne.s32.totalorder %s202, %s218
    %p220 = scmp.eq.s32.totalorder %s32, 0
    %p221 = por %p219, %p220
    %s222 = ssub.s32 %s26, %s33
    %p223 = scmp.eq.s32.totalorder %s222, 0
    %s225 = sadd.s32 %s224, 1
    %s226 = scalar_select %p223, %s224, %s225
    %p229 = pneg %p223
    %p230 = scmp.eq.s32.totalorder %s26, 1
    %p231 = por %p229, %p230
    %p232 = scmp.ne.s32.totalorder %s224, %s227
    %p233 = scmp.eq.s32.totalorder %s26, 0
    %p234 = por %p232, %p233
    %p235 = scmp.ne.s32.totalorder %s224, %s227
    %p236 = scmp.eq.s32.totalorder %s31, 1
    %p237 = por %p235, %p236
    %p238 = scmp.ne.s32.totalorder %s227, %s228
    %p239 = scmp.eq.s32.totalorder %s31, 0
    %p240 = por %p238, %p239
    %p241 = scmp.ne.s32.totalorder %s227, %s228
    %p242 = scmp.eq.s32.totalorder %s32, 1
    %p243 = por %p241, %p242
    %p245 = scmp.ne.s32.totalorder %s228, %s244
    %p246 = scmp.eq.s32.totalorder %s32, 0
    %p247 = por %p245, %p246
    %s248 = ssub.s32 %s26, %s33
    %p249 = scmp.eq.s32.totalorder %s248, 0
    %s251 = sadd.s32 %s250, 1
    %s252 = scalar_select %p249, %s250, %s251
    %p255 = pneg %p249
    %p256 = scmp.eq.s32.totalorder %s26, 1
    %p257 = por %p255, %p256
    %p258 = scmp.ne.s32.totalorder %s250, %s253
    %p259 = scmp.eq.s32.totalorder %s26, 0
    %p260 = por %p258, %p259
    %p261 = scmp.ne.s32.totalorder %s250, %s253
    %p262 = scmp.eq.s32.totalorder %s31, 1
    %p263 = por %p261, %p262
    %p264 = scmp.ne.s32.totalorder %s253, %s254
    %p265 = scmp.eq.s32.totalorder %s31, 0
    %p266 = por %p264, %p265
    %p267 = scmp.ne.s32.totalorder %s253, %s254
    %p268 = scmp.eq.s32.totalorder %s32, 1
    %p269 = por %p267, %p268
    %p271 = scmp.ne.s32.totalorder %s254, %s270
    %p272 = scmp.eq.s32.totalorder %s32, 0
    %p273 = por %p271, %p272
    %s274 = ssub.s32 %s26, %s33
    %p275 = scmp.eq.s32.totalorder %s274, 0
    %s277 = sadd.s32 %s276, 1
    %s278 = scalar_select %p275, %s276, %s277
    %p281 = pneg %p275
    %p282 = scmp.eq.s32.totalorder %s26, 1
    %p283 = por %p281, %p282
    %p284 = scmp.ne.s32.totalorder %s276, %s279
    %p285 = scmp.eq.s32.totalorder %s26, 0
    %p286 = por %p284, %p285
    %p287 = scmp.ne.s32.totalorder %s276, %s279
    %p288 = scmp.eq.s32.totalorder %s31, 1
    %p289 = por %p287, %p288
    %p290 = scmp.ne.s32.totalorder %s279, %s280
    %p291 = scmp.eq.s32.totalorder %s31, 0
    %p292 = por %p290, %p291
    %p293 = scmp.ne.s32.totalorder %s279, %s280
    %p294 = scmp.eq.s32.totalorder %s32, 1
    %p295 = por %p293, %p294
    %p297 = scmp.ne.s32.totalorder %s280, %s296
    %p298 = scmp.eq.s32.totalorder %s32, 0
    %p299 = por %p297, %p298
    %s300 = ssub.s32 %s26, %s33
    %p301 = scmp.eq.s32.totalorder %s300, 0
    %s303 = sadd.s32 %s302, 1
    %s304 = scalar_select %p301, %s302, %s303
    %p307 = pneg %p301
    %p308 = scmp.eq.s32.totalorder %s26, 1
    %p309 = por %p307, %p308
    %p310 = scmp.ne.s32.totalorder %s302, %s305
    %p311 = scmp.eq.s32.totalorder %s26, 0
    %p312 = por %p310, %p311
    %p313 = scmp.ne.s32.totalorder %s302, %s305
    %p314 = scmp.eq.s32.totalorder %s31, 1
    %p315 = por %p313, %p314
    %p316 = scmp.ne.s32.totalorder %s305, %s306
    %p317 = scmp.eq.s32.totalorder %s31, 0
    %p318 = por %p316, %p317
    %p319 = scmp.ne.s32.totalorder %s305, %s306
    %p320 = scmp.eq.s32.totalorder %s32, 1
    %p321 = por %p319, %p320
    %p323 = scmp.ne.s32.totalorder %s306, %s322
    %p324 = scmp.eq.s32.totalorder %s32, 0
    %p325 = por %p323, %p324
    %s326 = ssub.s32 %s26, %s33
    %p327 = scmp.eq.s32.totalorder %s326, 0
    %s329 = sadd.s32 %s328, 1
    %s330 = scalar_select %p327, %s328, %s329
    %p333 = pneg %p327
    %p334 = scmp.eq.s32.totalorder %s26, 1
    %p335 = por %p333, %p334
    %p336 = scmp.ne.s32.totalorder %s328, %s331
    %p337 = scmp.eq.s32.totalorder %s26, 0
    %p338 = por %p336, %p337
    %p339 = scmp.ne.s32.totalorder %s328, %s331
    %p340 = scmp.eq.s32.totalorder %s31, 1
    %p341 = por %p339, %p340
    %p342 = scmp.ne.s32.totalorder %s331, %s332
    %p343 = scmp.eq.s32.totalorder %s31, 0
    %p344 = por %p342, %p343
    %p345 = scmp.ne.s32.totalorder %s331, %s332
    %p346 = scmp.eq.s32.totalorder %s32, 1
    %p347 = por %p345, %p346
    %p349 = scmp.ne.s32.totalorder %s332, %s348
    %p350 = scmp.eq.s32.totalorder %s32, 0
    %p351 = por %p349, %p350
    %s352 = ssub.s32 %s26, %s33
    %p353 = scmp.eq.s32.totalorder %s352, 0
    %s355 = sadd.s32 %s354, 1
    %s356 = scalar_select %p353, %s354, %s355
    %p359 = pneg %p353
    %p360 = scmp.eq.s32.totalorder %s26, 1
    %p361 = por %p359, %p360
    %p362 = scmp.ne.s32.totalorder %s354, %s357
    %p363 = scmp.eq.s32.totalorder %s26, 0
    %p364 = por %p362, %p363
    %p365 = scmp.ne.s32.totalorder %s354, %s357
    %p366 = scmp.eq.s32.totalorder %s31, 1
    %p367 = por %p365, %p366
    %p368 = scmp.ne.s32.totalorder %s357, %s358
    %p369 = scmp.eq.s32.totalorder %s31, 0
    %p370 = por %p368, %p369
    %p371 = scmp.ne.s32.totalorder %s357, %s358
    %p372 = scmp.eq.s32.totalorder %s32, 1
    %p373 = por %p371, %p372
    %p375 = scmp.ne.s32.totalorder %s358, %s374
    %p376 = scmp.eq.s32.totalorder %s32, 0
    %p377 = por %p375, %p376
    %s378 = ssub.s32 %s26, %s33
    %p379 = scmp.eq.s32.totalorder %s378, 0
    %s381 = sadd.s32 %s380, 1
    %s382 = scalar_select %p379, %s380, %s381
    %p385 = pneg %p379
    %p386 = scmp.eq.s32.totalorder %s26, 1
    %p387 = por %p385, %p386
    %p388 = scmp.ne.s32.totalorder %s380, %s383
    %p389 = scmp.eq.s32.totalorder %s26, 0
    %p390 = por %p388, %p389
    %p391 = scmp.ne.s32.totalorder %s380, %s383
    %p392 = scmp.eq.s32.totalorder %s31, 1
    %p393 = por %p391, %p392
    %p394 = scmp.ne.s32.totalorder %s383, %s384
    %p395 = scmp.eq.s32.totalorder %s31, 0
    %p396 = por %p394, %p395
    %p397 = scmp.ne.s32.totalorder %s383, %s384
    %p398 = scmp.eq.s32.totalorder %s32, 1
    %p399 = por %p397, %p398
    %p401 = scmp.ne.s32.totalorder %s384, %s400
    %p402 = scmp.eq.s32.totalorder %s32, 0
    %p403 = por %p401, %p402
    %s404 = ssub.s32 %s26, %s33
    %p405 = scmp.eq.s32.totalorder %s404, 0
    %s407 = sadd.s32 %s406, 1
    %s408 = scalar_select %p405, %s406, %s407
    %p411 = pneg %p405
    %p412 = scmp.eq.s32.totalorder %s26, 1
    %p413 = por %p411, %p412
    %p414 = scmp.ne.s32.totalorder %s406, %s409
    %p415 = scmp.eq.s32.totalorder %s26, 0
    %p416 = por %p414, %p415
    %p417 = scmp.ne.s32.totalorder %s406, %s409
    %p418 = scmp.eq.s32.totalorder %s31, 1
    %p419 = por %p417, %p418
    %p420 = scmp.ne.s32.totalorder %s409, %s410
    %p421 = scmp.eq.s32.totalorder %s31, 0
    %p422 = por %p420, %p421
    %p423 = scmp.ne.s32.totalorder %s409, %s410
    %p424 = scmp.eq.s32.totalorder %s32, 1
    %p425 = por %p423, %p424
    %p427 = scmp.ne.s32.totalorder %s410, %s426
    %p428 = scmp.eq.s32.totalorder %s32, 0
    %p429 = por %p427, %p428
    %s431 = sadd.s32 %s430, 1
    %p434 = scmp.eq.s32.totalorder %s26, 1
    %p435 = scmp.ne.s32.totalorder %s430, %s432
    %p436 = scmp.eq.s32.totalorder %s26, 0
    %p437 = por %p435, %p436
    %p438 = scmp.ne.s32.totalorder %s430, %s432
    %p439 = scmp.eq.s32.totalorder %s31, 1
    %p440 = por %p438, %p439
    %p441 = scmp.ne.s32.totalorder %s432, %s433
    %p442 = scmp.eq.s32.totalorder %s31, 0
    %p443 = por %p441, %p442
    %p444 = scmp.ne.s32.totalorder %s432, %s433
    %p445 = scmp.eq.s32.totalorder %s32, 1
    %p446 = por %p444, %p445
    %p448 = scmp.ne.s32.totalorder %s433, %s447
    %p449 = scmp.eq.s32.totalorder %s32, 0
    %p450 = por %p448, %p449
    %s452 = sadd.s32 %s451, 1
    %p455 = scmp.eq.s32.totalorder %s26, 1
    %p456 = scmp.ne.s32.totalorder %s451, %s453
    %p457 = scmp.eq.s32.totalorder %s26, 0
    %p458 = por %p456, %p457
    %p459 = scmp.ne.s32.totalorder %s451, %s453
    %p460 = scmp.eq.s32.totalorder %s31, 1
    %p461 = por %p459, %p460
    %p462 = scmp.ne.s32.totalorder %s453, %s454
    %p463 = scmp.eq.s32.totalorder %s31, 0
    %p464 = por %p462, %p463
    %p465 = scmp.ne.s32.totalorder %s453, %s454
    %p466 = scmp.eq.s32.totalorder %s32, 1
    %p467 = por %p465, %p466
    %p469 = scmp.ne.s32.totalorder %s454, %s468
    %p470 = scmp.eq.s32.totalorder %s32, 0
    %p471 = por %p469, %p470
    %s473 = sadd.s32 %s472, 1
    %p476 = scmp.eq.s32.totalorder %s26, 1
    %p477 = scmp.ne.s32.totalorder %s472, %s474
    %p478 = scmp.eq.s32.totalorder %s26, 0
    %p479 = por %p477, %p478
    %p480 = scmp.ne.s32.totalorder %s472, %s474
    %p481 = scmp.eq.s32.totalorder %s31, 1
    %p482 = por %p480, %p481
    %p483 = scmp.ne.s32.totalorder %s474, %s475
    %p484 = scmp.eq.s32.totalorder %s31, 0
    %p485 = por %p483, %p484
    %p486 = scmp.ne.s32.totalorder %s474, %s475
    %p487 = scmp.eq.s32.totalorder %s32, 1
    %p488 = por %p486, %p487
    %p490 = scmp.ne.s32.totalorder %s475, %s489
    %p491 = scmp.eq.s32.totalorder %s32, 0
    %p492 = por %p490, %p491
    %s494 = sadd.s32 %s493, 1
    %p497 = scmp.eq.s32.totalorder %s26, 1
    %p498 = scmp.ne.s32.totalorder %s493, %s495
    %p499 = scmp.eq.s32.totalorder %s26, 0
    %p500 = por %p498, %p499
    %p501 = scmp.ne.s32.totalorder %s493, %s495
    %p502 = scmp.eq.s32.totalorder %s31, 1
    %p503 = por %p501, %p502
    %p504 = scmp.ne.s32.totalorder %s495, %s496
    %p505 = scmp.eq.s32.totalorder %s31, 0
    %p506 = por %p504, %p505
    %p507 = scmp.ne.s32.totalorder %s495, %s496
    %p508 = scmp.eq.s32.totalorder %s32, 1
    %p509 = por %p507, %p508
    %p511 = scmp.ne.s32.totalorder %s496, %s510
    %p512 = scmp.eq.s32.totalorder %s32, 0
    %p513 = por %p511, %p512
    %s515 = sadd.s32 %s514, 1
    %p518 = scmp.eq.s32.totalorder %s26, 1
    %p519 = scmp.ne.s32.totalorder %s514, %s516
    %p520 = scmp.eq.s32.totalorder %s26, 0
    %p521 = por %p519, %p520
    %p522 = scmp.ne.s32.totalorder %s514, %s516
    %p523 = scmp.eq.s32.totalorder %s31, 1
    %p524 = por %p522, %p523
    %p525 = scmp.ne.s32.totalorder %s516, %s517
    %p526 = scmp.eq.s32.totalorder %s31, 0
    %p527 = por %p525, %p526
    %p528 = scmp.ne.s32.totalorder %s516, %s517
    %p529 = scmp.eq.s32.totalorder %s32, 1
    %p530 = por %p528, %p529
    %p532 = scmp.ne.s32.totalorder %s517, %s531
    %p533 = scmp.eq.s32.totalorder %s32, 0
    %p534 = por %p532, %p533
    %p535 = scmp.le.s32.totalorder 1, %s26
    %p536 = scmp.lt.s32.totalorder %s26, 3
    %p537 = pnand %p535, %p536
    %p538 = pneg %p537
    // Predicated region
    $region9: #{paligemma_forward.2} parent=5 // pred_check
      _
    $region10: #{paligemma_forward.2} parent=5 // pred_check_branch
      %540 = sbr.rel (%p537) target = $region12
    $region11: #{paligemma_forward.2} parent=5 // pred_region
      %s541 = ssub.s32 %s26, 1
      // Predicated region
      $region13: #{paligemma_forward.2} parent=11 // pred_check
        %p542 = pneg %p47
      $region14: #{paligemma_forward.2} parent=11 // pred_check_branch
        %544 = sbr.rel (%p542) target = $region16
      $region15: #{paligemma_forward.2} parent=11 // pred_region
        _
      $region16: #{paligemma_forward.2} parent=11 // pred_fallthru
        _
      // Predicated region
      $region17: #{paligemma_forward.2} parent=11 // pred_check
        %p545 = pneg %p68
      $region18: #{paligemma_forward.2} parent=11 // pred_check_branch
        %547 = sbr.rel (%p545) target = $region20
      $region19: #{paligemma_forward.2} parent=11 // pred_region
        _
      $region20: #{paligemma_forward.2} parent=11 // pred_fallthru
        _
      // Predicated region
      $region21: #{paligemma_forward.2} parent=11 // pred_check
        %p548 = pneg %p89
      $region22: #{paligemma_forward.2} parent=11 // pred_check_branch
        %550 = sbr.rel (%p548) target = $region24
      $region23: #{paligemma_forward.2} parent=11 // pred_region
        _
      $region24: #{paligemma_forward.2} parent=11 // pred_fallthru
        _
      // Predicated region
      $region25: #{paligemma_forward.2} parent=11 // pred_check
        %p551 = pneg %p110
      $region26: #{paligemma_forward.2} parent=11 // pred_check_branch
        %553 = sbr.rel (%p551) target = $region28
      $region27: #{paligemma_forward.2} parent=11 // pred_region
        _
      $region28: #{paligemma_forward.2} parent=11 // pred_fallthru
        _
      // Predicated region
      $region29: #{paligemma_forward.2} parent=11 // pred_check
        %p554 = pneg %p443
      $region30: #{paligemma_forward.2} parent=11 // pred_check_branch
        %556 = sbr.rel (%p554) target = $region32
      $region31: #{paligemma_forward.2} parent=11 // pred_region
        _
      $region32: #{paligemma_forward.2} parent=11 // pred_fallthru
        _
      // Predicated region
      $region33: #{paligemma_forward.2} parent=11 // pred_check
        %p557 = pneg %p464
      $region34: #{paligemma_forward.2} parent=11 // pred_check_branch
        %559 = sbr.rel (%p557) target = $region36
      $region35: #{paligemma_forward.2} parent=11 // pred_region
        _
      $region36: #{paligemma_forward.2} parent=11 // pred_fallthru
        _
      // Predicated region
      $region37: #{paligemma_forward.2} parent=11 // pred_check
        %p560 = pneg %p485
      $region38: #{paligemma_forward.2} parent=11 // pred_check_branch
        %562 = sbr.rel (%p560) target = $region40
      $region39: #{paligemma_forward.2} parent=11 // pred_region
        _
      $region40: #{paligemma_forward.2} parent=11 // pred_fallthru
        _
      // Predicated region
      $region41: #{paligemma_forward.2} parent=11 // pred_check
        %p563 = pneg %p506
      $region42: #{paligemma_forward.2} parent=11 // pred_check_branch
        %565 = sbr.rel (%p563) target = $region44
      $region43: #{paligemma_forward.2} parent=11 // pred_region
        _
      $region44: #{paligemma_forward.2} parent=11 // pred_fallthru
        _
    $region12: #{paligemma_forward.2} parent=5 // pred_fallthru
      _
    %p566 = scmp.lt.s32.totalorder %s26, 2
    // Predicated region
    $region45: #{paligemma_forward.2} parent=5 // pred_check
      %p567 = pneg %p566
    $region46: #{paligemma_forward.2} parent=5 // pred_check_branch
      %569 = sbr.rel (%p567) target = $region48
    $region47: #{paligemma_forward.2} parent=5 // pred_region
      // Predicated region
      $region49: #{paligemma_forward.2} parent=47 // pred_check
        %p570 = pneg %p130
      $region50: #{paligemma_forward.2} parent=47 // pred_check_branch
        %572 = sbr.rel (%p570) target = $region52
      $region51: #{paligemma_forward.2} parent=47 // pred_region
        %p573 = scmp.lt.s32.totalorder %s26, 1
        %s574 = scalar_select %p573, %s26, 1
        %s575 = scalar_lea.vmem %s4, %s574
      $region52: #{paligemma_forward.2} parent=47 // pred_fallthru
        _
      // Predicated region
      $region53: #{paligemma_forward.2} parent=47 // pred_check
        %p576 = pneg %p156
      $region54: #{paligemma_forward.2} parent=47 // pred_check_branch
        %578 = sbr.rel (%p576) target = $region56
      $region55: #{paligemma_forward.2} parent=47 // pred_region
        %p579 = scmp.lt.s32.totalorder %s26, 1
        %s580 = scalar_select %p579, %s26, 1
        %s581 = scalar_lea.vmem %s5, %s580
      $region56: #{paligemma_forward.2} parent=47 // pred_fallthru
        _
      // Predicated region
      $region57: #{paligemma_forward.2} parent=47 // pred_check
        %p582 = pneg %p182
      $region58: #{paligemma_forward.2} parent=47 // pred_check_branch
        %584 = sbr.rel (%p582) target = $region60
      $region59: #{paligemma_forward.2} parent=47 // pred_region
        %p585 = scmp.lt.s32.totalorder %s26, 1
        %s586 = scalar_select %p585, %s26, 1
        %s587 = smul.addr %s586, 4
        %s588 = smul.addr %s587, 4
        %s589 = scalar_lea.vmem %s6, %s588
      $region60: #{paligemma_forward.2} parent=47 // pred_fallthru
        _
      // Predicated region
      $region61: #{paligemma_forward.2} parent=47 // pred_check
        %p590 = pneg %p208
      $region62: #{paligemma_forward.2} parent=47 // pred_check_branch
        %592 = sbr.rel (%p590) target = $region64
      $region63: #{paligemma_forward.2} parent=47 // pred_region
        %p593 = scmp.lt.s32.totalorder %s26, 1
        %s594 = scalar_select %p593, %s26, 1
        %s595 = scalar_lea.vmem %s7, %s594
      $region64: #{paligemma_forward.2} parent=47 // pred_fallthru
        _
      // Predicated region
      $region65: #{paligemma_forward.2} parent=47 // pred_check
        %p596 = pneg %p234
      $region66: #{paligemma_forward.2} parent=47 // pred_check_branch
        %598 = sbr.rel (%p596) target = $region68
      $region67: #{paligemma_forward.2} parent=47 // pred_region
        %p599 = scmp.lt.s32.totalorder %s26, 1
        %s600 = scalar_select %p599, %s26, 1
        %s601 = smul.addr %s600, 4
        %s602 = smul.addr %s601, 4
        %s603 = scalar_lea.vmem %s8, %s602
      $region68: #{paligemma_forward.2} parent=47 // pred_fallthru
        _
      // Predicated region
      $region69: #{paligemma_forward.2} parent=47 // pred_check
        %p604 = pneg %p260
      $region70: #{paligemma_forward.2} parent=47 // pred_check_branch
        %606 = sbr.rel (%p604) target = $region72
      $region71: #{paligemma_forward.2} parent=47 // pred_region
        %p607 = scmp.lt.s32.totalorder %s26, 1
        %s608 = scalar_select %p607, %s26, 1
        %s609 = scalar_lea.vmem %s9, %s608
      $region72: #{paligemma_forward.2} parent=47 // pred_fallthru
        _
      // Predicated region
      $region73: #{paligemma_forward.2} parent=47 // pred_check
        %p610 = pneg %p286
      $region74: #{paligemma_forward.2} parent=47 // pred_check_branch
        %612 = sbr.rel (%p610) target = $region76
      $region75: #{paligemma_forward.2} parent=47 // pred_region
        %p613 = scmp.lt.s32.totalorder %s26, 1
        %s614 = scalar_select %p613, %s26, 1
        %s615 = scalar_lea.vmem %s10, %s614
      $region76: #{paligemma_forward.2} parent=47 // pred_fallthru
        _
      // Predicated region
      $region77: #{paligemma_forward.2} parent=47 // pred_check
        %p616 = pneg %p312
      $region78: #{paligemma_forward.2} parent=47 // pred_check_branch
        %618 = sbr.rel (%p616) target = $region80
      $region79: #{paligemma_forward.2} parent=47 // pred_region
        %p619 = scmp.lt.s32.totalorder %s26, 1
        %s620 = scalar_select %p619, %s26, 1
        %s621 = scalar_lea.vmem %s11, %s620
      $region80: #{paligemma_forward.2} parent=47 // pred_fallthru
        _
      // Predicated region
      $region81: #{paligemma_forward.2} parent=47 // pred_check
        %p622 = pneg %p338
      $region82: #{paligemma_forward.2} parent=47 // pred_check_branch
        %624 = sbr.rel (%p622) target = $region84
      $region83: #{paligemma_forward.2} parent=47 // pred_region
        %p625 = scmp.lt.s32.totalorder %s26, 1
        %s626 = scalar_select %p625, %s26, 1
        %s627 = smul.addr %s626, 4
        %s628 = smul.addr %s627, 4
        %s629 = scalar_lea.vmem %s12, %s628
      $region84: #{paligemma_forward.2} parent=47 // pred_fallthru
        _
      // Predicated region
      $region85: #{paligemma_forward.2} parent=47 // pred_check
        %p630 = pneg %p364
      $region86: #{paligemma_forward.2} parent=47 // pred_check_branch
        %632 = sbr.rel (%p630) target = $region88
      $region87: #{paligemma_forward.2} parent=47 // pred_region
        %p633 = scmp.lt.s32.totalorder %s26, 1
        %s634 = scalar_select %p633, %s26, 1
        %s635 = scalar_lea.vmem %s13, %s634
      $region88: #{paligemma_forward.2} parent=47 // pred_fallthru
        _
      // Predicated region
      $region89: #{paligemma_forward.2} parent=47 // pred_check
        %p636 = pneg %p390
      $region90: #{paligemma_forward.2} parent=47 // pred_check_branch
        %638 = sbr.rel (%p636) target = $region92
      $region91: #{paligemma_forward.2} parent=47 // pred_region
        %p639 = scmp.lt.s32.totalorder %s26, 1
        %s640 = scalar_select %p639, %s26, 1
        %s641 = smul.addr %s640, 8
        %s642 = smul.addr %s641, 4
        %s643 = scalar_lea.vmem %s14, %s642
      $region92: #{paligemma_forward.2} parent=47 // pred_fallthru
        _
      // Predicated region
      $region93: #{paligemma_forward.2} parent=47 // pred_check
        %p644 = pneg %p416
      $region94: #{paligemma_forward.2} parent=47 // pred_check_branch
        %646 = sbr.rel (%p644) target = $region96
      $region95: #{paligemma_forward.2} parent=47 // pred_region
        %p647 = scmp.lt.s32.totalorder %s26, 1
        %s648 = scalar_select %p647, %s26, 1
        %s649 = scalar_lea.vmem %s15, %s648
      $region96: #{paligemma_forward.2} parent=47 // pred_fallthru
        _
    $region48: #{paligemma_forward.2} parent=5 // pred_fallthru
      _
    %p650 = scmp.le.s32.totalorder 1, %s26
    %p651 = scmp.lt.s32.totalorder %s26, 3
    %p652 = pnand %p650, %p651
    %p653 = pneg %p652
    // Predicated region
    $region97: #{paligemma_forward.2} parent=5 // pred_check
      _
    $region98: #{paligemma_forward.2} parent=5 // pred_check_branch
      %655 = sbr.rel (%p652) target = $region100
    $region99: #{paligemma_forward.2} parent=5 // pred_region
      %s656 = ssub.s32 %s26, 1
      %p657 = pneg %p47
      %p658 = pneg %p44
      %p659 = pneg %p68
      %p660 = pneg %p65
      %p661 = pneg %p89
      %p662 = pneg %p86
      %p663 = pneg %p110
      %p664 = pneg %p107
      %p665 = scmp.lt.s32.totalorder %s31, 1
      %s666 = scalar_select %p665, %s31, 1
      %s667 = scalar_lea.vmem %s4, %s666
      %p668 = pneg %p136
      %p669 = pneg %p133
      %p670 = scmp.lt.s32.totalorder %s31, 1
      %s671 = scalar_select %p670, %s31, 1
      %s672 = scalar_lea.vmem %s5, %s671
      %p673 = pneg %p162
      %p674 = pneg %p159
      %p675 = scmp.lt.s32.totalorder %s31, 1
      %s676 = scalar_select %p675, %s31, 1
      %s677 = smul.addr %s676, 4
      %s678 = smul.addr %s677, 4
      %s679 = scalar_lea.vmem %s6, %s678
      %p680 = pneg %p188
      %p681 = pneg %p185
      %p682 = scmp.lt.s32.totalorder %s31, 1
      %s683 = scalar_select %p682, %s31, 1
      %s684 = scalar_lea.vmem %s7, %s683
      %p685 = pneg %p214
      %p686 = pneg %p211
      %p687 = scmp.lt.s32.totalorder %s31, 1
      %s688 = scalar_select %p687, %s31, 1
      %s689 = smul.addr %s688, 4
      %s690 = smul.addr %s689, 4
      %s691 = scalar_lea.vmem %s8, %s690
      %p692 = pneg %p240
      %p693 = pneg %p237
      %p694 = scmp.lt.s32.totalorder %s31, 1
      %s695 = scalar_select %p694, %s31, 1
      %s696 = scalar_lea.vmem %s9, %s695
      %p697 = pneg %p266
      %p698 = pneg %p263
      %p699 = scmp.lt.s32.totalorder %s31, 1
      %s700 = scalar_select %p699, %s31, 1
      %s701 = scalar_lea.vmem %s10, %s700
      %p702 = pneg %p292
      %p703 = pneg %p289
      %p704 = scmp.lt.s32.totalorder %s31, 1
      %s705 = scalar_select %p704, %s31, 1
      %s706 = scalar_lea.vmem %s11, %s705
      %p707 = pneg %p318
      %p708 = pneg %p315
      %p709 = scmp.lt.s32.totalorder %s31, 1
      %s710 = scalar_select %p709, %s31, 1
      %s711 = smul.addr %s710, 4
      %s712 = smul.addr %s711, 4
      %s713 = scalar_lea.vmem %s12, %s712
      %p714 = pneg %p344
      %p715 = pneg %p341
      %p716 = scmp.lt.s32.totalorder %s31, 1
      %s717 = scalar_select %p716, %s31, 1
      %s718 = scalar_lea.vmem %s13, %s717
      %p719 = pneg %p370
      %p720 = pneg %p367
      %p721 = scmp.lt.s32.totalorder %s31, 1
      %s722 = scalar_select %p721, %s31, 1
      %s723 = smul.addr %s722, 8
      %s724 = smul.addr %s723, 4
      %s725 = scalar_lea.vmem %s14, %s724
      %p726 = pneg %p396
      %p727 = pneg %p393
      %p728 = scmp.lt.s32.totalorder %s31, 1
      %s729 = scalar_select %p728, %s31, 1
      %s730 = scalar_lea.vmem %s15, %s729
      %p731 = pneg %p422
      %p732 = pneg %p419
      %p733 = pneg %p443
      %p734 = pneg %p440
      %p735 = pneg %p464
      %p736 = pneg %p461
      %p737 = pneg %p485
      %p738 = pneg %p482
      %p739 = pneg %p506
      %p740 = pneg %p503
      %p741 = pneg %p527
      %p742 = pneg %p524
      %p743 = scmp.lt.s32.totalorder %s31, 1
      %s744 = scalar_select %p743, %s31, 1
      %s745 = scalar_lea.vmem %s4, %s744
      %p746 = scmp.lt.s32.totalorder %s31, 1
      %s747 = scalar_select %p746, %s31, 1
      %s748 = scalar_lea.vmem %s5, %s747
      %p749 = scmp.lt.s32.totalorder %s31, 1
      %s750 = scalar_select %p749, %s31, 1
      %s751 = smul.addr %s750, 4
      %s752 = smul.addr %s751, 4
      %s753 = scalar_lea.vmem %s6, %s752
      %p754 = scmp.lt.s32.totalorder %s31, 1
      %s755 = scalar_select %p754, %s31, 1
      %s756 = scalar_lea.vmem %s7, %s755
      %p757 = scmp.lt.s32.totalorder %s31, 1
      %s758 = scalar_select %p757, %s31, 1
      %s759 = smul.addr %s758, 4
      %s760 = smul.addr %s759, 4
      %s761 = scalar_lea.vmem %s8, %s760
      %p762 = scmp.lt.s32.totalorder %s31, 1
      %s763 = scalar_select %p762, %s31, 1
      %s764 = scalar_lea.vmem %s9, %s763
      %p765 = scmp.lt.s32.totalorder %s31, 1
      %s766 = scalar_select %p765, %s31, 1
      %s767 = scalar_lea.vmem %s10, %s766
      %p768 = scmp.lt.s32.totalorder %s31, 1
      %s769 = scalar_select %p768, %s31, 1
      %s770 = scalar_lea.vmem %s11, %s769
      %p771 = scmp.lt.s32.totalorder %s31, 1
      %s772 = scalar_select %p771, %s31, 1
      %s773 = smul.addr %s772, 4
      %s774 = smul.addr %s773, 4
      %s775 = scalar_lea.vmem %s12, %s774
      %p776 = scmp.lt.s32.totalorder %s31, 1
      %s777 = scalar_select %p776, %s31, 1
      %s778 = scalar_lea.vmem %s13, %s777
      %p779 = scmp.lt.s32.totalorder %s31, 1
      %s780 = scalar_select %p779, %s31, 1
      %s781 = smul.addr %s780, 8
      %s782 = smul.addr %s781, 4
      %s783 = scalar_lea.vmem %s14, %s782
      %p784 = scmp.lt.s32.totalorder %s31, 1
      %s785 = scalar_select %p784, %s31, 1
      %s786 = scalar_lea.vmem %s15, %s785
      %p788 = scmp.eq.s32.totalorder %s31, 0
      // Predicated region
      $region101: #{paligemma_forward.2} parent=99 // pred_check
        %p789 = pneg %p788
      $region102: #{paligemma_forward.2} parent=99 // pred_check_branch
        %791 = sbr.rel (%p789) target = $region104
      $region103: #{paligemma_forward.2} parent=99 // pred_region
        %v792 = vld [vmem:[%s0] sm:$0xff]
        %v793 = vld [vmem:[%s0 + $0x8] sm:$0xff]
        %v794 = vld [vmem:[%s1] sm:$0xf]
        %v795 = vld [vmem:[%s1 + $0x4] sm:$0xf]
        %v796 = vld [vmem:[%s1 + $0x8] sm:$0xf]
        %v797 = vld [vmem:[%s1 + $0xc] sm:$0xf]
        %v798 = vld [vmem:[%s1 + $0x10] sm:$0xf]
        %v799 = vld [vmem:[%s1 + $0x14] sm:$0xf]
        %v800 = vld [vmem:[%s1 + $0x18] sm:$0xf]
        %v801 = vld [vmem:[%s1 + $0x1c] sm:$0xf]
        %v802 = vld [vmem:[%s1 + $0x20] sm:$0xf]
        %v803 = vld [vmem:[%s1 + $0x24] sm:$0xf]
        %v804 = vld [vmem:[%s1 + $0x28] sm:$0xf]
        %v805 = vld [vmem:[%s1 + $0x2c] sm:$0xf]
        %v806 = vld [vmem:[%s1 + $0x30] sm:$0xf]
        %v807 = vld [vmem:[%s1 + $0x34] sm:$0xf]
        %v808 = vld [vmem:[%s1 + $0x38] sm:$0xf]
        %v809 = vld [vmem:[%s1 + $0x3c] sm:$0xf]
        %v810 = vld [vmem:[%s1 + $0x40] sm:$0xf]
        %v811 = vld [vmem:[%s1 + $0x44] sm:$0xf]
        %v812 = vld [vmem:[%s1 + $0x48] sm:$0xf]
        %v813 = vld [vmem:[%s1 + $0x4c] sm:$0xf]
        %v814 = vld [vmem:[%s1 + $0x50] sm:$0xf]
        %v815 = vld [vmem:[%s1 + $0x54] sm:$0xf]
        %v816 = vld [vmem:[%s1 + $0x58] sm:$0xf]
        %v817 = vld [vmem:[%s1 + $0x5c] sm:$0xf]
        %v818 = vpack.c.bf16 %v792, %v792
        %v819 = vpack.c.bf16 %v793, %v793
        %v820 = vld [vmem:[%s2] sm:$0x1]
        %v822 = vlaneseq
        %v823 = vshrl.u32 %v822, 7
        %v824 = vsub.s32 0, %v823
        %v825 = vrot.slane %v820, %v824
        %v851 = vunpack.c.l.b16 %v794
        %v852 = vunpack.c.l.b16 %v795
        %v853 = vunpack.c.l.b16 %v796
        %v854 = vunpack.c.l.b16 %v797
        %v855 = vunpack.c.l.b16 %v798
        %v856 = vunpack.c.l.b16 %v799
        %v857 = vunpack.c.l.b16 %v800
        %v858 = vunpack.c.l.b16 %v801
        %v859 = vunpack.c.l.b16 %v802
        %v860 = vunpack.c.l.b16 %v803
        %v861 = vunpack.c.l.b16 %v804
        %v862 = vunpack.c.l.b16 %v805
        %v863 = vunpack.c.l.b16 %v806
        %v864 = vunpack.c.l.b16 %v807
        %v865 = vunpack.c.l.b16 %v808
        %v866 = vunpack.c.l.b16 %v809
        %v867 = vunpack.c.l.b16 %v810
        %v868 = vunpack.c.l.b16 %v811
        %v869 = vunpack.c.l.b16 %v812
        %v870 = vunpack.c.l.b16 %v813
        %v871 = vunpack.c.l.b16 %v814
        %v872 = vunpack.c.l.b16 %v815
        %v873 = vunpack.c.l.b16 %v816
        %v874 = vunpack.c.l.b16 %v817
        %v875 = vpack.c.b16 %v852, %v851
        %v876 = vpack.c.b16 %v854, %v853
        %v877 = vpack.c.b16 %v856, %v855
        %v878 = vpack.c.b16 %v858, %v857
        %v879 = vpack.c.b16 %v860, %v859
        %v880 = vpack.c.b16 %v862, %v861
        %v881 = vpack.c.b16 %v864, %v863
        %v882 = vpack.c.b16 %v866, %v865
        %v883 = vpack.c.b16 %v868, %v867
        %v884 = vpack.c.b16 %v870, %v869
        %v885 = vpack.c.b16 %v872, %v871
        %v886 = vpack.c.b16 %v874, %v873
        %vm899 = vcmask 523264
        %v901 = vsel %vm899, %v819, 0
        %903 = vmatprep.subr.bf16.mxu0 0
        %904 = vmatpush1.bf16.msra.mxu0 %v875
        %905 = vmatprep.subr.bf16.mxu0 0
        %906 = vmatpush1.bf16.msra.mxu0 %v876
        %907 = vmatprep.subr.bf16.mxu0 0
        %908 = vmatpush1.bf16.msra.mxu0 %v877
        %909 = vmatprep.subr.bf16.mxu0 0
        %910 = vmatpush1.bf16.msra.mxu0 %v878
        %911 = vmatprep.subr.bf16.mxu0 0
        %912 = vmatpush1.bf16.msra.mxu0 %v879
        %913 = vmatprep.subr.bf16.mxu0 0
        %914 = vmatpush1.bf16.msra.mxu0 %v880
        %915 = vmatprep.subr.bf16.mxu0 0
        %916 = vmatpush1.bf16.msra.mxu0 %v881
        %917 = vmatprep.subr.bf16.mxu0 0
        %918 = vmatpush1.bf16.msra.mxu0 %v882
        %919 = vmatprep.subr.bf16.mxu0 0
        %920 = vmatpush1.bf16.msra.mxu0 %v883
        %921 = vmatprep.subr.bf16.mxu0 0
        %922 = vmatpush1.bf16.msra.mxu0 %v884
        %923 = vmatprep.subr.bf16.mxu0 0
        %924 = vmatpush1.bf16.msra.mxu0 %v885
        %925 = vmatprep.subr.bf16.mxu0 0
        %926 = vmatpush1.bf16.msra.mxu0 %v886
        %927 = vmatprep.subr.bf16.mxu0 0
        %928 = vmatpush1.bf16.msra.mxu0 0
        %929 = vmatprep.subr.bf16.mxu0 0
        %930 = vmatpush1.bf16.msra.mxu0 0
        %931 = vmatprep.subr.bf16.mxu0 0
        %932 = vmatpush1.bf16.msra.mxu0 0
        %933 = vmatprep.subr.bf16.mxu0 0
        %934 = vmatpush1.bf16.msra.mxu0 0
        %935 = vmatprep.mubr.bf16.mxu0 %v901
        %936 = vmatmul.mubr.bf16.gmra.mrb[0].mxu0 %v818
        %v937 = vpop.f32.mrb[0].mxu0
        %v938 = vadd.f32 %v825, %v937
        %v939 = vpop.f32.mrb[0].mxu0
        %v940 = vpop.f32.mrb[0].mxu0
        %v941 = vpop.f32.mrb[0].mxu0
        %942 = vdwg.mxu0
        %v943 = vld [vmem:[%s3] sm:$0xff]
        %v944 = vadd.f32 %v938, %v943
        %vm945 = vcmask 261120
        %946 = vst.msk [vmem:[#allocation2] sm:$0xff] %vm945, %v944
      $region104: #{paligemma_forward.2} parent=99 // pred_fallthru
        _
      %v947 = vld [vmem:[#allocation2] sm:$0xff]
      %v948 = vld [vmem:[%s745] sm:$0x1]
      %v949 = vld [vmem:[%s748] sm:$0x1]
      %vm950 = vcmask 261120
      %v951 = vsel %vm950, %v947, 0.0
      %952 = vadd.xlane.f32.xlu0 %v951
      %v953 = vpop.xlane.xlu0 %952
      %v954 = vrcp.pop 32.0
      %v955 = vmul.f32 %v953, %v954
      %v956 = vsub.f32 %v947, %v955
      %v957 = vmul.f32 %v956, %v956
      %v958 = vsel %vm950, %v957, 0.0
      %959 = vadd.xlane.f32.xlu0 %v958
      %v960 = vpop.xlane.xlu0 %959
      %v961 = vmul.f32 %v960, %v954
      %v962 = vadd.f32 %v961, 1e-06
      %v963 = vrsqrt.pop %v962
      %v964 = vmul.f32 %v956, %v963
      %v966 = vlaneseq
      %v967 = vshrl.u32 %v966, 7
      %v968 = vsub.s32 0, %v967
      %v969 = vrot.slane %v948, %v968
      %v971 = vmul.f32 %v964, %v969
      %v973 = vlaneseq
      %v974 = vshrl.u32 %v973, 7
      %v975 = vsub.s32 0, %v974
      %v976 = vrot.slane %v949, %v975
      %v978 = vadd.f32 %v971, %v976
      %v979 = vld [vmem:[%s753] sm:$0xf]
      %v980 = vld [vmem:[%s753 + $0x4] sm:$0xf]
      %v981 = vld [vmem:[%s753 + $0x8] sm:$0xf]
      %v982 = vld [vmem:[%s753 + $0xc] sm:$0xf]
      %v983 = vpack.c.bf16 %v978, %v978
      %v984 = vld [vmem:[%s756] sm:$0x1]
      %v986 = vlaneseq
      %v987 = vshrl.u32 %v986, 7
      %v988 = vsub.s32 0, %v987
      %v989 = vrot.slane %v984, %v988
      %v995 = vunpack.c.l.b16 %v979
      %v996 = vunpack.c.l.b16 %v980
      %v997 = vunpack.c.l.b16 %v981
      %v998 = vunpack.c.l.b16 %v982
      %v999 = vpack.c.b16 %v996, %v995
      %v1000 = vpack.c.b16 %v998, %v997
      %v1004 = vsel %vm950, %v983, 0
      %1006 = vmatprep.subr.bf16.mxu0 0
      %1007 = vmatpush1.bf16.msra.mxu0 %v999
      %1008 = vmatprep.subr.bf16.mxu0 0
      %1009 = vmatpush1.bf16.msra.mxu0 %v1000
      %1010 = vmatprep.subr.bf16.mxu0 0
      %1011 = vmatpush1.bf16.msra.mxu0 0
      %1012 = vmatprep.subr.bf16.mxu0 0
      %1013 = vmatpush1.bf16.msra.mxu0 0
      %1014 = vmatprep.subr.bf16.mxu0 0
      %1015 = vmatpush1.bf16.msra.mxu0 0
      %1016 = vmatprep.subr.bf16.mxu0 0
      %1017 = vmatpush1.bf16.msra.mxu0 0
      %1018 = vmatprep.subr.bf16.mxu0 0
      %1019 = vmatpush1.bf16.msra.mxu0 0
      %1020 = vmatprep.subr.bf16.mxu0 0
      %1021 = vmatpush1.bf16.msra.mxu0 0
      %1022 = vmatprep.subr.bf16.mxu0 0
      %1023 = vmatpush1.bf16.msra.mxu0 0
      %1024 = vmatprep.subr.bf16.mxu0 0
      %1025 = vmatpush1.bf16.msra.mxu0 0
      %1026 = vmatprep.subr.bf16.mxu0 0
      %1027 = vmatpush1.bf16.msra.mxu0 0
      %1028 = vmatprep.subr.bf16.mxu0 0
      %1029 = vmatpush1.bf16.msra.mxu0 0
      %1030 = vmatprep.subr.bf16.mxu0 0
      %1031 = vmatpush1.bf16.msra.mxu0 0
      %1032 = vmatprep.subr.bf16.mxu0 0
      %1033 = vmatpush1.bf16.msra.mxu0 0
      %1034 = vmatprep.subr.bf16.mxu0 0
      %1035 = vmatpush1.bf16.msra.mxu0 0
      %1036 = vmatprep.subr.bf16.mxu0 0
      %1037 = vmatpush1.bf16.msra.mxu0 0
      %1038 = vmatprep.mubr.bf16.mxu0 0
      %1039 = vmatmul.mubr.bf16.gmra.mrb[0].mxu0 %v1004
      %v1040 = vpop.f32.mrb[0].mxu0
      %v1041 = vadd.f32 %v989, %v1040
      %v1042 = vpop.f32.mrb[0].mxu0
      %v1043 = vpop.f32.mrb[0].mxu0
      %v1044 = vpop.f32.mrb[0].mxu0
      %1045 = vdwg.mxu0
      %v1046 = vld [vmem:[%s761] sm:$0xf]
      %v1047 = vld [vmem:[%s761 + $0x4] sm:$0xf]
      %v1048 = vld [vmem:[%s761 + $0x8] sm:$0xf]
      %v1049 = vld [vmem:[%s761 + $0xc] sm:$0xf]
      %v1050 = vpack.c.bf16 %v1041, %v1041
      %1052 = vrot.lane.b32.xlu0 %v1050, 96
      %v1053 = vpop.permute.xlu0 %1052
      %vm1054 = vcmask 130048
      %v1056 = vsel %vm1054, %v1050, 0
      %v1059 = vsel %vm1054, %v1053, 0
      %1061 = vmatprep.subr.bf16.mxu0 0
      %1062 = vmatpush1.bf16.xpose.msra.mxu0 %v1059
      %1063 = vmatprep.subr.bf16.mxu0 0
      %1064 = vmatpush1.bf16.xpose.msra.mxu0 0
      %1065 = vmatprep.subr.bf16.mxu0 0
      %1066 = vmatpush1.bf16.xpose.msra.mxu0 0
      %1067 = vmatprep.subr.bf16.mxu0 0
      %1068 = vmatpush1.bf16.xpose.msra.mxu0 0
      %1069 = vmatprep.subr.bf16.mxu0 0
      %1070 = vmatpush1.bf16.xpose.msra.mxu0 0
      %1071 = vmatprep.subr.bf16.mxu0 0
      %1072 = vmatpush1.bf16.xpose.msra.mxu0 0
      %1073 = vmatprep.subr.bf16.mxu0 0
      %1074 = vmatpush1.bf16.xpose.msra.mxu0 0
      %1075 = vmatprep.subr.bf16.mxu0 0
      %1076 = vmatpush1.bf16.xpose.msra.mxu0 0
      %1077 = vmatprep.subr.bf16.mxu0 0
      %1078 = vmatpush1.bf16.xpose.msra.mxu0 0
      %1079 = vmatprep.subr.bf16.mxu0 0
      %1080 = vmatpush1.bf16.xpose.msra.mxu0 0
      %1081 = vmatprep.subr.bf16.mxu0 0
      %1082 = vmatpush1.bf16.xpose.msra.mxu0 0
      %1083 = vmatprep.subr.bf16.mxu0 0
      %1084 = vmatpush1.bf16.xpose.msra.mxu0 0
      %1085 = vmatprep.subr.bf16.mxu0 0
      %1086 = vmatpush1.bf16.xpose.msra.mxu0 0
      %1087 = vmatprep.subr.bf16.mxu0 0
      %1088 = vmatpush1.bf16.xpose.msra.mxu0 0
      %1089 = vmatprep.subr.bf16.mxu0 0
      %1090 = vmatpush1.bf16.xpose.msra.mxu0 0
      %1091 = vmatprep.subr.bf16.mxu0 0
      %1092 = vmatpush1.bf16.xpose.msra.mxu0 0
      %1093 = vmatprep.mubr.bf16.mxu0 0
      %1094 = vmatmul.mubr.bf16.gmra.mrb[0].mxu0 %v1056
      %v1095 = vpop.f32.mrb[0].mxu0
      %v1096 = vadd.f32 0.0, %v1095
      %v1097 = vpop.f32.mrb[0].mxu0
      %v1098 = vpop.f32.mrb[0].mxu0
      %v1099 = vpop.f32.mrb[0].mxu0
      %1100 = vdwg.mxu0
      %v1101 = vmul.f32 %v1096, 0.25
      %vm1102 = vcmask 27648
      %v1103 = vsel %vm1102, %v1101, -inf
      %1104 = vmax.xlane.f32.xlu0 %v1103
      %v1105 = vpop.xlane.xlu0 %1104
      %v1106 = vsub.f32 %v1101, %v1105
      %v1107 = vmul.f32 %v1106, 1.442695
      %v1108 = vpow.pop %v1107
      %v1109 = vsel %vm1102, %v1108, 0.0
      %1110 = vadd.xlane.f32.xlu0 %v1109
      %v1111 = vpop.xlane.xlu0 %1110
      %v1112 = vrcp.pop %v1111
      %v1113 = vmul.f32 %v1108, %v1112
      %v1114 = vpack.c.bf16 %v1113, %v1113
      %1115 = vrot.lane.b32.xlu0 %v1050, 64
      %v1116 = vpop.permute.xlu0 %1115
      %vm1117 = vcmask 31744
      %v1119 = vsel %vm1117, %v1114, 0
      %vm1121 = vcmask 1041408
      %v1123 = vsel %vm1121, %v1116, 0
      %1125 = vmatprep.subr.bf16.mxu0 0
      %1126 = vmatpush1.bf16.msra.mxu0 %v1123
      %1127 = vmatprep.subr.bf16.mxu0 0
      %1128 = vmatpush1.bf16.msra.mxu0 0
      %1129 = vmatprep.subr.bf16.mxu0 0
      %1130 = vmatpush1.bf16.msra.mxu0 0
      %1131 = vmatprep.subr.bf16.mxu0 0
      %1132 = vmatpush1.bf16.msra.mxu0 0
      %1133 = vmatprep.subr.bf16.mxu0 0
      %1134 = vmatpush1.bf16.msra.mxu0 0
      %1135 = vmatprep.subr.bf16.mxu0 0
      %1136 = vmatpush1.bf16.msra.mxu0 0
      %1137 = vmatprep.subr.bf16.mxu0 0
      %1138 = vmatpush1.bf16.msra.mxu0 0
      %1139 = vmatprep.subr.bf16.mxu0 0
      %1140 = vmatpush1.bf16.msra.mxu0 0
      %1141 = vmatprep.subr.bf16.mxu0 0
      %1142 = vmatpush1.bf16.msra.mxu0 0
      %1143 = vmatprep.subr.bf16.mxu0 0
      %1144 = vmatpush1.bf16.msra.mxu0 0
      %1145 = vmatprep.subr.bf16.mxu0 0
      %1146 = vmatpush1.bf16.msra.mxu0 0
      %1147 = vmatprep.subr.bf16.mxu0 0
      %1148 = vmatpush1.bf16.msra.mxu0 0
      %1149 = vmatprep.subr.bf16.mxu0 0
      %1150 = vmatpush1.bf16.msra.mxu0 0
      %1151 = vmatprep.subr.bf16.mxu0 0
      %1152 = vmatpush1.bf16.msra.mxu0 0
      %1153 = vmatprep.subr.bf16.mxu0 0
      %1154 = vmatpush1.bf16.msra.mxu0 0
      %1155 = vmatprep.subr.bf16.mxu0 0
      %1156 = vmatpush1.bf16.msra.mxu0 0
      %1157 = vmatprep.mubr.bf16.mxu0 0
      %1158 = vmatmul.mubr.bf16.gmra.mrb[0].mxu0 %v1119
      %v1159 = vpop.f32.mrb[0].mxu0
      %v1160 = vadd.f32 0.0, %v1159
      %v1161 = vpop.f32.mrb[0].mxu0
      %v1162 = vpop.f32.mrb[0].mxu0
      %v1163 = vpop.f32.mrb[0].mxu0
      %1164 = vdwg.mxu0
      %v1165 = vpack.c.bf16 %v1160, %v1160
      %1166 = vrot.lane.b32.xlu0 %v1050, 112
      %v1167 = vpop.permute.xlu0 %1166
      %1168 = vrot.lane.b32.xlu0 %v1050, 80
      %v1169 = vpop.permute.xlu0 %1168
      %v1171 = vsel %vm1054, %v1167, 0
      %v1174 = vsel %vm1054, %v1169, 0
      %1176 = vmatprep.subr.bf16.mxu0 0
      %1177 = vmatpush1.bf16.xpose.msra.mxu0 %v1174
      %1178 = vmatprep.subr.bf16.mxu0 0
      %1179 = vmatpush1.bf16.xpose.msra.mxu0 0
      %1180 = vmatprep.subr.bf16.mxu0 0
      %1181 = vmatpush1.bf16.xpose.msra.mxu0 0
      %1182 = vmatprep.subr.bf16.mxu0 0
      %1183 = vmatpush1.bf16.xpose.msra.mxu0 0
      %1184 = vmatprep.subr.bf16.mxu0 0
      %1185 = vmatpush1.bf16.xpose.msra.mxu0 0
      %1186 = vmatprep.subr.bf16.mxu0 0
      %1187 = vmatpush1.bf16.xpose.msra.mxu0 0
      %1188 = vmatprep.subr.bf16.mxu0 0
      %1189 = vmatpush1.bf16.xpose.msra.mxu0 0
      %1190 = vmatprep.subr.bf16.mxu0 0
      %1191 = vmatpush1.bf16.xpose.msra.mxu0 0
      %1192 = vmatprep.subr.bf16.mxu0 0
      %1193 = vmatpush1.bf16.xpose.msra.mxu0 0
      %1194 = vmatprep.subr.bf16.mxu0 0
      %1195 = vmatpush1.bf16.xpose.msra.mxu0 0
      %1196 = vmatprep.subr.bf16.mxu0 0
      %1197 = vmatpush1.bf16.xpose.msra.mxu0 0
      %1198 = vmatprep.subr.bf16.mxu0 0
      %1199 = vmatpush1.bf16.xpose.msra.mxu0 0
      %1200 = vmatprep.subr.bf16.mxu0 0
      %1201 = vmatpush1.bf16.xpose.msra.mxu0 0
      %1202 = vmatprep.subr.bf16.mxu0 0
      %1203 = vmatpush1.bf16.xpose.msra.mxu0 0
      %1204 = vmatprep.subr.bf16.mxu0 0
      %1205 = vmatpush1.bf16.xpose.msra.mxu0 0
      %1206 = vmatprep.subr.bf16.mxu0 0
      %1207 = vmatpush1.bf16.xpose.msra.mxu0 0
      %1208 = vmatprep.mubr.bf16.mxu0 0
      %1209 = vmatmul.mubr.bf16.gmra.mrb[0].mxu0 %v1171
      %v1210 = vpop.f32.mrb[0].mxu0
      %v1211 = vadd.f32 0.0, %v1210
      %v1212 = vpop.f32.mrb[0].mxu0
      %v1213 = vpop.f32.mrb[0].mxu0
      %v1214 = vpop.f32.mrb[0].mxu0
      %1215 = vdwg.mxu0
      %v1216 = vmul.f32 %v1211, 0.25
      %v1217 = vsel %vm1102, %v1216, -inf
      %1218 = vmax.xlane.f32.xlu0 %v1217
      %v1219 = vpop.xlane.xlu0 %1218
      %v1220 = vsub.f32 %v1216, %v1219
      %v1221 = vmul.f32 %v1220, 1.442695
      %v1222 = vpow.pop %v1221
      %v1223 = vsel %vm1102, %v1222, 0.0
      %1224 = vadd.xlane.f32.xlu0 %v1223
      %v1225 = vpop.xlane.xlu0 %1224
      %v1226 = vrcp.pop %v1225
      %v1227 = vmul.f32 %v1222, %v1226
      %v1228 = vpack.c.bf16 %v1227, %v1227
      %1229 = vrot.lane.b32.xlu0 %v1050, 48
      %v1230 = vpop.permute.xlu0 %1229
      %v1232 = vsel %vm1117, %v1228, 0
      %v1235 = vsel %vm1121, %v1230, 0
      %1237 = vmatprep.subr.bf16.mxu0 0
      %1238 = vmatpush1.bf16.msra.mxu0 %v1235
      %1239 = vmatprep.subr.bf16.mxu0 0
      %1240 = vmatpush1.bf16.msra.mxu0 0
      %1241 = vmatprep.subr.bf16.mxu0 0
      %1242 = vmatpush1.bf16.msra.mxu0 0
      %1243 = vmatprep.subr.bf16.mxu0 0
      %1244 = vmatpush1.bf16.msra.mxu0 0
      %1245 = vmatprep.subr.bf16.mxu0 0
      %1246 = vmatpush1.bf16.msra.mxu0 0
      %1247 = vmatprep.subr.bf16.mxu0 0
      %1248 = vmatpush1.bf16.msra.mxu0 0
      %1249 = vmatprep.subr.bf16.mxu0 0
      %1250 = vmatpush1.bf16.msra.mxu0 0
      %1251 = vmatprep.subr.bf16.mxu0 0
      %1252 = vmatpush1.bf16.msra.mxu0 0
      %1253 = vmatprep.subr.bf16.mxu0 0
      %1254 = vmatpush1.bf16.msra.mxu0 0
      %1255 = vmatprep.subr.bf16.mxu0 0
      %1256 = vmatpush1.bf16.msra.mxu0 0
      %1257 = vmatprep.subr.bf16.mxu0 0
      %1258 = vmatpush1.bf16.msra.mxu0 0
      %1259 = vmatprep.subr.bf16.mxu0 0
      %1260 = vmatpush1.bf16.msra.mxu0 0
      %1261 = vmatprep.subr.bf16.mxu0 0
      %1262 = vmatpush1.bf16.msra.mxu0 0
      %1263 = vmatprep.subr.bf16.mxu0 0
      %1264 = vmatpush1.bf16.msra.mxu0 0
      %1265 = vmatprep.subr.bf16.mxu0 0
      %1266 = vmatpush1.bf16.msra.mxu0 0
      %1267 = vmatprep.subr.bf16.mxu0 0
      %1268 = vmatpush1.bf16.msra.mxu0 0
      %1269 = vmatprep.mubr.bf16.mxu0 0
      %1270 = vmatmul.mubr.bf16.gmra.mrb[0].mxu0 %v1232
      %v1271 = vpop.f32.mrb[0].mxu0
      %v1272 = vadd.f32 0.0, %v1271
      %v1273 = vpop.f32.mrb[0].mxu0
      %v1274 = vpop.f32.mrb[0].mxu0
      %v1275 = vpop.f32.mrb[0].mxu0
      %1276 = vdwg.mxu0
      %v1277 = vpack.c.bf16 %v1272, %v1272
      %v1280 = vunpack.c.l.b16 %v1048
      %v1281 = vunpack.c.l.b16 %v1049
      %v1282 = vpack.c.b16 %v1281, %v1280
      %v1285 = vsel %vm1054, %v1277, 0
      %1287 = vmatprep.subr.bf16.mxu0 0
      %1288 = vmatpush1.bf16.msra.mxu0 %v1282
      %1289 = vmatprep.subr.bf16.mxu0 0
      %1290 = vmatpush1.bf16.msra.mxu0 0
      %1291 = vmatprep.subr.bf16.mxu0 0
      %1292 = vmatpush1.bf16.msra.mxu0 0
      %1293 = vmatprep.subr.bf16.mxu0 0
      %1294 = vmatpush1.bf16.msra.mxu0 0
      %1295 = vmatprep.subr.bf16.mxu0 0
      %1296 = vmatpush1.bf16.msra.mxu0 0
      %1297 = vmatprep.subr.bf16.mxu0 0
      %1298 = vmatpush1.bf16.msra.mxu0 0
      %1299 = vmatprep.subr.bf16.mxu0 0
      %1300 = vmatpush1.bf16.msra.mxu0 0
      %1301 = vmatprep.subr.bf16.mxu0 0
      %1302 = vmatpush1.bf16.msra.mxu0 0
      %1303 = vmatprep.subr.bf16.mxu0 0
      %1304 = vmatpush1.bf16.msra.mxu0 0
      %1305 = vmatprep.subr.bf16.mxu0 0
      %1306 = vmatpush1.bf16.msra.mxu0 0
      %1307 = vmatprep.subr.bf16.mxu0 0
      %1308 = vmatpush1.bf16.msra.mxu0 0
      %1309 = vmatprep.subr.bf16.mxu0 0
      %1310 = vmatpush1.bf16.msra.mxu0 0
      %1311 = vmatprep.subr.bf16.mxu0 0
      %1312 = vmatpush1.bf16.msra.mxu0 0
      %1313 = vmatprep.subr.bf16.mxu0 0
      %1314 = vmatpush1.bf16.msra.mxu0 0
      %1315 = vmatprep.subr.bf16.mxu0 0
      %1316 = vmatpush1.bf16.msra.mxu0 0
      %1317 = vmatprep.subr.bf16.mxu0 0
      %1318 = vmatpush1.bf16.msra.mxu0 0
      %1319 = vmatprep.mubr.bf16.mxu0 0
      %1320 = vmatmul.mubr.bf16.gmra.mrb[0].mxu0 %v1285
      %v1321 = vpop.f32.mrb[0].mxu0
      %v1322 = vadd.f32 0.0, %v1321
      %v1323 = vpop.f32.mrb[0].mxu0
      %v1324 = vpop.f32.mrb[0].mxu0
      %v1325 = vpop.f32.mrb[0].mxu0
      %1326 = vdwg.mxu0
      %v1329 = vunpack.c.l.b16 %v1046
      %v1330 = vunpack.c.l.b16 %v1047
      %v1331 = vpack.c.b16 %v1330, %v1329
      %v1334 = vsel %vm1054, %v1165, 0
      %1336 = vmatprep.subr.bf16.mxu0 0
      %1337 = vmatpush1.bf16.msra.mxu0 %v1331
      %1338 = vmatprep.subr.bf16.mxu0 0
      %1339 = vmatpush1.bf16.msra.mxu0 0
      %1340 = vmatprep.subr.bf16.mxu0 0
      %1341 = vmatpush1.bf16.msra.mxu0 0
      %1342 = vmatprep.subr.bf16.mxu0 0
      %1343 = vmatpush1.bf16.msra.mxu0 0
      %1344 = vmatprep.subr.bf16.mxu0 0
      %1345 = vmatpush1.bf16.msra.mxu0 0
      %1346 = vmatprep.subr.bf16.mxu0 0
      %1347 = vmatpush1.bf16.msra.mxu0 0
      %1348 = vmatprep.subr.bf16.mxu0 0
      %1349 = vmatpush1.bf16.msra.mxu0 0
      %1350 = vmatprep.subr.bf16.mxu0 0
      %1351 = vmatpush1.bf16.msra.mxu0 0
      %1352 = vmatprep.subr.bf16.mxu0 0
      %1353 = vmatpush1.bf16.msra.mxu0 0
      %1354 = vmatprep.subr.bf16.mxu0 0
      %1355 = vmatpush1.bf16.msra.mxu0 0
      %1356 = vmatprep.subr.bf16.mxu0 0
      %1357 = vmatpush1.bf16.msra.mxu0 0
      %1358 = vmatprep.subr.bf16.mxu0 0
      %1359 = vmatpush1.bf16.msra.mxu0 0
      %1360 = vmatprep.subr.bf16.mxu0 0
      %1361 = vmatpush1.bf16.msra.mxu0 0
      %1362 = vmatprep.subr.bf16.mxu0 0
      %1363 = vmatpush1.bf16.msra.mxu0 0
      %1364 = vmatprep.subr.bf16.mxu0 0
      %1365 = vmatpush1.bf16.msra.mxu0 0
      %1366 = vmatprep.subr.bf16.mxu0 0
      %1367 = vmatpush1.bf16.msra.mxu0 0
      %1368 = vmatprep.mubr.bf16.mxu0 0
      %1369 = vmatmul.mubr.bf16.gmra.mrb[0].mxu0 %v1334
      %v1370 = vpop.f32.mrb[0].mxu0
      %v1371 = vadd.f32 %v1322, %v1370
      %v1372 = vpop.f32.mrb[0].mxu0
      %v1373 = vpop.f32.mrb[0].mxu0
      %v1374 = vpop.f32.mrb[0].mxu0
      %1375 = vdwg.mxu0
      %v1376 = vrot.slane %v1050, 2
      %1377 = vrot.lane.b32.xlu0 %v1376, 96
      %v1378 = vpop.permute.xlu0 %1377
      %v1380 = vsel %vm1054, %v1376, 0
      %v1383 = vsel %vm1054, %v1378, 0
      %1385 = vmatprep.subr.bf16.mxu0 0
      %1386 = vmatpush1.bf16.xpose.msra.mxu0 %v1383
      %1387 = vmatprep.subr.bf16.mxu0 0
      %1388 = vmatpush1.bf16.xpose.msra.mxu0 0
      %1389 = vmatprep.subr.bf16.mxu0 0
      %1390 = vmatpush1.bf16.xpose.msra.mxu0 0
      %1391 = vmatprep.subr.bf16.mxu0 0
      %1392 = vmatpush1.bf16.xpose.msra.mxu0 0
      %1393 = vmatprep.subr.bf16.mxu0 0
      %1394 = vmatpush1.bf16.xpose.msra.mxu0 0
      %1395 = vmatprep.subr.bf16.mxu0 0
      %1396 = vmatpush1.bf16.xpose.msra.mxu0 0
      %1397 = vmatprep.subr.bf16.mxu0 0
      %1398 = vmatpush1.bf16.xpose.msra.mxu0 0
      %1399 = vmatprep.subr.bf16.mxu0 0
      %1400 = vmatpush1.bf16.xpose.msra.mxu0 0
      %1401 = vmatprep.subr.bf16.mxu0 0
      %1402 = vmatpush1.bf16.xpose.msra.mxu0 0
      %1403 = vmatprep.subr.bf16.mxu0 0
      %1404 = vmatpush1.bf16.xpose.msra.mxu0 0
      %1405 = vmatprep.subr.bf16.mxu0 0
      %1406 = vmatpush1.bf16.xpose.msra.mxu0 0
      %1407 = vmatprep.subr.bf16.mxu0 0
      %1408 = vmatpush1.bf16.xpose.msra.mxu0 0
      %1409 = vmatprep.subr.bf16.mxu0 0
      %1410 = vmatpush1.bf16.xpose.msra.mxu0 0
      %1411 = vmatprep.subr.bf16.mxu0 0
      %1412 = vmatpush1.bf16.xpose.msra.mxu0 0
      %1413 = vmatprep.subr.bf16.mxu0 0
      %1414 = vmatpush1.bf16.xpose.msra.mxu0 0
      %1415 = vmatprep.subr.bf16.mxu0 0
      %1416 = vmatpush1.bf16.xpose.msra.mxu0 0
      %1417 = vmatprep.mubr.bf16.mxu0 0
      %1418 = vmatmul.mubr.bf16.gmra.mrb[0].mxu0 %v1380
      %v1419 = vpop.f32.mrb[0].mxu0
      %v1420 = vadd.f32 0.0, %v1419
      %v1421 = vpop.f32.mrb[0].mxu0
      %v1422 = vpop.f32.mrb[0].mxu0
      %v1423 = vpop.f32.mrb[0].mxu0
      %1424 = vdwg.mxu0
      %v1425 = vmul.f32 %v1420, 0.25
      %v1426 = vsel %vm1102, %v1425, -inf
      %1427 = vmax.xlane.f32.xlu0 %v1426
      %v1428 = vpop.xlane.xlu0 %1427
      %v1429 = vsub.f32 %v1425, %v1428
      %v1430 = vmul.f32 %v1429, 1.442695
      %v1431 = vpow.pop %v1430
      %v1432 = vsel %vm1102, %v1431, 0.0
      %1433 = vadd.xlane.f32.xlu0 %v1432
      %v1434 = vpop.xlane.xlu0 %1433
      %v1435 = vrcp.pop %v1434
      %v1436 = vmul.f32 %v1431, %v1435
      %v1437 = vpack.c.bf16 %v1436, %v1436
      %1438 = vrot.lane.b32.xlu0 %v1376, 64
      %v1439 = vpop.permute.xlu0 %1438
      %v1441 = vsel %vm1117, %v1437, 0
      %v1444 = vsel %vm1121, %v1439, 0
      %1446 = vmatprep.subr.bf16.mxu0 0
      %1447 = vmatpush1.bf16.msra.mxu0 %v1444
      %1448 = vmatprep.subr.bf16.mxu0 0
      %1449 = vmatpush1.bf16.msra.mxu0 0
      %1450 = vmatprep.subr.bf16.mxu0 0
      %1451 = vmatpush1.bf16.msra.mxu0 0
      %1452 = vmatprep.subr.bf16.mxu0 0
      %1453 = vmatpush1.bf16.msra.mxu0 0
      %1454 = vmatprep.subr.bf16.mxu0 0
      %1455 = vmatpush1.bf16.msra.mxu0 0
      %1456 = vmatprep.subr.bf16.mxu0 0
      %1457 = vmatpush1.bf16.msra.mxu0 0
      %1458 = vmatprep.subr.bf16.mxu0 0
      %1459 = vmatpush1.bf16.msra.mxu0 0
      %1460 = vmatprep.subr.bf16.mxu0 0
      %1461 = vmatpush1.bf16.msra.mxu0 0
      %1462 = vmatprep.subr.bf16.mxu0 0
      %1463 = vmatpush1.bf16.msra.mxu0 0
      %1464 = vmatprep.subr.bf16.mxu0 0
      %1465 = vmatpush1.bf16.msra.mxu0 0
      %1466 = vmatprep.subr.bf16.mxu0 0
      %1467 = vmatpush1.bf16.msra.mxu0 0
      %1468 = vmatprep.subr.bf16.mxu0 0
      %1469 = vmatpush1.bf16.msra.mxu0 0
      %1470 = vmatprep.subr.bf16.mxu0 0
      %1471 = vmatpush1.bf16.msra.mxu0 0
      %1472 = vmatprep.subr.bf16.mxu0 0
      %1473 = vmatpush1.bf16.msra.mxu0 0
      %1474 = vmatprep.subr.bf16.mxu0 0
      %1475 = vmatpush1.bf16.msra.mxu0 0
      %1476 = vmatprep.subr.bf16.mxu0 0
      %1477 = vmatpush1.bf16.msra.mxu0 0
      %1478 = vmatprep.mubr.bf16.mxu0 0
      %1479 = vmatmul.mubr.bf16.gmra.mrb[0].mxu0 %v1441
      %v1480 = vpop.f32.mrb[0].mxu0
      %v1481 = vadd.f32 0.0, %v1480
      %v1482 = vpop.f32.mrb[0].mxu0
      %v1483 = vpop.f32.mrb[0].mxu0
      %v1484 = vpop.f32.mrb[0].mxu0
      %1485 = vdwg.mxu0
      %v1486 = vpack.c.bf16 %v1481, %v1481
      %1487 = vrot.lane.b32.xlu0 %v1376, 112
      %v1488 = vpop.permute.xlu0 %1487
      %1489 = vrot.lane.b32.xlu0 %v1376, 80
      %v1490 = vpop.permute.xlu0 %1489
      %v1492 = vsel %vm1054, %v1488, 0
      %v1495 = vsel %vm1054, %v1490, 0
      %1497 = vmatprep.subr.bf16.mxu0 0
      %1498 = vmatpush1.bf16.xpose.msra.mxu0 %v1495
      %1499 = vmatprep.subr.bf16.mxu0 0
      %1500 = vmatpush1.bf16.xpose.msra.mxu0 0
      %1501 = vmatprep.subr.bf16.mxu0 0
      %1502 = vmatpush1.bf16.xpose.msra.mxu0 0
      %1503 = vmatprep.subr.bf16.mxu0 0
      %1504 = vmatpush1.bf16.xpose.msra.mxu0 0
      %1505 = vmatprep.subr.bf16.mxu0 0
      %1506 = vmatpush1.bf16.xpose.msra.mxu0 0
      %1507 = vmatprep.subr.bf16.mxu0 0
      %1508 = vmatpush1.bf16.xpose.msra.mxu0 0
      %1509 = vmatprep.subr.bf16.mxu0 0
      %1510 = vmatpush1.bf16.xpose.msra.mxu0 0
      %1511 = vmatprep.subr.bf16.mxu0 0
      %1512 = vmatpush1.bf16.xpose.msra.mxu0 0
      %1513 = vmatprep.subr.bf16.mxu0 0
      %1514 = vmatpush1.bf16.xpose.msra.mxu0 0
      %1515 = vmatprep.subr.bf16.mxu0 0
      %1516 = vmatpush1.bf16.xpose.msra.mxu0 0
      %1517 = vmatprep.subr.bf16.mxu0 0
      %1518 = vmatpush1.bf16.xpose.msra.mxu0 0
      %1519 = vmatprep.subr.bf16.mxu0 0
      %1520 = vmatpush1.bf16.xpose.msra.mxu0 0
      %1521 = vmatprep.subr.bf16.mxu0 0
      %1522 = vmatpush1.bf16.xpose.msra.mxu0 0
      %1523 = vmatprep.subr.bf16.mxu0 0
      %1524 = vmatpush1.bf16.xpose.msra.mxu0 0
      %1525 = vmatprep.subr.bf16.mxu0 0
      %1526 = vmatpush1.bf16.xpose.msra.mxu0 0
      %1527 = vmatprep.subr.bf16.mxu0 0
      %1528 = vmatpush1.bf16.xpose.msra.mxu0 0
      %1529 = vmatprep.mubr.bf16.mxu0 0
      %1530 = vmatmul.mubr.bf16.gmra.mrb[0].mxu0 %v1492
      %v1531 = vpop.f32.mrb[0].mxu0
      %v1532 = vadd.f32 0.0, %v1531
      %v1533 = vpop.f32.mrb[0].mxu0
      %v1534 = vpop.f32.mrb[0].mxu0
      %v1535 = vpop.f32.mrb[0].mxu0
      %1536 = vdwg.mxu0
      %v1537 = vmul.f32 %v1532, 0.25
      %v1538 = vsel %vm1102, %v1537, -inf
      %1539 = vmax.xlane.f32.xlu0 %v1538
      %v1540 = vpop.xlane.xlu0 %1539
      %v1541 = vsub.f32 %v1537, %v1540
      %v1542 = vmul.f32 %v1541, 1.442695
      %v1543 = vpow.pop %v1542
      %v1544 = vsel %vm1102, %v1543, 0.0
      %1545 = vadd.xlane.f32.xlu0 %v1544
      %v1546 = vpop.xlane.xlu0 %1545
      %v1547 = vrcp.pop %v1546
      %v1548 = vmul.f32 %v1543, %v1547
      %v1549 = vpack.c.bf16 %v1548, %v1548
      %1550 = vrot.lane.b32.xlu0 %v1376, 48
      %v1551 = vpop.permute.xlu0 %1550
      %v1553 = vsel %vm1117, %v1549, 0
      %v1556 = vsel %vm1121, %v1551, 0
      %1558 = vmatprep.subr.bf16.mxu0 0
      %1559 = vmatpush1.bf16.msra.mxu0 %v1556
      %1560 = vmatprep.subr.bf16.mxu0 0
      %1561 = vmatpush1.bf16.msra.mxu0 0
      %1562 = vmatprep.subr.bf16.mxu0 0
      %1563 = vmatpush1.bf16.msra.mxu0 0
      %1564 = vmatprep.subr.bf16.mxu0 0
      %1565 = vmatpush1.bf16.msra.mxu0 0
      %1566 = vmatprep.subr.bf16.mxu0 0
      %1567 = vmatpush1.bf16.msra.mxu0 0
      %1568 = vmatprep.subr.bf16.mxu0 0
      %1569 = vmatpush1.bf16.msra.mxu0 0
      %1570 = vmatprep.subr.bf16.mxu0 0
      %1571 = vmatpush1.bf16.msra.mxu0 0
      %1572 = vmatprep.subr.bf16.mxu0 0
      %1573 = vmatpush1.bf16.msra.mxu0 0
      %1574 = vmatprep.subr.bf16.mxu0 0
      %1575 = vmatpush1.bf16.msra.mxu0 0
      %1576 = vmatprep.subr.bf16.mxu0 0
      %1577 = vmatpush1.bf16.msra.mxu0 0
      %1578 = vmatprep.subr.bf16.mxu0 0
      %1579 = vmatpush1.bf16.msra.mxu0 0
      %1580 = vmatprep.subr.bf16.mxu0 0
      %1581 = vmatpush1.bf16.msra.mxu0 0
      %1582 = vmatprep.subr.bf16.mxu0 0
      %1583 = vmatpush1.bf16.msra.mxu0 0
      %1584 = vmatprep.subr.bf16.mxu0 0
      %1585 = vmatpush1.bf16.msra.mxu0 0
      %1586 = vmatprep.subr.bf16.mxu0 0
      %1587 = vmatpush1.bf16.msra.mxu0 0
      %1588 = vmatprep.subr.bf16.mxu0 0
      %1589 = vmatpush1.bf16.msra.mxu0 0
      %1590 = vmatprep.mubr.bf16.mxu0 0
      %1591 = vmatmul.mubr.bf16.gmra.mrb[0].mxu0 %v1553
      %v1592 = vpop.f32.mrb[0].mxu0
      %v1593 = vadd.f32 0.0, %v1592
      %v1594 = vpop.f32.mrb[0].mxu0
      %v1595 = vpop.f32.mrb[0].mxu0
      %v1596 = vpop.f32.mrb[0].mxu0
      %1597 = vdwg.mxu0
      %v1598 = vpack.c.bf16 %v1593, %v1593
      %v1600 = vsel %vm1054, %v1598, 0
      %1602 = vmatprep.subr.bf16.mxu0 0
      %1603 = vmatpush1.bf16.msra.mxu0 %v1282
      %1604 = vmatprep.subr.bf16.mxu0 0
      %1605 = vmatpush1.bf16.msra.mxu0 0
      %1606 = vmatprep.subr.bf16.mxu0 0
      %1607 = vmatpush1.bf16.msra.mxu0 0
      %1608 = vmatprep.subr.bf16.mxu0 0
      %1609 = vmatpush1.bf16.msra.mxu0 0
      %1610 = vmatprep.subr.bf16.mxu0 0
      %1611 = vmatpush1.bf16.msra.mxu0 0
      %1612 = vmatprep.subr.bf16.mxu0 0
      %1613 = vmatpush1.bf16.msra.mxu0 0
      %1614 = vmatprep.subr.bf16.mxu0 0
      %1615 = vmatpush1.bf16.msra.mxu0 0
      %1616 = vmatprep.subr.bf16.mxu0 0
      %1617 = vmatpush1.bf16.msra.mxu0 0
      %1618 = vmatprep.subr.bf16.mxu0 0
      %1619 = vmatpush1.bf16.msra.mxu0 0
      %1620 = vmatprep.subr.bf16.mxu0 0
      %1621 = vmatpush1.bf16.msra.mxu0 0
      %1622 = vmatprep.subr.bf16.mxu0 0
      %1623 = vmatpush1.bf16.msra.mxu0 0
      %1624 = vmatprep.subr.bf16.mxu0 0
      %1625 = vmatpush1.bf16.msra.mxu0 0
      %1626 = vmatprep.subr.bf16.mxu0 0
      %1627 = vmatpush1.bf16.msra.mxu0 0
      %1628 = vmatprep.subr.bf16.mxu0 0
      %1629 = vmatpush1.bf16.msra.mxu0 0
      %1630 = vmatprep.subr.bf16.mxu0 0
      %1631 = vmatpush1.bf16.msra.mxu0 0
      %1632 = vmatprep.subr.bf16.mxu0 0
      %1633 = vmatpush1.bf16.msra.mxu0 0
      %1634 = vmatprep.mubr.bf16.mxu0 0
      %1635 = vmatmul.mubr.bf16.gmra.mrb[0].mxu0 %v1600
      %v1636 = vpop.f32.mrb[0].mxu0
      %v1637 = vadd.f32 0.0, %v1636
      %v1638 = vpop.f32.mrb[0].mxu0
      %v1639 = vpop.f32.mrb[0].mxu0
      %v1640 = vpop.f32.mrb[0].mxu0
      %1641 = vdwg.mxu0
      %v1643 = vsel %vm1054, %v1486, 0
      %1645 = vmatprep.subr.bf16.mxu0 0
      %1646 = vmatpush1.bf16.msra.mxu0 %v1331
      %1647 = vmatprep.subr.bf16.mxu0 0
      %1648 = vmatpush1.bf16.msra.mxu0 0
      %1649 = vmatprep.subr.bf16.mxu0 0
      %1650 = vmatpush1.bf16.msra.mxu0 0
      %1651 = vmatprep.subr.bf16.mxu0 0
      %1652 = vmatpush1.bf16.msra.mxu0 0
      %1653 = vmatprep.subr.bf16.mxu0 0
      %1654 = vmatpush1.bf16.msra.mxu0 0
      %1655 = vmatprep.subr.bf16.mxu0 0
      %1656 = vmatpush1.bf16.msra.mxu0 0
      %1657 = vmatprep.subr.bf16.mxu0 0
      %1658 = vmatpush1.bf16.msra.mxu0 0
      %1659 = vmatprep.subr.bf16.mxu0 0
      %1660 = vmatpush1.bf16.msra.mxu0 0
      %1661 = vmatprep.subr.bf16.mxu0 0
      %1662 = vmatpush1.bf16.msra.mxu0 0
      %1663 = vmatprep.subr.bf16.mxu0 0
      %1664 = vmatpush1.bf16.msra.mxu0 0
      %1665 = vmatprep.subr.bf16.mxu0 0
      %1666 = vmatpush1.bf16.msra.mxu0 0
      %1667 = vmatprep.subr.bf16.mxu0 0
      %1668 = vmatpush1.bf16.msra.mxu0 0
      %1669 = vmatprep.subr.bf16.mxu0 0
      %1670 = vmatpush1.bf16.msra.mxu0 0
      %1671 = vmatprep.subr.bf16.mxu0 0
      %1672 = vmatpush1.bf16.msra.mxu0 0
      %1673 = vmatprep.subr.bf16.mxu0 0
      %1674 = vmatpush1.bf16.msra.mxu0 0
      %1675 = vmatprep.subr.bf16.mxu0 0
      %1676 = vmatpush1.bf16.msra.mxu0 0
      %1677 = vmatprep.mubr.bf16.mxu0 0
      %1678 = vmatmul.mubr.bf16.gmra.mrb[0].mxu0 %v1643
      %v1679 = vpop.f32.mrb[0].mxu0
      %v1680 = vadd.f32 %v1637, %v1679
      %v1681 = vpop.f32.mrb[0].mxu0
      %v1682 = vpop.f32.mrb[0].mxu0
      %v1683 = vpop.f32.mrb[0].mxu0
      %1684 = vdwg.mxu0
      %v1686 = vrot.slane %v1680, 4
      %vm1688 = vcmask 1043456
      %v1689 = vsel %vm1688, %v1371, %v1686
      %v1690 = vadd.f32 %v947, %v1689
      %v1691 = vld [vmem:[%s764] sm:$0x1]
      %v1693 = vlaneseq
      %v1694 = vshrl.u32 %v1693, 7
      %v1695 = vsub.s32 0, %v1694
      %v1696 = vrot.slane %v1691, %v1695
      %v1698 = vadd.f32 %v1690, %v1696
      %v1699 = vld [vmem:[%s767] sm:$0x1]
      %v1700 = vld [vmem:[%s770] sm:$0x1]
      %v1701 = vsel %vm950, %v1698, 0.0
      %1702 = vadd.xlane.f32.xlu0 %v1701
      %v1703 = vpop.xlane.xlu0 %1702
      %v1704 = vmul.f32 %v1703, %v954
      %v1705 = vsub.f32 %v1698, %v1704
      %v1706 = vmul.f32 %v1705, %v1705
      %v1707 = vsel %vm950, %v1706, 0.0
      %1708 = vadd.xlane.f32.xlu0 %v1707
      %v1709 = vpop.xlane.xlu0 %1708
      %v1710 = vmul.f32 %v1709, %v954
      %v1711 = vadd.f32 %v1710, 1e-06
      %v1712 = vrsqrt.pop %v1711
      %v1713 = vmul.f32 %v1705, %v1712
      %v1715 = vlaneseq
      %v1716 = vshrl.u32 %v1715, 7
      %v1717 = vsub.s32 0, %v1716
      %v1718 = vrot.slane %v1699, %v1717
      %v1720 = vmul.f32 %v1713, %v1718
      %v1722 = vlaneseq
      %v1723 = vshrl.u32 %v1722, 7
      %v1724 = vsub.s32 0, %v1723
      %v1725 = vrot.slane %v1700, %v1724
      %v1727 = vadd.f32 %v1720, %v1725
      %v1728 = vld [vmem:[%s775] sm:$0xf]
      %v1729 = vld [vmem:[%s775 + $0x4] sm:$0xf]
      %v1730 = vld [vmem:[%s775 + $0x8] sm:$0xf]
      %v1731 = vld [vmem:[%s775 + $0xc] sm:$0xf]
      %v1732 = vpack.c.bf16 %v1727, %v1727
      %v1733 = vld [vmem:[%s778] sm:$0x1]
      %v1735 = vlaneseq
      %v1736 = vshrl.u32 %v1735, 7
      %v1737 = vsub.s32 0, %v1736
      %v1738 = vrot.slane %v1733, %v1737
      %v1744 = vunpack.c.l.b16 %v1728
      %v1745 = vunpack.c.l.b16 %v1729
      %v1746 = vunpack.c.l.b16 %v1730
      %v1747 = vunpack.c.l.b16 %v1731
      %v1748 = vpack.c.b16 %v1745, %v1744
      %v1749 = vpack.c.b16 %v1747, %v1746
      %v1753 = vsel %vm950, %v1732, 0
      %1755 = vmatprep.subr.bf16.mxu0 0
      %1756 = vmatpush1.bf16.msra.mxu0 %v1748
      %1757 = vmatprep.subr.bf16.mxu0 0
      %1758 = vmatpush1.bf16.msra.mxu0 %v1749
      %1759 = vmatprep.subr.bf16.mxu0 0
      %1760 = vmatpush1.bf16.msra.mxu0 0
      %1761 = vmatprep.subr.bf16.mxu0 0
      %1762 = vmatpush1.bf16.msra.mxu0 0
      %1763 = vmatprep.subr.bf16.mxu0 0
      %1764 = vmatpush1.bf16.msra.mxu0 0
      %1765 = vmatprep.subr.bf16.mxu0 0
      %1766 = vmatpush1.bf16.msra.mxu0 0
      %1767 = vmatprep.subr.bf16.mxu0 0
      %1768 = vmatpush1.bf16.msra.mxu0 0
      %1769 = vmatprep.subr.bf16.mxu0 0
      %1770 = vmatpush1.bf16.msra.mxu0 0
      %1771 = vmatprep.subr.bf16.mxu0 0
      %1772 = vmatpush1.bf16.msra.mxu0 0
      %1773 = vmatprep.subr.bf16.mxu0 0
      %1774 = vmatpush1.bf16.msra.mxu0 0
      %1775 = vmatprep.subr.bf16.mxu0 0
      %1776 = vmatpush1.bf16.msra.mxu0 0
      %1777 = vmatprep.subr.bf16.mxu0 0
      %1778 = vmatpush1.bf16.msra.mxu0 0
      %1779 = vmatprep.subr.bf16.mxu0 0
      %1780 = vmatpush1.bf16.msra.mxu0 0
      %1781 = vmatprep.subr.bf16.mxu0 0
      %1782 = vmatpush1.bf16.msra.mxu0 0
      %1783 = vmatprep.subr.bf16.mxu0 0
      %1784 = vmatpush1.bf16.msra.mxu0 0
      %1785 = vmatprep.subr.bf16.mxu0 0
      %1786 = vmatpush1.bf16.msra.mxu0 0
      %1787 = vmatprep.mubr.bf16.mxu0 0
      %1788 = vmatmul.mubr.bf16.gmra.mrb[0].mxu0 %v1753
      %v1789 = vpop.f32.mrb[0].mxu0
      %v1790 = vadd.f32 %v1738, %v1789
      %v1791 = vpop.f32.mrb[0].mxu0
      %v1792 = vpop.f32.mrb[0].mxu0
      %v1793 = vpop.f32.mrb[0].mxu0
      %1794 = vdwg.mxu0
      %v1795 = vmul.f32 %v1790, %v1790
      %v1796 = vmul.f32 %v1790, %v1795
      %v1797 = vmul.f32 %v1796, 0.044715
      %v1798 = vadd.f32 %v1790, %v1797
      %v1799 = vmul.f32 %v1798, 0.7978846
      %v1800 = vtanh.pop %v1799
      %v1801 = vadd.f32 %v1800, 1.0
      %v1802 = vmul.f32 %v1801, 0.5
      %v1803 = vmul.f32 %v1790, %v1802
      %v1804 = vld [vmem:[%s783] sm:$0xf]
      %v1805 = vld [vmem:[%s783 + $0x4] sm:$0xf]
      %v1806 = vld [vmem:[%s783 + $0x8] sm:$0xf]
      %v1807 = vld [vmem:[%s783 + $0xc] sm:$0xf]
      %v1808 = vld [vmem:[%s783 + $0x10] sm:$0xf]
      %v1809 = vld [vmem:[%s783 + $0x14] sm:$0xf]
      %v1810 = vld [vmem:[%s783 + $0x18] sm:$0xf]
      %v1811 = vld [vmem:[%s783 + $0x1c] sm:$0xf]
      %v1812 = vpack.c.bf16 %v1803, %v1803
      %v1821 = vunpack.c.l.b16 %v1804
      %v1822 = vunpack.c.l.b16 %v1805
      %v1823 = vunpack.c.l.b16 %v1806
      %v1824 = vunpack.c.l.b16 %v1807
      %v1825 = vunpack.c.l.b16 %v1808
      %v1826 = vunpack.c.l.b16 %v1809
      %v1827 = vunpack.c.l.b16 %v1810
      %v1828 = vunpack.c.l.b16 %v1811
      %v1829 = vpack.c.b16 %v1822, %v1821
      %v1830 = vpack.c.b16 %v1824, %v1823
      %v1831 = vpack.c.b16 %v1826, %v1825
      %v1832 = vpack.c.b16 %v1828, %v1827
      %vm1837 = vcmask 523264
      %v1839 = vsel %vm1837, %v1812, 0
      %1841 = vmatprep.subr.bf16.mxu0 0
      %1842 = vmatpush1.bf16.msra.mxu0 %v1829
      %1843 = vmatprep.subr.bf16.mxu0 0
      %1844 = vmatpush1.bf16.msra.mxu0 %v1830
      %1845 = vmatprep.subr.bf16.mxu0 0
      %1846 = vmatpush1.bf16.msra.mxu0 %v1831
      %1847 = vmatprep.subr.bf16.mxu0 0
      %1848 = vmatpush1.bf16.msra.mxu0 %v1832
      %1849 = vmatprep.subr.bf16.mxu0 0
      %1850 = vmatpush1.bf16.msra.mxu0 0
      %1851 = vmatprep.subr.bf16.mxu0 0
      %1852 = vmatpush1.bf16.msra.mxu0 0
      %1853 = vmatprep.subr.bf16.mxu0 0
      %1854 = vmatpush1.bf16.msra.mxu0 0
      %1855 = vmatprep.subr.bf16.mxu0 0
      %1856 = vmatpush1.bf16.msra.mxu0 0
      %1857 = vmatprep.subr.bf16.mxu0 0
      %1858 = vmatpush1.bf16.msra.mxu0 0
      %1859 = vmatprep.subr.bf16.mxu0 0
      %1860 = vmatpush1.bf16.msra.mxu0 0
      %1861 = vmatprep.subr.bf16.mxu0 0
      %1862 = vmatpush1.bf16.msra.mxu0 0
      %1863 = vmatprep.subr.bf16.mxu0 0
      %1864 = vmatpush1.bf16.msra.mxu0 0
      %1865 = vmatprep.subr.bf16.mxu0 0
      %1866 = vmatpush1.bf16.msra.mxu0 0
      %1867 = vmatprep.subr.bf16.mxu0 0
      %1868 = vmatpush1.bf16.msra.mxu0 0
      %1869 = vmatprep.subr.bf16.mxu0 0
      %1870 = vmatpush1.bf16.msra.mxu0 0
      %1871 = vmatprep.subr.bf16.mxu0 0
      %1872 = vmatpush1.bf16.msra.mxu0 0
      %1873 = vmatprep.mubr.bf16.mxu0 0
      %1874 = vmatmul.mubr.bf16.gmra.mrb[0].mxu0 %v1839
      %v1875 = vpop.f32.mrb[0].mxu0
      %v1876 = vadd.f32 0.0, %v1875
      %v1877 = vpop.f32.mrb[0].mxu0
      %v1878 = vpop.f32.mrb[0].mxu0
      %v1879 = vpop.f32.mrb[0].mxu0
      %1880 = vdwg.mxu0
      %v1881 = vadd.f32 %v1698, %v1876
      %v1882 = vld [vmem:[%s786] sm:$0x1]
      %v1884 = vlaneseq
      %v1885 = vshrl.u32 %v1884, 7
      %v1886 = vsub.s32 0, %v1885
      %v1887 = vrot.slane %v1882, %v1886
      %v1889 = vadd.f32 %v1881, %v1887
      %1890 = vst.msk [vmem:[#allocation2] sm:$0xff] %vm950, %v1889
      %p1891 = scmp.eq.s32.totalorder %s31, 1
      // Predicated region
      $region105: #{paligemma_forward.2} parent=99 // pred_check
        %p1892 = pneg %p1891
      $region106: #{paligemma_forward.2} parent=99 // pred_check_branch
        %1894 = sbr.rel (%p1892) target = $region108
      $region107: #{paligemma_forward.2} parent=99 // pred_region
        %v1895 = vld [vmem:[%s16] sm:$0x1]
        %v1896 = vld [vmem:[%s17] sm:$0x1]
        %v1897 = vsel %vm950, %v1889, 0.0
        %1898 = vadd.xlane.f32.xlu0 %v1897
        %v1899 = vpop.xlane.xlu0 %1898
        %v1900 = vmul.f32 %v1899, %v954
        %v1901 = vsub.f32 %v1889, %v1900
        %v1902 = vmul.f32 %v1901, %v1901
        %v1903 = vsel %vm950, %v1902, 0.0
        %1904 = vadd.xlane.f32.xlu0 %v1903
        %v1905 = vpop.xlane.xlu0 %1904
        %v1906 = vmul.f32 %v1905, %v954
        %v1907 = vadd.f32 %v1906, 1e-06
        %v1908 = vrsqrt.pop %v1907
        %v1909 = vmul.f32 %v1901, %v1908
        %v1911 = vlaneseq
        %v1912 = vshrl.u32 %v1911, 7
        %v1913 = vsub.s32 0, %v1912
        %v1914 = vrot.slane %v1895, %v1913
        %v1916 = vmul.f32 %v1909, %v1914
        %v1918 = vlaneseq
        %v1919 = vshrl.u32 %v1918, 7
        %v1920 = vsub.s32 0, %v1919
        %v1921 = vrot.slane %v1896, %v1920
        %v1923 = vadd.f32 %v1916, %v1921
        %v1924 = vld [vmem:[%s18] sm:$0xf]
        %v1925 = vld [vmem:[%s18 + $0x4] sm:$0xf]
        %v1926 = vld [vmem:[%s18 + $0x8] sm:$0xf]
        %v1927 = vld [vmem:[%s18 + $0xc] sm:$0xf]
        %v1928 = vpack.c.bf16 %v1923, %v1923
        %v1929 = vld [vmem:[%s19] sm:$0x1]
        %v1931 = vlaneseq
        %v1932 = vshrl.u32 %v1931, 7
        %v1933 = vsub.s32 0, %v1932
        %v1934 = vrot.slane %v1929, %v1933
        %v1940 = vunpack.c.l.b16 %v1924
        %v1941 = vunpack.c.l.b16 %v1925
        %v1942 = vunpack.c.l.b16 %v1926
        %v1943 = vunpack.c.l.b16 %v1927
        %v1944 = vpack.c.b16 %v1941, %v1940
        %v1945 = vpack.c.b16 %v1943, %v1942
        %v1949 = vsel %vm950, %v1928, 0
        %1951 = vmatprep.subr.bf16.mxu0 0
        %1952 = vmatpush1.bf16.msra.mxu0 %v1944
        %1953 = vmatprep.subr.bf16.mxu0 0
        %1954 = vmatpush1.bf16.msra.mxu0 %v1945
        %1955 = vmatprep.subr.bf16.mxu0 0
        %1956 = vmatpush1.bf16.msra.mxu0 0
        %1957 = vmatprep.subr.bf16.mxu0 0
        %1958 = vmatpush1.bf16.msra.mxu0 0
        %1959 = vmatprep.subr.bf16.mxu0 0
        %1960 = vmatpush1.bf16.msra.mxu0 0
        %1961 = vmatprep.subr.bf16.mxu0 0
        %1962 = vmatpush1.bf16.msra.mxu0 0
        %1963 = vmatprep.subr.bf16.mxu0 0
        %1964 = vmatpush1.bf16.msra.mxu0 0
        %1965 = vmatprep.subr.bf16.mxu0 0
        %1966 = vmatpush1.bf16.msra.mxu0 0
        %1967 = vmatprep.subr.bf16.mxu0 0
        %1968 = vmatpush1.bf16.msra.mxu0 0
        %1969 = vmatprep.subr.bf16.mxu0 0
        %1970 = vmatpush1.bf16.msra.mxu0 0
        %1971 = vmatprep.subr.bf16.mxu0 0
        %1972 = vmatpush1.bf16.msra.mxu0 0
        %1973 = vmatprep.subr.bf16.mxu0 0
        %1974 = vmatpush1.bf16.msra.mxu0 0
        %1975 = vmatprep.subr.bf16.mxu0 0
        %1976 = vmatpush1.bf16.msra.mxu0 0
        %1977 = vmatprep.subr.bf16.mxu0 0
        %1978 = vmatpush1.bf16.msra.mxu0 0
        %1979 = vmatprep.subr.bf16.mxu0 0
        %1980 = vmatpush1.bf16.msra.mxu0 0
        %1981 = vmatprep.subr.bf16.mxu0 0
        %1982 = vmatpush1.bf16.msra.mxu0 0
        %1983 = vmatprep.mubr.bf16.mxu0 0
        %1984 = vmatmul.mubr.bf16.gmra.mrb[0].mxu0 %v1949
        %v1985 = vpop.f32.mrb[0].mxu0
        %v1986 = vadd.f32 %v1934, %v1985
        %v1987 = vpop.f32.mrb[0].mxu0
        %v1988 = vpop.f32.mrb[0].mxu0
        %v1989 = vpop.f32.mrb[0].mxu0
        %1990 = vdwg.mxu0
        %1991 = vst.msk [vmem:[%s20] sm:$0xff] %vm950, %v1986
      $region108: #{paligemma_forward.2} parent=99 // pred_fallthru
        _
      // Predicated region
      $region109: #{paligemma_forward.2} parent=99 // pred_check
        %p1992 = pneg %p524
      $region110: #{paligemma_forward.2} parent=99 // pred_check_branch
        %1994 = sbr.rel (%p1992) target = $region112
      $region111: #{paligemma_forward.2} parent=99 // pred_region
        _
      $region112: #{paligemma_forward.2} parent=99 // pred_fallthru
        _
      // Predicated region
      $region113: #{paligemma_forward.2} parent=99 // pred_check
        %p1995 = pneg %p524
      $region114: #{paligemma_forward.2} parent=99 // pred_check_branch
        %1997 = sbr.rel (%p1995) target = $region116
      $region115: #{paligemma_forward.2} parent=99 // pred_region
        _
      $region116: #{paligemma_forward.2} parent=99 // pred_fallthru
        _
    $region100: #{paligemma_forward.2} parent=5 // pred_fallthru
      _
    %p1998 = scmp.le.s32.totalorder 2, %s26
    // Predicated region
    $region117: #{paligemma_forward.2} parent=5 // pred_check
      %p1999 = pneg %p1998
    $region118: #{paligemma_forward.2} parent=5 // pred_check_branch
      %2001 = sbr.rel (%p1999) target = $region120
    $region119: #{paligemma_forward.2} parent=5 // pred_region
      %s2002 = ssub.s32 %s26, 2
    $region120: #{paligemma_forward.2} parent=5 // pred_fallthru
      _
  $region6: #{paligemma_forward.2} parent=0 // loop_footer
    %s30 = sadd.s32 1, %s26
  $region7: #{paligemma_forward.2} parent=0 // loop_footer_branch
    %25 = sbr.rel target = $region3
  $region8: #{paligemma_forward.2} parent=0 // loop_exit
    _

// kernel: paligemma_forward.3
$region0: #{paligemma_forward.3}
  #allocation0 [shape = 'u32[]', space=smem, size = 0x4, offset = 0x4, fixed_abs, tag = 'smem constant byte address 0x4 - core index']
  #allocation1 [shape = 'u32[144,128]{1,0:T(1,128)}', space=vmem, size = 0x12000, scoped, tag = 'internal scratch']
  #allocation2 [shape = 'f32[16,32]{1,0:T(8,128)}', space=vmem, size = 0x2000, scoped, tag = 'scratch operand']
  %s0 = inlined_call_operand.vmem [shape: s32[16,1], index: 0, kind: input, shape index: {}]
  %s1 = inlined_call_operand.vmem [shape: f32[16,32], index: 1, kind: input, shape index: {}]
  %s2 = inlined_call_operand.vmem [shape: f32[16,32], index: 2, kind: input, shape index: {}]
  %s3 = inlined_call_operand.vmem [shape: f32[16,8], index: 3, kind: input, shape index: {}]
  %s4 = inlined_call_operand.vmem [shape: f32[16,8], index: 4, kind: input, shape index: {}]
  %s5 = inlined_call_operand.vmem [shape: f32[2,1,32], index: 5, kind: input, shape index: {}]
  %s6 = inlined_call_operand.vmem [shape: bf16[2,32,64], index: 6, kind: input, shape index: {}]
  %s7 = inlined_call_operand.vmem [shape: bf16[2,32,32], index: 7, kind: input, shape index: {}]
  %s8 = inlined_call_operand.vmem [shape: f32[2,1,32], index: 8, kind: input, shape index: {}]
  %s9 = inlined_call_operand.vmem [shape: bf16[2,32,128], index: 9, kind: input, shape index: {}]
  %s10 = inlined_call_operand.vmem [shape: bf16[2,64,32], index: 10, kind: input, shape index: {}]
  %s11 = inlined_call_operand.vmem [shape: f32[1,32], index: 11, kind: input, shape index: {}]
  %s12 = inlined_call_operand.vmem [shape: bf16[128,32], index: 12, kind: input, shape index: {}]
  %s13 = inlined_call_operand.hbm [shape: f32[16,128], index: 13, kind: output, shape index: {}]
  %s14 = sld [smem:[#allocation0]]
  $region93: #{paligemma_forward.3} parent=0
    _
  %s16 = ssub.s32 1, %s14
  %s17 = scalar_select 0, %s16, %s14
  $region1: #{paligemma_forward.3} parent=0
    #allocation3 [shape = 'u8[8192]{0}', space=vmem, size = 0x2000, scoped, tag = 'output window, operand 0, single buffered']
    #allocation4 [shape = 's32[2]{0}', space=sflag, size = 0x8, scoped, tag = 'scoped memory for paligemma_forward.3']
    %18 = vsyncpa [#allocation4], 0
    loop: start=0, step=1, limit=4
    $region2: #{paligemma_forward.3} parent=1 // loop_pre_header
      _
    $region3: #{paligemma_forward.3} parent=1 // loop_header
      %s20 = sphi 0, %s24
      %p21 = scmp.ge.s32.totalorder %s20, 4
      %s28 = sphi 0, %s28
      %s30 = sphi 0, %s28
      %s31 = sphi 0, %s30
      %s45 = sphi 0, %s31
      %s49 = sphi 0, %s49
      %s51 = sphi 0, %s49
      %s52 = sphi 0, %s51
      %s66 = sphi 0, %s52
      %s70 = sphi 0, %s70
      %s72 = sphi 0, %s70
      %s73 = sphi 0, %s72
      %s87 = sphi 0, %s73
      %s91 = sphi 0, %s91
      %s93 = sphi 0, %s91
      %s94 = sphi 0, %s93
      %s108 = sphi 0, %s94
      %s112 = sphi 0, %s112
      %s114 = sphi 0, %s112
      %s115 = sphi 0, %s114
      %s129 = sphi 0, %s115
      %s135 = sphi 0, %s137
      %s138 = sphi 0, %s135
      %s139 = sphi 0, %s138
      %s155 = sphi 0, %s139
      %s161 = sphi 0, %s163
      %s164 = sphi 0, %s161
      %s165 = sphi 0, %s164
      %s181 = sphi 0, %s165
      %s187 = sphi 0, %s189
      %s190 = sphi 0, %s187
      %s191 = sphi 0, %s190
      %s207 = sphi 0, %s191
      %s213 = sphi 0, %s215
      %s216 = sphi 0, %s213
      %s217 = sphi 0, %s216
      %s233 = sphi 0, %s217
      %s239 = sphi 0, %s241
      %s242 = sphi 0, %s239
      %s243 = sphi 0, %s242
      %s259 = sphi 0, %s243
      %s265 = sphi 0, %s267
      %s268 = sphi 0, %s265
      %s269 = sphi 0, %s268
      %s285 = sphi 0, %s269
      %s289 = sphi 0, %s289
      %s291 = sphi 0, %s289
      %s292 = sphi 0, %s291
      %s306 = sphi 0, %s292
      %s310 = sphi 0, %s310
      %s312 = sphi 0, %s310
      %s313 = sphi 0, %s312
      %s327 = sphi 0, %s313
      %s331 = sphi 0, %s331
      %s333 = sphi 0, %s331
      %s334 = sphi 0, %s333
      %s348 = sphi 0, %s334
    $region4: #{paligemma_forward.3} parent=1 // loop_header_branch
      %23 = sbr.rel (%p21) target = $region8
    $region5: #{paligemma_forward.3} parent=1 // loop_body
      %s25 = ssub.s32 %s20, 1
      %s26 = ssub.s32 %s20, 2
      %s27 = sadd.s32 %s20, 1
      %s29 = sadd.s32 %s28, 1
      %p32 = scmp.eq.s32.totalorder %s20, 1
      %p33 = scmp.ne.s32.totalorder %s28, %s30
      %p34 = scmp.eq.s32.totalorder %s20, 0
      %p35 = por %p33, %p34
      %p36 = scmp.ne.s32.totalorder %s28, %s30
      %p37 = scmp.eq.s32.totalorder %s25, 1
      %p38 = por %p36, %p37
      %p39 = scmp.ne.s32.totalorder %s30, %s31
      %p40 = scmp.eq.s32.totalorder %s25, 0
      %p41 = por %p39, %p40
      %p42 = scmp.ne.s32.totalorder %s30, %s31
      %p43 = scmp.eq.s32.totalorder %s26, 1
      %p44 = por %p42, %p43
      %p46 = scmp.ne.s32.totalorder %s31, %s45
      %p47 = scmp.eq.s32.totalorder %s26, 0
      %p48 = por %p46, %p47
      %s50 = sadd.s32 %s49, 1
      %p53 = scmp.eq.s32.totalorder %s20, 1
      %p54 = scmp.ne.s32.totalorder %s49, %s51
      %p55 = scmp.eq.s32.totalorder %s20, 0
      %p56 = por %p54, %p55
      %p57 = scmp.ne.s32.totalorder %s49, %s51
      %p58 = scmp.eq.s32.totalorder %s25, 1
      %p59 = por %p57, %p58
      %p60 = scmp.ne.s32.totalorder %s51, %s52
      %p61 = scmp.eq.s32.totalorder %s25, 0
      %p62 = por %p60, %p61
      %p63 = scmp.ne.s32.totalorder %s51, %s52
      %p64 = scmp.eq.s32.totalorder %s26, 1
      %p65 = por %p63, %p64
      %p67 = scmp.ne.s32.totalorder %s52, %s66
      %p68 = scmp.eq.s32.totalorder %s26, 0
      %p69 = por %p67, %p68
      %s71 = sadd.s32 %s70, 1
      %p74 = scmp.eq.s32.totalorder %s20, 1
      %p75 = scmp.ne.s32.totalorder %s70, %s72
      %p76 = scmp.eq.s32.totalorder %s20, 0
      %p77 = por %p75, %p76
      %p78 = scmp.ne.s32.totalorder %s70, %s72
      %p79 = scmp.eq.s32.totalorder %s25, 1
      %p80 = por %p78, %p79
      %p81 = scmp.ne.s32.totalorder %s72, %s73
      %p82 = scmp.eq.s32.totalorder %s25, 0
      %p83 = por %p81, %p82
      %p84 = scmp.ne.s32.totalorder %s72, %s73
      %p85 = scmp.eq.s32.totalorder %s26, 1
      %p86 = por %p84, %p85
      %p88 = scmp.ne.s32.totalorder %s73, %s87
      %p89 = scmp.eq.s32.totalorder %s26, 0
      %p90 = por %p88, %p89
      %s92 = sadd.s32 %s91, 1
      %p95 = scmp.eq.s32.totalorder %s20, 1
      %p96 = scmp.ne.s32.totalorder %s91, %s93
      %p97 = scmp.eq.s32.totalorder %s20, 0
      %p98 = por %p96, %p97
      %p99 = scmp.ne.s32.totalorder %s91, %s93
      %p100 = scmp.eq.s32.totalorder %s25, 1
      %p101 = por %p99, %p100
      %p102 = scmp.ne.s32.totalorder %s93, %s94
      %p103 = scmp.eq.s32.totalorder %s25, 0
      %p104 = por %p102, %p103
      %p105 = scmp.ne.s32.totalorder %s93, %s94
      %p106 = scmp.eq.s32.totalorder %s26, 1
      %p107 = por %p105, %p106
      %p109 = scmp.ne.s32.totalorder %s94, %s108
      %p110 = scmp.eq.s32.totalorder %s26, 0
      %p111 = por %p109, %p110
      %s113 = sadd.s32 %s112, 1
      %p116 = scmp.eq.s32.totalorder %s20, 1
      %p117 = scmp.ne.s32.totalorder %s112, %s114
      %p118 = scmp.eq.s32.totalorder %s20, 0
      %p119 = por %p117, %p118
      %p120 = scmp.ne.s32.totalorder %s112, %s114
      %p121 = scmp.eq.s32.totalorder %s25, 1
      %p122 = por %p120, %p121
      %p123 = scmp.ne.s32.totalorder %s114, %s115
      %p124 = scmp.eq.s32.totalorder %s25, 0
      %p125 = por %p123, %p124
      %p126 = scmp.ne.s32.totalorder %s114, %s115
      %p127 = scmp.eq.s32.totalorder %s26, 1
      %p128 = por %p126, %p127
      %p130 = scmp.ne.s32.totalorder %s115, %s129
      %p131 = scmp.eq.s32.totalorder %s26, 0
      %p132 = por %p130, %p131
      %s133 = ssub.s32 %s20, %s27
      %p134 = scmp.eq.s32.totalorder %s133, 0
      %s136 = sadd.s32 %s135, 1
      %s137 = scalar_select %p134, %s135, %s136
      %p140 = pneg %p134
      %p141 = scmp.eq.s32.totalorder %s20, 1
      %p142 = por %p140, %p141
      %p143 = scmp.ne.s32.totalorder %s135, %s138
      %p144 = scmp.eq.s32.totalorder %s20, 0
      %p145 = por %p143, %p144
      %p146 = scmp.ne.s32.totalorder %s135, %s138
      %p147 = scmp.eq.s32.totalorder %s25, 1
      %p148 = por %p146, %p147
      %p149 = scmp.ne.s32.totalorder %s138, %s139
      %p150 = scmp.eq.s32.totalorder %s25, 0
      %p151 = por %p149, %p150
      %p152 = scmp.ne.s32.totalorder %s138, %s139
      %p153 = scmp.eq.s32.totalorder %s26, 1
      %p154 = por %p152, %p153
      %p156 = scmp.ne.s32.totalorder %s139, %s155
      %p157 = scmp.eq.s32.totalorder %s26, 0
      %p158 = por %p156, %p157
      %s159 = ssub.s32 %s20, %s27
      %p160 = scmp.eq.s32.totalorder %s159, 0
      %s162 = sadd.s32 %s161, 1
      %s163 = scalar_select %p160, %s161, %s162
      %p166 = pneg %p160
      %p167 = scmp.eq.s32.totalorder %s20, 1
      %p168 = por %p166, %p167
      %p169 = scmp.ne.s32.totalorder %s161, %s164
      %p170 = scmp.eq.s32.totalorder %s20, 0
      %p171 = por %p169, %p170
      %p172 = scmp.ne.s32.totalorder %s161, %s164
      %p173 = scmp.eq.s32.totalorder %s25, 1
      %p174 = por %p172, %p173
      %p175 = scmp.ne.s32.totalorder %s164, %s165
      %p176 = scmp.eq.s32.totalorder %s25, 0
      %p177 = por %p175, %p176
      %p178 = scmp.ne.s32.totalorder %s164, %s165
      %p179 = scmp.eq.s32.totalorder %s26, 1
      %p180 = por %p178, %p179
      %p182 = scmp.ne.s32.totalorder %s165, %s181
      %p183 = scmp.eq.s32.totalorder %s26, 0
      %p184 = por %p182, %p183
      %s185 = ssub.s32 %s20, %s27
      %p186 = scmp.eq.s32.totalorder %s185, 0
      %s188 = sadd.s32 %s187, 1
      %s189 = scalar_select %p186, %s187, %s188
      %p192 = pneg %p186
      %p193 = scmp.eq.s32.totalorder %s20, 1
      %p194 = por %p192, %p193
      %p195 = scmp.ne.s32.totalorder %s187, %s190
      %p196 = scmp.eq.s32.totalorder %s20, 0
      %p197 = por %p195, %p196
      %p198 = scmp.ne.s32.totalorder %s187, %s190
      %p199 = scmp.eq.s32.totalorder %s25, 1
      %p200 = por %p198, %p199
      %p201 = scmp.ne.s32.totalorder %s190, %s191
      %p202 = scmp.eq.s32.totalorder %s25, 0
      %p203 = por %p201, %p202
      %p204 = scmp.ne.s32.totalorder %s190, %s191
      %p205 = scmp.eq.s32.totalorder %s26, 1
      %p206 = por %p204, %p205
      %p208 = scmp.ne.s32.totalorder %s191, %s207
      %p209 = scmp.eq.s32.totalorder %s26, 0
      %p210 = por %p208, %p209
      %s211 = ssub.s32 %s20, %s27
      %p212 = scmp.eq.s32.totalorder %s211, 0
      %s214 = sadd.s32 %s213, 1
      %s215 = scalar_select %p212, %s213, %s214
      %p218 = pneg %p212
      %p219 = scmp.eq.s32.totalorder %s20, 1
      %p220 = por %p218, %p219
      %p221 = scmp.ne.s32.totalorder %s213, %s216
      %p222 = scmp.eq.s32.totalorder %s20, 0
      %p223 = por %p221, %p222
      %p224 = scmp.ne.s32.totalorder %s213, %s216
      %p225 = scmp.eq.s32.totalorder %s25, 1
      %p226 = por %p224, %p225
      %p227 = scmp.ne.s32.totalorder %s216, %s217
      %p228 = scmp.eq.s32.totalorder %s25, 0
      %p229 = por %p227, %p228
      %p230 = scmp.ne.s32.totalorder %s216, %s217
      %p231 = scmp.eq.s32.totalorder %s26, 1
      %p232 = por %p230, %p231
      %p234 = scmp.ne.s32.totalorder %s217, %s233
      %p235 = scmp.eq.s32.totalorder %s26, 0
      %p236 = por %p234, %p235
      %s237 = ssub.s32 %s20, %s27
      %p238 = scmp.eq.s32.totalorder %s237, 0
      %s240 = sadd.s32 %s239, 1
      %s241 = scalar_select %p238, %s239, %s240
      %p244 = pneg %p238
      %p245 = scmp.eq.s32.totalorder %s20, 1
      %p246 = por %p244, %p245
      %p247 = scmp.ne.s32.totalorder %s239, %s242
      %p248 = scmp.eq.s32.totalorder %s20, 0
      %p249 = por %p247, %p248
      %p250 = scmp.ne.s32.totalorder %s239, %s242
      %p251 = scmp.eq.s32.totalorder %s25, 1
      %p252 = por %p250, %p251
      %p253 = scmp.ne.s32.totalorder %s242, %s243
      %p254 = scmp.eq.s32.totalorder %s25, 0
      %p255 = por %p253, %p254
      %p256 = scmp.ne.s32.totalorder %s242, %s243
      %p257 = scmp.eq.s32.totalorder %s26, 1
      %p258 = por %p256, %p257
      %p260 = scmp.ne.s32.totalorder %s243, %s259
      %p261 = scmp.eq.s32.totalorder %s26, 0
      %p262 = por %p260, %p261
      %s263 = ssub.s32 %s20, %s27
      %p264 = scmp.eq.s32.totalorder %s263, 0
      %s266 = sadd.s32 %s265, 1
      %s267 = scalar_select %p264, %s265, %s266
      %p270 = pneg %p264
      %p271 = scmp.eq.s32.totalorder %s20, 1
      %p272 = por %p270, %p271
      %p273 = scmp.ne.s32.totalorder %s265, %s268
      %p274 = scmp.eq.s32.totalorder %s20, 0
      %p275 = por %p273, %p274
      %p276 = scmp.ne.s32.totalorder %s265, %s268
      %p277 = scmp.eq.s32.totalorder %s25, 1
      %p278 = por %p276, %p277
      %p279 = scmp.ne.s32.totalorder %s268, %s269
      %p280 = scmp.eq.s32.totalorder %s25, 0
      %p281 = por %p279, %p280
      %p282 = scmp.ne.s32.totalorder %s268, %s269
      %p283 = scmp.eq.s32.totalorder %s26, 1
      %p284 = por %p282, %p283
      %p286 = scmp.ne.s32.totalorder %s269, %s285
      %p287 = scmp.eq.s32.totalorder %s26, 0
      %p288 = por %p286, %p287
      %s290 = sadd.s32 %s289, 1
      %p293 = scmp.eq.s32.totalorder %s20, 1
      %p294 = scmp.ne.s32.totalorder %s289, %s291
      %p295 = scmp.eq.s32.totalorder %s20, 0
      %p296 = por %p294, %p295
      %p297 = scmp.ne.s32.totalorder %s289, %s291
      %p298 = scmp.eq.s32.totalorder %s25, 1
      %p299 = por %p297, %p298
      %p300 = scmp.ne.s32.totalorder %s291, %s292
      %p301 = scmp.eq.s32.totalorder %s25, 0
      %p302 = por %p300, %p301
      %p303 = scmp.ne.s32.totalorder %s291, %s292
      %p304 = scmp.eq.s32.totalorder %s26, 1
      %p305 = por %p303, %p304
      %p307 = scmp.ne.s32.totalorder %s292, %s306
      %p308 = scmp.eq.s32.totalorder %s26, 0
      %p309 = por %p307, %p308
      %s311 = sadd.s32 %s310, 1
      %p314 = scmp.eq.s32.totalorder %s20, 1
      %p315 = scmp.ne.s32.totalorder %s310, %s312
      %p316 = scmp.eq.s32.totalorder %s20, 0
      %p317 = por %p315, %p316
      %p318 = scmp.ne.s32.totalorder %s310, %s312
      %p319 = scmp.eq.s32.totalorder %s25, 1
      %p320 = por %p318, %p319
      %p321 = scmp.ne.s32.totalorder %s312, %s313
      %p322 = scmp.eq.s32.totalorder %s25, 0
      %p323 = por %p321, %p322
      %p324 = scmp.ne.s32.totalorder %s312, %s313
      %p325 = scmp.eq.s32.totalorder %s26, 1
      %p326 = por %p324, %p325
      %p328 = scmp.ne.s32.totalorder %s313, %s327
      %p329 = scmp.eq.s32.totalorder %s26, 0
      %p330 = por %p328, %p329
      %s332 = sadd.s32 %s331, 1
      %p335 = scmp.eq.s32.totalorder %s20, 1
      %p336 = scmp.ne.s32.totalorder %s331, %s333
      %p337 = scmp.eq.s32.totalorder %s20, 0
      %p338 = por %p336, %p337
      %p339 = scmp.ne.s32.totalorder %s331, %s333
      %p340 = scmp.eq.s32.totalorder %s25, 1
      %p341 = por %p339, %p340
      %p342 = scmp.ne.s32.totalorder %s333, %s334
      %p343 = scmp.eq.s32.totalorder %s25, 0
      %p344 = por %p342, %p343
      %p345 = scmp.ne.s32.totalorder %s333, %s334
      %p346 = scmp.eq.s32.totalorder %s26, 1
      %p347 = por %p345, %p346
      %p349 = scmp.ne.s32.totalorder %s334, %s348
      %p350 = scmp.eq.s32.totalorder %s26, 0
      %p351 = por %p349, %p350
      %p352 = scmp.le.s32.totalorder 1, %s20
      %p353 = scmp.lt.s32.totalorder %s20, 3
      %p354 = pnand %p352, %p353
      %p355 = pneg %p354
      // Predicated region
      $region9: #{paligemma_forward.3} parent=5 // pred_check
        _
      $region10: #{paligemma_forward.3} parent=5 // pred_check_branch
        %357 = sbr.rel (%p354) target = $region12
      $region11: #{paligemma_forward.3} parent=5 // pred_region
        %s358 = ssub.s32 %s20, 1
        // Predicated region
        $region13: #{paligemma_forward.3} parent=11 // pred_check
          %p359 = pneg %p41
        $region14: #{paligemma_forward.3} parent=11 // pred_check_branch
          %361 = sbr.rel (%p359) target = $region16
        $region15: #{paligemma_forward.3} parent=11 // pred_region
          _
        $region16: #{paligemma_forward.3} parent=11 // pred_fallthru
          _
        // Predicated region
        $region17: #{paligemma_forward.3} parent=11 // pred_check
          %p362 = pneg %p62
        $region18: #{paligemma_forward.3} parent=11 // pred_check_branch
          %364 = sbr.rel (%p362) target = $region20
        $region19: #{paligemma_forward.3} parent=11 // pred_region
          _
        $region20: #{paligemma_forward.3} parent=11 // pred_fallthru
          _
        // Predicated region
        $region21: #{paligemma_forward.3} parent=11 // pred_check
          %p365 = pneg %p83
        $region22: #{paligemma_forward.3} parent=11 // pred_check_branch
          %367 = sbr.rel (%p365) target = $region24
        $region23: #{paligemma_forward.3} parent=11 // pred_region
          _
        $region24: #{paligemma_forward.3} parent=11 // pred_fallthru
          _
        // Predicated region
        $region25: #{paligemma_forward.3} parent=11 // pred_check
          %p368 = pneg %p104
        $region26: #{paligemma_forward.3} parent=11 // pred_check_branch
          %370 = sbr.rel (%p368) target = $region28
        $region27: #{paligemma_forward.3} parent=11 // pred_region
          _
        $region28: #{paligemma_forward.3} parent=11 // pred_fallthru
          _
        // Predicated region
        $region29: #{paligemma_forward.3} parent=11 // pred_check
          %p371 = pneg %p125
        $region30: #{paligemma_forward.3} parent=11 // pred_check_branch
          %373 = sbr.rel (%p371) target = $region32
        $region31: #{paligemma_forward.3} parent=11 // pred_region
          _
        $region32: #{paligemma_forward.3} parent=11 // pred_fallthru
          _
        // Predicated region
        $region33: #{paligemma_forward.3} parent=11 // pred_check
          %p374 = pneg %p302
        $region34: #{paligemma_forward.3} parent=11 // pred_check_branch
          %376 = sbr.rel (%p374) target = $region36
        $region35: #{paligemma_forward.3} parent=11 // pred_region
          _
        $region36: #{paligemma_forward.3} parent=11 // pred_fallthru
          _
        // Predicated region
        $region37: #{paligemma_forward.3} parent=11 // pred_check
          %p377 = pneg %p323
        $region38: #{paligemma_forward.3} parent=11 // pred_check_branch
          %379 = sbr.rel (%p377) target = $region40
        $region39: #{paligemma_forward.3} parent=11 // pred_region
          _
        $region40: #{paligemma_forward.3} parent=11 // pred_fallthru
          _
      $region12: #{paligemma_forward.3} parent=5 // pred_fallthru
        _
      %p380 = scmp.lt.s32.totalorder %s20, 2
      // Predicated region
      $region41: #{paligemma_forward.3} parent=5 // pred_check
        %p381 = pneg %p380
      $region42: #{paligemma_forward.3} parent=5 // pred_check_branch
        %383 = sbr.rel (%p381) target = $region44
      $region43: #{paligemma_forward.3} parent=5 // pred_region
        // Predicated region
        $region45: #{paligemma_forward.3} parent=43 // pred_check
          %p384 = pneg %p145
        $region46: #{paligemma_forward.3} parent=43 // pred_check_branch
          %386 = sbr.rel (%p384) target = $region48
        $region47: #{paligemma_forward.3} parent=43 // pred_region
          %p387 = scmp.lt.s32.totalorder %s20, 1
          %s388 = scalar_select %p387, %s20, 1
          %s389 = scalar_lea.vmem %s5, %s388
        $region48: #{paligemma_forward.3} parent=43 // pred_fallthru
          _
        // Predicated region
        $region49: #{paligemma_forward.3} parent=43 // pred_check
          %p390 = pneg %p171
        $region50: #{paligemma_forward.3} parent=43 // pred_check_branch
          %392 = sbr.rel (%p390) target = $region52
        $region51: #{paligemma_forward.3} parent=43 // pred_region
          %p393 = scmp.lt.s32.totalorder %s20, 1
          %s394 = scalar_select %p393, %s20, 1
          %s395 = smul.addr %s394, 4
          %s396 = smul.addr %s395, 4
          %s397 = scalar_lea.vmem %s6, %s396
        $region52: #{paligemma_forward.3} parent=43 // pred_fallthru
          _
        // Predicated region
        $region53: #{paligemma_forward.3} parent=43 // pred_check
          %p398 = pneg %p197
        $region54: #{paligemma_forward.3} parent=43 // pred_check_branch
          %400 = sbr.rel (%p398) target = $region56
        $region55: #{paligemma_forward.3} parent=43 // pred_region
          %p401 = scmp.lt.s32.totalorder %s20, 1
          %s402 = scalar_select %p401, %s20, 1
          %s403 = smul.addr %s402, 4
          %s404 = smul.addr %s403, 4
          %s405 = scalar_lea.vmem %s7, %s404
        $region56: #{paligemma_forward.3} parent=43 // pred_fallthru
          _
        // Predicated region
        $region57: #{paligemma_forward.3} parent=43 // pred_check
          %p406 = pneg %p223
        $region58: #{paligemma_forward.3} parent=43 // pred_check_branch
          %408 = sbr.rel (%p406) target = $region60
        $region59: #{paligemma_forward.3} parent=43 // pred_region
          %p409 = scmp.lt.s32.totalorder %s20, 1
          %s410 = scalar_select %p409, %s20, 1
          %s411 = scalar_lea.vmem %s8, %s410
        $region60: #{paligemma_forward.3} parent=43 // pred_fallthru
          _
        // Predicated region
        $region61: #{paligemma_forward.3} parent=43 // pred_check
          %p412 = pneg %p249
        $region62: #{paligemma_forward.3} parent=43 // pred_check_branch
          %414 = sbr.rel (%p412) target = $region64
        $region63: #{paligemma_forward.3} parent=43 // pred_region
          %p415 = scmp.lt.s32.totalorder %s20, 1
          %s416 = scalar_select %p415, %s20, 1
          %s417 = smul.addr %s416, 4
          %s418 = smul.addr %s417, 4
          %s419 = scalar_lea.vmem %s9, %s418
        $region64: #{paligemma_forward.3} parent=43 // pred_fallthru
          _
        // Predicated region
        $region65: #{paligemma_forward.3} parent=43 // pred_check
          %p420 = pneg %p275
        $region66: #{paligemma_forward.3} parent=43 // pred_check_branch
          %422 = sbr.rel (%p420) target = $region68
        $region67: #{paligemma_forward.3} parent=43 // pred_region
          %p423 = scmp.lt.s32.totalorder %s20, 1
          %s424 = scalar_select %p423, %s20, 1
          %s425 = smul.addr %s424, 8
          %s426 = smul.addr %s425, 4
          %s427 = scalar_lea.vmem %s10, %s426
        $region68: #{paligemma_forward.3} parent=43 // pred_fallthru
          _
      $region44: #{paligemma_forward.3} parent=5 // pred_fallthru
        _
      %p428 = scmp.le.s32.totalorder 1, %s20
      %p429 = scmp.lt.s32.totalorder %s20, 3
      %p430 = pnand %p428, %p429
      %p431 = pneg %p430
      // Predicated region
      $region69: #{paligemma_forward.3} parent=5 // pred_check
        _
      $region70: #{paligemma_forward.3} parent=5 // pred_check_branch
        %433 = sbr.rel (%p430) target = $region72
      $region71: #{paligemma_forward.3} parent=5 // pred_region
        %s434 = ssub.s32 %s20, 1
        %p435 = pneg %p41
        %p436 = pneg %p38
        %p437 = pneg %p62
        %p438 = pneg %p59
        %p439 = pneg %p83
        %p440 = pneg %p80
        %p441 = pneg %p104
        %p442 = pneg %p101
        %p443 = pneg %p125
        %p444 = pneg %p122
        %p445 = scmp.lt.s32.totalorder %s25, 1
        %s446 = scalar_select %p445, %s25, 1
        %s447 = scalar_lea.vmem %s5, %s446
        %p448 = pneg %p151
        %p449 = pneg %p148
        %p450 = scmp.lt.s32.totalorder %s25, 1
        %s451 = scalar_select %p450, %s25, 1
        %s452 = smul.addr %s451, 4
        %s453 = smul.addr %s452, 4
        %s454 = scalar_lea.vmem %s6, %s453
        %p455 = pneg %p177
        %p456 = pneg %p174
        %p457 = scmp.lt.s32.totalorder %s25, 1
        %s458 = scalar_select %p457, %s25, 1
        %s459 = smul.addr %s458, 4
        %s460 = smul.addr %s459, 4
        %s461 = scalar_lea.vmem %s7, %s460
        %p462 = pneg %p203
        %p463 = pneg %p200
        %p464 = scmp.lt.s32.totalorder %s25, 1
        %s465 = scalar_select %p464, %s25, 1
        %s466 = scalar_lea.vmem %s8, %s465
        %p467 = pneg %p229
        %p468 = pneg %p226
        %p469 = scmp.lt.s32.totalorder %s25, 1
        %s470 = scalar_select %p469, %s25, 1
        %s471 = smul.addr %s470, 4
        %s472 = smul.addr %s471, 4
        %s473 = scalar_lea.vmem %s9, %s472
        %p474 = pneg %p255
        %p475 = pneg %p252
        %p476 = scmp.lt.s32.totalorder %s25, 1
        %s477 = scalar_select %p476, %s25, 1
        %s478 = smul.addr %s477, 8
        %s479 = smul.addr %s478, 4
        %s480 = scalar_lea.vmem %s10, %s479
        %p481 = pneg %p281
        %p482 = pneg %p278
        %p483 = pneg %p302
        %p484 = pneg %p299
        %p485 = pneg %p323
        %p486 = pneg %p320
        %p487 = pneg %p344
        %p488 = pneg %p341
        %p489 = scmp.lt.s32.totalorder %s25, 1
        %s490 = scalar_select %p489, %s25, 1
        %s491 = scalar_lea.vmem %s5, %s490
        %p492 = scmp.lt.s32.totalorder %s25, 1
        %s493 = scalar_select %p492, %s25, 1
        %s494 = smul.addr %s493, 4
        %s495 = smul.addr %s494, 4
        %s496 = scalar_lea.vmem %s6, %s495
        %p497 = scmp.lt.s32.totalorder %s25, 1
        %s498 = scalar_select %p497, %s25, 1
        %s499 = smul.addr %s498, 4
        %s500 = smul.addr %s499, 4
        %s501 = scalar_lea.vmem %s7, %s500
        %p502 = scmp.lt.s32.totalorder %s25, 1
        %s503 = scalar_select %p502, %s25, 1
        %s504 = scalar_lea.vmem %s8, %s503
        %p505 = scmp.lt.s32.totalorder %s25, 1
        %s506 = scalar_select %p505, %s25, 1
        %s507 = smul.addr %s506, 4
        %s508 = smul.addr %s507, 4
        %s509 = scalar_lea.vmem %s9, %s508
        %p510 = scmp.lt.s32.totalorder %s25, 1
        %s511 = scalar_select %p510, %s25, 1
        %s512 = smul.addr %s511, 8
        %s513 = smul.addr %s512, 4
        %s514 = scalar_lea.vmem %s10, %s513
        %p516 = scmp.eq.s32.totalorder %s25, 0
        // Predicated region
        $region73: #{paligemma_forward.3} parent=71 // pred_check
          %p517 = pneg %p516
        $region74: #{paligemma_forward.3} parent=71 // pred_check_branch
          %519 = sbr.rel (%p517) target = $region76
        $region75: #{paligemma_forward.3} parent=71 // pred_region
          %v520 = vld [vmem:[%s0] sm:$0xff]
          %v521 = vld [vmem:[%s0 + $0x8] sm:$0xff]
          %vm522 = vcmp.eq.s32.totalorder %v520, 100
          %vm523 = vcmp.eq.s32.totalorder %v521, 100
          %vm524 = vcmp.eq.s32.totalorder %v520, 4294967295
          %vm525 = vcmp.eq.s32.totalorder %v521, 4294967295
          %vm526 = vmxor %vm522, 1
          %vm527 = vmxor %vm523, 1
          %vm528 = vmxor %vm524, 1
          %vm529 = vmxor %vm525, 1
          %vm530 = vmand %vm526, %vm528
          %vm531 = vmand %vm527, %vm529
          %v532 = vsel %vm530, 1, 0
          %v533 = vsel %vm531, 1, 0
          %v534 = vcvt.s32.f32 %v532
          %v535 = vcvt.s32.f32 %v533
          %v536 = vsel %vm522, 1, 0
          %v537 = vsel %vm523, 1, 0
          %v538 = vcvt.s32.f32 %v536
          %v539 = vcvt.s32.f32 %v537
          %v540 = vld [vmem:[%s1] sm:$0xff]
          %v541 = vld [vmem:[%s1 + $0x8] sm:$0xff]
          %543 = vset.pattern.permute.xlu0 0
          %544 = vperm.xlu0 %543, %v534
          %v545 = vpop.permute.xlu0 %544
          %548 = vset.pattern.permute.xlu0 0
          %549 = vperm.xlu0 %548, %v535
          %v550 = vpop.permute.xlu0 %549
          %v552 = vmul.f32 %v540, %v545
          %v553 = vmul.f32 %v541, %v550
          %v554 = vld [vmem:[%s2] sm:$0xff]
          %v555 = vld [vmem:[%s2 + $0x8] sm:$0xff]
          %v556 = vmul.f32 %v538, 0.17677669
          %v557 = vmul.f32 %v539, 0.17677669
          %559 = vset.pattern.permute.xlu0 0
          %560 = vperm.xlu0 %559, %v556
          %v561 = vpop.permute.xlu0 %560
          %564 = vset.pattern.permute.xlu0 0
          %565 = vperm.xlu0 %564, %v557
          %v566 = vpop.permute.xlu0 %565
          %v568 = vmul.f32 %v554, %v561
          %v569 = vmul.f32 %v555, %v566
          %v570 = vadd.f32 %v552, %v568
          %v571 = vadd.f32 %v553, %v569
          %v572 = vmul.f32 %v570, 5.656854
          %v573 = vmul.f32 %v571, 5.656854
          %vm574 = vcmask 261120
          %575 = vst.msk [vmem:[#allocation2] sm:$0xff] %vm574, %v572
          %576 = vst.msk [vmem:[#allocation2 + $0x8] sm:$0xff] %vm574, %v573
        $region76: #{paligemma_forward.3} parent=71 // pred_fallthru
          _
        %v577 = vld [vmem:[#allocation2] sm:$0xff]
        %v578 = vld [vmem:[#allocation2 + $0x8] sm:$0xff]
        %v579 = vld [vmem:[%s3] sm:$0xff]
        %v580 = vld [vmem:[%s3 + $0x8] sm:$0xff]
        %v581 = vld [vmem:[%s4] sm:$0xff]
        %v582 = vld [vmem:[%s4 + $0x8] sm:$0xff]
        %v583 = vld [vmem:[%s491] sm:$0x1]
        %v584 = vmul.f32 %v577, %v577
        %v585 = vmul.f32 %v578, %v578
        %vm586 = vcmask 261120
        %v587 = vsel %vm586, %v584, 0.0
        %588 = vadd.xlane.f32.xlu0 %v587
        %v589 = vpop.xlane.xlu0 %588
        %v590 = vsel %vm586, %v585, 0.0
        %591 = vadd.xlane.f32.xlu0 %v590
        %v592 = vpop.xlane.xlu0 %591
        %v593 = vrcp.pop 32.0
        %v594 = vmul.f32 %v589, %v593
        %v595 = vmul.f32 %v592, %v593
        %v596 = vadd.f32 %v594, 1e-06
        %v597 = vadd.f32 %v595, 1e-06
        %v598 = vrsqrt.pop %v596
        %v599 = vrsqrt.pop %v597
        %v600 = vmul.f32 %v577, %v598
        %v601 = vmul.f32 %v578, %v599
        %v602 = vadd.f32 %v583, 1.0
        %v604 = vlaneseq
        %v605 = vshrl.u32 %v604, 7
        %v606 = vsub.s32 0, %v605
        %v607 = vrot.slane %v602, %v606
        %v609 = vmul.f32 %v600, %v607
        %v610 = vmul.f32 %v601, %v607
        %v611 = vld [vmem:[%s496] sm:$0xf]
        %v612 = vld [vmem:[%s496 + $0x4] sm:$0xf]
        %v613 = vld [vmem:[%s496 + $0x8] sm:$0xf]
        %v614 = vld [vmem:[%s496 + $0xc] sm:$0xf]
        %v615 = vpack.c.bf16 %v610, %v609
        %v620 = vunpack.c.l.b16 %v611
        %v621 = vunpack.c.l.b16 %v612
        %v622 = vunpack.c.l.b16 %v613
        %v623 = vunpack.c.l.b16 %v614
        %v624 = vpack.c.b16 %v621, %v620
        %v625 = vpack.c.b16 %v623, %v622
        %v629 = vsel %vm586, %v615, 0
        %631 = vmatprep.subr.bf16.mxu0 0
        %632 = vmatpush1.bf16.msra.mxu0 %v624
        %633 = vmatprep.subr.bf16.mxu0 0
        %634 = vmatpush1.bf16.msra.mxu0 %v625
        %635 = vmatprep.subr.bf16.mxu0 0
        %636 = vmatpush1.bf16.msra.mxu0 0
        %637 = vmatprep.subr.bf16.mxu0 0
        %638 = vmatpush1.bf16.msra.mxu0 0
        %639 = vmatprep.subr.bf16.mxu0 0
        %640 = vmatpush1.bf16.msra.mxu0 0
        %641 = vmatprep.subr.bf16.mxu0 0
        %642 = vmatpush1.bf16.msra.mxu0 0
        %643 = vmatprep.subr.bf16.mxu0 0
        %644 = vmatpush1.bf16.msra.mxu0 0
        %645 = vmatprep.subr.bf16.mxu0 0
        %646 = vmatpush1.bf16.msra.mxu0 0
        %647 = vmatprep.subr.bf16.mxu0 0
        %648 = vmatpush1.bf16.msra.mxu0 0
        %649 = vmatprep.subr.bf16.mxu0 0
        %650 = vmatpush1.bf16.msra.mxu0 0
        %651 = vmatprep.subr.bf16.mxu0 0
        %652 = vmatpush1.bf16.msra.mxu0 0
        %653 = vmatprep.subr.bf16.mxu0 0
        %654 = vmatpush1.bf16.msra.mxu0 0
        %655 = vmatprep.subr.bf16.mxu0 0
        %656 = vmatpush1.bf16.msra.mxu0 0
        %657 = vmatprep.subr.bf16.mxu0 0
        %658 = vmatpush1.bf16.msra.mxu0 0
        %659 = vmatprep.subr.bf16.mxu0 0
        %660 = vmatpush1.bf16.msra.mxu0 0
        %661 = vmatprep.subr.bf16.mxu0 0
        %662 = vmatpush1.bf16.msra.mxu0 0
        %663 = vmatprep.mubr.bf16.mxu0 0
        %664 = vmatmul.mubr.bf16.gmra.mrb[0].mxu0 %v629
        %v665 = vpop.f32.mrb[0].mxu0
        %v666 = vadd.f32 0.0, %v665
        %v667 = vpop.f32.mrb[0].mxu0
        %v668 = vpop.f32.mrb[0].mxu0
        %v669 = vadd.f32 0.0, %v668
        %v670 = vpop.f32.mrb[0].mxu0
        %671 = vdwg.mxu0
        %v672 = vld [vmem:[%s501] sm:$0xf]
        %v673 = vld [vmem:[%s501 + $0x4] sm:$0xf]
        %v674 = vld [vmem:[%s501 + $0x8] sm:$0xf]
        %v675 = vld [vmem:[%s501 + $0xc] sm:$0xf]
        %677 = vrot.lane.b32.xlu0 %v579, 32
        %v678 = vpop.permute.xlu0 %677
        %v680 = vmul.f32 %v666, %v678
        %682 = vrot.lane.b32.xlu0 %v581, 40
        %v683 = vpop.permute.xlu0 %682
        %v685 = vmul.f32 %v666, %v683
        %687 = vrot.lane.b32.xlu0 %v685, 120
        %v688 = vpop.permute.xlu0 %687
        %v690 = vsub.f32 %v680, %v688
        %691 = vrot.lane.b32.xlu0 %v579, 40
        %v692 = vpop.permute.xlu0 %691
        %v694 = vmul.f32 %v666, %v692
        %695 = vrot.lane.b32.xlu0 %v581, 32
        %v696 = vpop.permute.xlu0 %695
        %v698 = vmul.f32 %v666, %v696
        %700 = vrot.lane.b32.xlu0 %v698, 8
        %v701 = vpop.permute.xlu0 %700
        %v703 = vadd.f32 %v694, %v701
        %v704 = vmul.f32 %v666, %v579
        %705 = vrot.lane.b32.xlu0 %v581, 8
        %v706 = vpop.permute.xlu0 %705
        %v708 = vmul.f32 %v666, %v706
        %710 = vrot.lane.b32.xlu0 %v708, 120
        %v711 = vpop.permute.xlu0 %710
        %v713 = vsub.f32 %v704, %v711
        %714 = vrot.lane.b32.xlu0 %v579, 8
        %v715 = vpop.permute.xlu0 %714
        %v717 = vmul.f32 %v666, %v715
        %v718 = vmul.f32 %v666, %v581
        %720 = vrot.lane.b32.xlu0 %v718, 8
        %v721 = vpop.permute.xlu0 %720
        %v723 = vadd.f32 %v717, %v721
        %v724 = vpack.c.bf16 %v713, %v713
        %v725 = vpack.c.bf16 %v690, %v690
        %v726 = vpack.c.bf16 %v723, %v723
        %v727 = vpack.c.bf16 %v703, %v703
        %729 = vrot.lane.b32.xlu0 %v726, 120
        %v730 = vpop.permute.xlu0 %729
        %732 = vrot.lane.b32.xlu0 %v727, 88
        %v733 = vpop.permute.xlu0 %732
        %vm734 = vcmask 64512
        %v736 = vsel %vm734, %v730, 0
        %v739 = vsel %vm734, %v733, 0
        %741 = vmatprep.subr.bf16.mxu0 0
        %742 = vmatpush1.bf16.xpose.msra.mxu0 %v739
        %743 = vmatprep.subr.bf16.mxu0 0
        %744 = vmatpush1.bf16.xpose.msra.mxu0 0
        %745 = vmatprep.subr.bf16.mxu0 0
        %746 = vmatpush1.bf16.xpose.msra.mxu0 0
        %747 = vmatprep.subr.bf16.mxu0 0
        %748 = vmatpush1.bf16.xpose.msra.mxu0 0
        %749 = vmatprep.subr.bf16.mxu0 0
        %750 = vmatpush1.bf16.xpose.msra.mxu0 0
        %751 = vmatprep.subr.bf16.mxu0 0
        %752 = vmatpush1.bf16.xpose.msra.mxu0 0
        %753 = vmatprep.subr.bf16.mxu0 0
        %754 = vmatpush1.bf16.xpose.msra.mxu0 0
        %755 = vmatprep.subr.bf16.mxu0 0
        %756 = vmatpush1.bf16.xpose.msra.mxu0 0
        %757 = vmatprep.subr.bf16.mxu0 0
        %758 = vmatpush1.bf16.xpose.msra.mxu0 0
        %759 = vmatprep.subr.bf16.mxu0 0
        %760 = vmatpush1.bf16.xpose.msra.mxu0 0
        %761 = vmatprep.subr.bf16.mxu0 0
        %762 = vmatpush1.bf16.xpose.msra.mxu0 0
        %763 = vmatprep.subr.bf16.mxu0 0
        %764 = vmatpush1.bf16.xpose.msra.mxu0 0
        %765 = vmatprep.subr.bf16.mxu0 0
        %766 = vmatpush1.bf16.xpose.msra.mxu0 0
        %767 = vmatprep.subr.bf16.mxu0 0
        %768 = vmatpush1.bf16.xpose.msra.mxu0 0
        %769 = vmatprep.subr.bf16.mxu0 0
        %770 = vmatpush1.bf16.xpose.msra.mxu0 0
        %771 = vmatprep.subr.bf16.mxu0 0
        %772 = vmatpush1.bf16.xpose.msra.mxu0 0
        %773 = vmatprep.mubr.bf16.mxu0 0
        %774 = vmatmul.mubr.bf16.gmra.mrb[0].mxu0 %v736
        %v775 = vpop.f32.mrb[0].mxu0
        %v776 = vadd.f32 0.0, %v775
        %v777 = vpop.f32.mrb[0].mxu0
        %v778 = vpop.f32.mrb[0].mxu0
        %v779 = vpop.f32.mrb[0].mxu0
        %780 = vdwg.mxu0
        %782 = vrot.lane.b32.xlu0 %v725, 96
        %v783 = vpop.permute.xlu0 %782
        %v785 = vsel %vm734, %v724, 0
        %v788 = vsel %vm734, %v783, 0
        %790 = vmatprep.subr.bf16.mxu0 0
        %791 = vmatpush1.bf16.xpose.msra.mxu0 %v788
        %792 = vmatprep.subr.bf16.mxu0 0
        %793 = vmatpush1.bf16.xpose.msra.mxu0 0
        %794 = vmatprep.subr.bf16.mxu0 0
        %795 = vmatpush1.bf16.xpose.msra.mxu0 0
        %796 = vmatprep.subr.bf16.mxu0 0
        %797 = vmatpush1.bf16.xpose.msra.mxu0 0
        %798 = vmatprep.subr.bf16.mxu0 0
        %799 = vmatpush1.bf16.xpose.msra.mxu0 0
        %800 = vmatprep.subr.bf16.mxu0 0
        %801 = vmatpush1.bf16.xpose.msra.mxu0 0
        %802 = vmatprep.subr.bf16.mxu0 0
        %803 = vmatpush1.bf16.xpose.msra.mxu0 0
        %804 = vmatprep.subr.bf16.mxu0 0
        %805 = vmatpush1.bf16.xpose.msra.mxu0 0
        %806 = vmatprep.subr.bf16.mxu0 0
        %807 = vmatpush1.bf16.xpose.msra.mxu0 0
        %808 = vmatprep.subr.bf16.mxu0 0
        %809 = vmatpush1.bf16.xpose.msra.mxu0 0
        %810 = vmatprep.subr.bf16.mxu0 0
        %811 = vmatpush1.bf16.xpose.msra.mxu0 0
        %812 = vmatprep.subr.bf16.mxu0 0
        %813 = vmatpush1.bf16.xpose.msra.mxu0 0
        %814 = vmatprep.subr.bf16.mxu0 0
        %815 = vmatpush1.bf16.xpose.msra.mxu0 0
        %816 = vmatprep.subr.bf16.mxu0 0
        %817 = vmatpush1.bf16.xpose.msra.mxu0 0
        %818 = vmatprep.subr.bf16.mxu0 0
        %819 = vmatpush1.bf16.xpose.msra.mxu0 0
        %820 = vmatprep.subr.bf16.mxu0 0
        %821 = vmatpush1.bf16.xpose.msra.mxu0 0
        %822 = vmatprep.mubr.bf16.mxu0 0
        %823 = vmatmul.mubr.bf16.gmra.mrb[0].mxu0 %v785
        %v824 = vpop.f32.mrb[0].mxu0
        %v825 = vadd.f32 %v776, %v824
        %v826 = vpop.f32.mrb[0].mxu0
        %v827 = vpop.f32.mrb[0].mxu0
        %v828 = vpop.f32.mrb[0].mxu0
        %829 = vdwg.mxu0
        %v830 = vmul.f32 %v825, 0.25
        %v831 = vsel %vm734, %v830, -inf
        %832 = vmax.xlane.f32.xlu0 %v831
        %v833 = vpop.xlane.xlu0 %832
        %v834 = vsub.f32 %v830, %v833
        %v835 = vmul.f32 %v834, 1.442695
        %v836 = vpow.pop %v835
        %v837 = vsel %vm734, %v836, 0.0
        %838 = vadd.xlane.f32.xlu0 %v837
        %v839 = vpop.xlane.xlu0 %838
        %v840 = vrcp.pop %v839
        %v841 = vmul.f32 %v836, %v840
        %v842 = vpack.c.bf16 %v841, %v841
        %v843 = vpack.c.bf16 %v666, %v666
        %845 = vrot.lane.b32.xlu0 %v843, 80
        %v846 = vpop.permute.xlu0 %845
        %v848 = vsel %vm734, %v842, 0
        %vm850 = vcmask 1043456
        %v852 = vsel %vm850, %v846, 0
        %854 = vmatprep.subr.bf16.mxu0 0
        %855 = vmatpush1.bf16.msra.mxu0 %v852
        %856 = vmatprep.subr.bf16.mxu0 0
        %857 = vmatpush1.bf16.msra.mxu0 0
        %858 = vmatprep.subr.bf16.mxu0 0
        %859 = vmatpush1.bf16.msra.mxu0 0
        %860 = vmatprep.subr.bf16.mxu0 0
        %861 = vmatpush1.bf16.msra.mxu0 0
        %862 = vmatprep.subr.bf16.mxu0 0
        %863 = vmatpush1.bf16.msra.mxu0 0
        %864 = vmatprep.subr.bf16.mxu0 0
        %865 = vmatpush1.bf16.msra.mxu0 0
        %866 = vmatprep.subr.bf16.mxu0 0
        %867 = vmatpush1.bf16.msra.mxu0 0
        %868 = vmatprep.subr.bf16.mxu0 0
        %869 = vmatpush1.bf16.msra.mxu0 0
        %870 = vmatprep.subr.bf16.mxu0 0
        %871 = vmatpush1.bf16.msra.mxu0 0
        %872 = vmatprep.subr.bf16.mxu0 0
        %873 = vmatpush1.bf16.msra.mxu0 0
        %874 = vmatprep.subr.bf16.mxu0 0
        %875 = vmatpush1.bf16.msra.mxu0 0
        %876 = vmatprep.subr.bf16.mxu0 0
        %877 = vmatpush1.bf16.msra.mxu0 0
        %878 = vmatprep.subr.bf16.mxu0 0
        %879 = vmatpush1.bf16.msra.mxu0 0
        %880 = vmatprep.subr.bf16.mxu0 0
        %881 = vmatpush1.bf16.msra.mxu0 0
        %882 = vmatprep.subr.bf16.mxu0 0
        %883 = vmatpush1.bf16.msra.mxu0 0
        %884 = vmatprep.subr.bf16.mxu0 0
        %885 = vmatpush1.bf16.msra.mxu0 0
        %886 = vmatprep.mubr.bf16.mxu0 0
        %887 = vmatmul.mubr.bf16.gmra.mrb[0].mxu0 %v848
        %v888 = vpop.f32.mrb[0].mxu0
        %v889 = vadd.f32 0.0, %v888
        %v890 = vpop.f32.mrb[0].mxu0
        %v891 = vpop.f32.mrb[0].mxu0
        %v892 = vpop.f32.mrb[0].mxu0
        %893 = vdwg.mxu0
        %v894 = vpack.c.bf16 %v889, %v889
        %895 = vrot.lane.b32.xlu0 %v579, 16
        %v896 = vpop.permute.xlu0 %895
        %v898 = vmul.f32 %v666, %v896
        %899 = vrot.lane.b32.xlu0 %v581, 24
        %v900 = vpop.permute.xlu0 %899
        %v902 = vmul.f32 %v666, %v900
        %904 = vrot.lane.b32.xlu0 %v902, 120
        %v905 = vpop.permute.xlu0 %904
        %v907 = vsub.f32 %v898, %v905
        %908 = vrot.lane.b32.xlu0 %v579, 24
        %v909 = vpop.permute.xlu0 %908
        %v911 = vmul.f32 %v666, %v909
        %912 = vrot.lane.b32.xlu0 %v581, 16
        %v913 = vpop.permute.xlu0 %912
        %v915 = vmul.f32 %v666, %v913
        %917 = vrot.lane.b32.xlu0 %v915, 8
        %v918 = vpop.permute.xlu0 %917
        %v920 = vadd.f32 %v911, %v918
        %v921 = vpack.c.bf16 %v907, %v907
        %v922 = vpack.c.bf16 %v920, %v920
        %924 = vrot.lane.b32.xlu0 %v922, 104
        %v925 = vpop.permute.xlu0 %924
        %v927 = vsel %vm734, %v925, 0
        %929 = vmatprep.subr.bf16.mxu0 0
        %930 = vmatpush1.bf16.xpose.msra.mxu0 %v739
        %931 = vmatprep.subr.bf16.mxu0 0
        %932 = vmatpush1.bf16.xpose.msra.mxu0 0
        %933 = vmatprep.subr.bf16.mxu0 0
        %934 = vmatpush1.bf16.xpose.msra.mxu0 0
        %935 = vmatprep.subr.bf16.mxu0 0
        %936 = vmatpush1.bf16.xpose.msra.mxu0 0
        %937 = vmatprep.subr.bf16.mxu0 0
        %938 = vmatpush1.bf16.xpose.msra.mxu0 0
        %939 = vmatprep.subr.bf16.mxu0 0
        %940 = vmatpush1.bf16.xpose.msra.mxu0 0
        %941 = vmatprep.subr.bf16.mxu0 0
        %942 = vmatpush1.bf16.xpose.msra.mxu0 0
        %943 = vmatprep.subr.bf16.mxu0 0
        %944 = vmatpush1.bf16.xpose.msra.mxu0 0
        %945 = vmatprep.subr.bf16.mxu0 0
        %946 = vmatpush1.bf16.xpose.msra.mxu0 0
        %947 = vmatprep.subr.bf16.mxu0 0
        %948 = vmatpush1.bf16.xpose.msra.mxu0 0
        %949 = vmatprep.subr.bf16.mxu0 0
        %950 = vmatpush1.bf16.xpose.msra.mxu0 0
        %951 = vmatprep.subr.bf16.mxu0 0
        %952 = vmatpush1.bf16.xpose.msra.mxu0 0
        %953 = vmatprep.subr.bf16.mxu0 0
        %954 = vmatpush1.bf16.xpose.msra.mxu0 0
        %955 = vmatprep.subr.bf16.mxu0 0
        %956 = vmatpush1.bf16.xpose.msra.mxu0 0
        %957 = vmatprep.subr.bf16.mxu0 0
        %958 = vmatpush1.bf16.xpose.msra.mxu0 0
        %959 = vmatprep.subr.bf16.mxu0 0
        %960 = vmatpush1.bf16.xpose.msra.mxu0 0
        %961 = vmatprep.mubr.bf16.mxu0 0
        %962 = vmatmul.mubr.bf16.gmra.mrb[0].mxu0 %v927
        %v963 = vpop.f32.mrb[0].mxu0
        %v964 = vadd.f32 0.0, %v963
        %v965 = vpop.f32.mrb[0].mxu0
        %v966 = vpop.f32.mrb[0].mxu0
        %v967 = vpop.f32.mrb[0].mxu0
        %968 = vdwg.mxu0
        %970 = vrot.lane.b32.xlu0 %v921, 112
        %v971 = vpop.permute.xlu0 %970
        %v973 = vsel %vm734, %v971, 0
        %975 = vmatprep.subr.bf16.mxu0 0
        %976 = vmatpush1.bf16.xpose.msra.mxu0 %v788
        %977 = vmatprep.subr.bf16.mxu0 0
        %978 = vmatpush1.bf16.xpose.msra.mxu0 0
        %979 = vmatprep.subr.bf16.mxu0 0
        %980 = vmatpush1.bf16.xpose.msra.mxu0 0
        %981 = vmatprep.subr.bf16.mxu0 0
        %982 = vmatpush1.bf16.xpose.msra.mxu0 0
        %983 = vmatprep.subr.bf16.mxu0 0
        %984 = vmatpush1.bf16.xpose.msra.mxu0 0
        %985 = vmatprep.subr.bf16.mxu0 0
        %986 = vmatpush1.bf16.xpose.msra.mxu0 0
        %987 = vmatprep.subr.bf16.mxu0 0
        %988 = vmatpush1.bf16.xpose.msra.mxu0 0
        %989 = vmatprep.subr.bf16.mxu0 0
        %990 = vmatpush1.bf16.xpose.msra.mxu0 0
        %991 = vmatprep.subr.bf16.mxu0 0
        %992 = vmatpush1.bf16.xpose.msra.mxu0 0
        %993 = vmatprep.subr.bf16.mxu0 0
        %994 = vmatpush1.bf16.xpose.msra.mxu0 0
        %995 = vmatprep.subr.bf16.mxu0 0
        %996 = vmatpush1.bf16.xpose.msra.mxu0 0
        %997 = vmatprep.subr.bf16.mxu0 0
        %998 = vmatpush1.bf16.xpose.msra.mxu0 0
        %999 = vmatprep.subr.bf16.mxu0 0
        %1000 = vmatpush1.bf16.xpose.msra.mxu0 0
        %1001 = vmatprep.subr.bf16.mxu0 0
        %1002 = vmatpush1.bf16.xpose.msra.mxu0 0
        %1003 = vmatprep.subr.bf16.mxu0 0
        %1004 = vmatpush1.bf16.xpose.msra.mxu0 0
        %1005 = vmatprep.subr.bf16.mxu0 0
        %1006 = vmatpush1.bf16.xpose.msra.mxu0 0
        %1007 = vmatprep.mubr.bf16.mxu0 0
        %1008 = vmatmul.mubr.bf16.gmra.mrb[0].mxu0 %v973
        %v1009 = vpop.f32.mrb[0].mxu0
        %v1010 = vadd.f32 %v964, %v1009
        %v1011 = vpop.f32.mrb[0].mxu0
        %v1012 = vpop.f32.mrb[0].mxu0
        %v1013 = vpop.f32.mrb[0].mxu0
        %1014 = vdwg.mxu0
        %v1015 = vmul.f32 %v1010, 0.25
        %v1016 = vsel %vm734, %v1015, -inf
        %1017 = vmax.xlane.f32.xlu0 %v1016
        %v1018 = vpop.xlane.xlu0 %1017
        %v1019 = vsub.f32 %v1015, %v1018
        %v1020 = vmul.f32 %v1019, 1.442695
        %v1021 = vpow.pop %v1020
        %v1022 = vsel %vm734, %v1021, 0.0
        %1023 = vadd.xlane.f32.xlu0 %v1022
        %v1024 = vpop.xlane.xlu0 %1023
        %v1025 = vrcp.pop %v1024
        %v1026 = vmul.f32 %v1021, %v1025
        %v1027 = vpack.c.bf16 %v1026, %v1026
        %v1029 = vsel %vm734, %v1027, 0
        %1031 = vmatprep.subr.bf16.mxu0 0
        %1032 = vmatpush1.bf16.msra.mxu0 %v852
        %1033 = vmatprep.subr.bf16.mxu0 0
        %1034 = vmatpush1.bf16.msra.mxu0 0
        %1035 = vmatprep.subr.bf16.mxu0 0
        %1036 = vmatpush1.bf16.msra.mxu0 0
        %1037 = vmatprep.subr.bf16.mxu0 0
        %1038 = vmatpush1.bf16.msra.mxu0 0
        %1039 = vmatprep.subr.bf16.mxu0 0
        %1040 = vmatpush1.bf16.msra.mxu0 0
        %1041 = vmatprep.subr.bf16.mxu0 0
        %1042 = vmatpush1.bf16.msra.mxu0 0
        %1043 = vmatprep.subr.bf16.mxu0 0
        %1044 = vmatpush1.bf16.msra.mxu0 0
        %1045 = vmatprep.subr.bf16.mxu0 0
        %1046 = vmatpush1.bf16.msra.mxu0 0
        %1047 = vmatprep.subr.bf16.mxu0 0
        %1048 = vmatpush1.bf16.msra.mxu0 0
        %1049 = vmatprep.subr.bf16.mxu0 0
        %1050 = vmatpush1.bf16.msra.mxu0 0
        %1051 = vmatprep.subr.bf16.mxu0 0
        %1052 = vmatpush1.bf16.msra.mxu0 0
        %1053 = vmatprep.subr.bf16.mxu0 0
        %1054 = vmatpush1.bf16.msra.mxu0 0
        %1055 = vmatprep.subr.bf16.mxu0 0
        %1056 = vmatpush1.bf16.msra.mxu0 0
        %1057 = vmatprep.subr.bf16.mxu0 0
        %1058 = vmatpush1.bf16.msra.mxu0 0
        %1059 = vmatprep.subr.bf16.mxu0 0
        %1060 = vmatpush1.bf16.msra.mxu0 0
        %1061 = vmatprep.subr.bf16.mxu0 0
        %1062 = vmatpush1.bf16.msra.mxu0 0
        %1063 = vmatprep.mubr.bf16.mxu0 0
        %1064 = vmatmul.mubr.bf16.gmra.mrb[0].mxu0 %v1029
        %v1065 = vpop.f32.mrb[0].mxu0
        %v1066 = vadd.f32 0.0, %v1065
        %v1067 = vpop.f32.mrb[0].mxu0
        %v1068 = vpop.f32.mrb[0].mxu0
        %v1069 = vpop.f32.mrb[0].mxu0
        %1070 = vdwg.mxu0
        %v1071 = vpack.c.bf16 %v1066, %v1066
        %v1074 = vunpack.c.l.b16 %v674
        %v1075 = vunpack.c.l.b16 %v675
        %v1076 = vpack.c.b16 %v1075, %v1074
        %vm1078 = vcmask 130048
        %v1080 = vsel %vm1078, %v1071, 0
        %1082 = vmatprep.subr.bf16.mxu0 0
        %1083 = vmatpush1.bf16.msra.mxu0 %v1076
        %1084 = vmatprep.subr.bf16.mxu0 0
        %1085 = vmatpush1.bf16.msra.mxu0 0
        %1086 = vmatprep.subr.bf16.mxu0 0
        %1087 = vmatpush1.bf16.msra.mxu0 0
        %1088 = vmatprep.subr.bf16.mxu0 0
        %1089 = vmatpush1.bf16.msra.mxu0 0
        %1090 = vmatprep.subr.bf16.mxu0 0
        %1091 = vmatpush1.bf16.msra.mxu0 0
        %1092 = vmatprep.subr.bf16.mxu0 0
        %1093 = vmatpush1.bf16.msra.mxu0 0
        %1094 = vmatprep.subr.bf16.mxu0 0
        %1095 = vmatpush1.bf16.msra.mxu0 0
        %1096 = vmatprep.subr.bf16.mxu0 0
        %1097 = vmatpush1.bf16.msra.mxu0 0
        %1098 = vmatprep.subr.bf16.mxu0 0
        %1099 = vmatpush1.bf16.msra.mxu0 0
        %1100 = vmatprep.subr.bf16.mxu0 0
        %1101 = vmatpush1.bf16.msra.mxu0 0
        %1102 = vmatprep.subr.bf16.mxu0 0
        %1103 = vmatpush1.bf16.msra.mxu0 0
        %1104 = vmatprep.subr.bf16.mxu0 0
        %1105 = vmatpush1.bf16.msra.mxu0 0
        %1106 = vmatprep.subr.bf16.mxu0 0
        %1107 = vmatpush1.bf16.msra.mxu0 0
        %1108 = vmatprep.subr.bf16.mxu0 0
        %1109 = vmatpush1.bf16.msra.mxu0 0
        %1110 = vmatprep.subr.bf16.mxu0 0
        %1111 = vmatpush1.bf16.msra.mxu0 0
        %1112 = vmatprep.subr.bf16.mxu0 0
        %1113 = vmatpush1.bf16.msra.mxu0 0
        %1114 = vmatprep.mubr.bf16.mxu0 0
        %1115 = vmatmul.mubr.bf16.gmra.mrb[0].mxu0 %v1080
        %v1116 = vpop.f32.mrb[0].mxu0
        %v1117 = vadd.f32 0.0, %v1116
        %v1118 = vpop.f32.mrb[0].mxu0
        %v1119 = vpop.f32.mrb[0].mxu0
        %v1120 = vpop.f32.mrb[0].mxu0
        %1121 = vdwg.mxu0
        %v1124 = vunpack.c.l.b16 %v672
        %v1125 = vunpack.c.l.b16 %v673
        %v1126 = vpack.c.b16 %v1125, %v1124
        %v1129 = vsel %vm1078, %v894, 0
        %1131 = vmatprep.subr.bf16.mxu0 0
        %1132 = vmatpush1.bf16.msra.mxu0 %v1126
        %1133 = vmatprep.subr.bf16.mxu0 0
        %1134 = vmatpush1.bf16.msra.mxu0 0
        %1135 = vmatprep.subr.bf16.mxu0 0
        %1136 = vmatpush1.bf16.msra.mxu0 0
        %1137 = vmatprep.subr.bf16.mxu0 0
        %1138 = vmatpush1.bf16.msra.mxu0 0
        %1139 = vmatprep.subr.bf16.mxu0 0
        %1140 = vmatpush1.bf16.msra.mxu0 0
        %1141 = vmatprep.subr.bf16.mxu0 0
        %1142 = vmatpush1.bf16.msra.mxu0 0
        %1143 = vmatprep.subr.bf16.mxu0 0
        %1144 = vmatpush1.bf16.msra.mxu0 0
        %1145 = vmatprep.subr.bf16.mxu0 0
        %1146 = vmatpush1.bf16.msra.mxu0 0
        %1147 = vmatprep.subr.bf16.mxu0 0
        %1148 = vmatpush1.bf16.msra.mxu0 0
        %1149 = vmatprep.subr.bf16.mxu0 0
        %1150 = vmatpush1.bf16.msra.mxu0 0
        %1151 = vmatprep.subr.bf16.mxu0 0
        %1152 = vmatpush1.bf16.msra.mxu0 0
        %1153 = vmatprep.subr.bf16.mxu0 0
        %1154 = vmatpush1.bf16.msra.mxu0 0
        %1155 = vmatprep.subr.bf16.mxu0 0
        %1156 = vmatpush1.bf16.msra.mxu0 0
        %1157 = vmatprep.subr.bf16.mxu0 0
        %1158 = vmatpush1.bf16.msra.mxu0 0
        %1159 = vmatprep.subr.bf16.mxu0 0
        %1160 = vmatpush1.bf16.msra.mxu0 0
        %1161 = vmatprep.subr.bf16.mxu0 0
        %1162 = vmatpush1.bf16.msra.mxu0 0
        %1163 = vmatprep.mubr.bf16.mxu0 0
        %1164 = vmatmul.mubr.bf16.gmra.mrb[0].mxu0 %v1129
        %v1165 = vpop.f32.mrb[0].mxu0
        %v1166 = vadd.f32 %v1117, %v1165
        %v1167 = vpop.f32.mrb[0].mxu0
        %v1168 = vpop.f32.mrb[0].mxu0
        %v1169 = vpop.f32.mrb[0].mxu0
        %1170 = vdwg.mxu0
        %1172 = vrot.lane.b32.xlu0 %v580, 32
        %v1173 = vpop.permute.xlu0 %1172
        %v1175 = vmul.f32 %v669, %v1173
        %1177 = vrot.lane.b32.xlu0 %v582, 40
        %v1178 = vpop.permute.xlu0 %1177
        %v1180 = vmul.f32 %v669, %v1178
        %1182 = vrot.lane.b32.xlu0 %v1180, 120
        %v1183 = vpop.permute.xlu0 %1182
        %v1185 = vsub.f32 %v1175, %v1183
        %1186 = vrot.lane.b32.xlu0 %v580, 40
        %v1187 = vpop.permute.xlu0 %1186
        %v1189 = vmul.f32 %v669, %v1187
        %1190 = vrot.lane.b32.xlu0 %v582, 32
        %v1191 = vpop.permute.xlu0 %1190
        %v1193 = vmul.f32 %v669, %v1191
        %1195 = vrot.lane.b32.xlu0 %v1193, 8
        %v1196 = vpop.permute.xlu0 %1195
        %v1198 = vadd.f32 %v1189, %v1196
        %v1199 = vmul.f32 %v669, %v580
        %1200 = vrot.lane.b32.xlu0 %v582, 8
        %v1201 = vpop.permute.xlu0 %1200
        %v1203 = vmul.f32 %v669, %v1201
        %1205 = vrot.lane.b32.xlu0 %v1203, 120
        %v1206 = vpop.permute.xlu0 %1205
        %v1208 = vsub.f32 %v1199, %v1206
        %1209 = vrot.lane.b32.xlu0 %v580, 8
        %v1210 = vpop.permute.xlu0 %1209
        %v1212 = vmul.f32 %v669, %v1210
        %v1213 = vmul.f32 %v669, %v582
        %1215 = vrot.lane.b32.xlu0 %v1213, 8
        %v1216 = vpop.permute.xlu0 %1215
        %v1218 = vadd.f32 %v1212, %v1216
        %v1219 = vpack.c.bf16 %v1208, %v1208
        %v1220 = vpack.c.bf16 %v1185, %v1185
        %v1221 = vpack.c.bf16 %v1218, %v1218
        %v1222 = vpack.c.bf16 %v1198, %v1198
        %1224 = vrot.lane.b32.xlu0 %v1221, 120
        %v1225 = vpop.permute.xlu0 %1224
        %1227 = vrot.lane.b32.xlu0 %v1222, 88
        %v1228 = vpop.permute.xlu0 %1227
        %v1230 = vsel %vm734, %v1225, 0
        %v1233 = vsel %vm734, %v1228, 0
        %1235 = vmatprep.subr.bf16.mxu0 0
        %1236 = vmatpush1.bf16.xpose.msra.mxu0 %v1233
        %1237 = vmatprep.subr.bf16.mxu0 0
        %1238 = vmatpush1.bf16.xpose.msra.mxu0 0
        %1239 = vmatprep.subr.bf16.mxu0 0
        %1240 = vmatpush1.bf16.xpose.msra.mxu0 0
        %1241 = vmatprep.subr.bf16.mxu0 0
        %1242 = vmatpush1.bf16.xpose.msra.mxu0 0
        %1243 = vmatprep.subr.bf16.mxu0 0
        %1244 = vmatpush1.bf16.xpose.msra.mxu0 0
        %1245 = vmatprep.subr.bf16.mxu0 0
        %1246 = vmatpush1.bf16.xpose.msra.mxu0 0
        %1247 = vmatprep.subr.bf16.mxu0 0
        %1248 = vmatpush1.bf16.xpose.msra.mxu0 0
        %1249 = vmatprep.subr.bf16.mxu0 0
        %1250 = vmatpush1.bf16.xpose.msra.mxu0 0
        %1251 = vmatprep.subr.bf16.mxu0 0
        %1252 = vmatpush1.bf16.xpose.msra.mxu0 0
        %1253 = vmatprep.subr.bf16.mxu0 0
        %1254 = vmatpush1.bf16.xpose.msra.mxu0 0
        %1255 = vmatprep.subr.bf16.mxu0 0
        %1256 = vmatpush1.bf16.xpose.msra.mxu0 0
        %1257 = vmatprep.subr.bf16.mxu0 0
        %1258 = vmatpush1.bf16.xpose.msra.mxu0 0
        %1259 = vmatprep.subr.bf16.mxu0 0
        %1260 = vmatpush1.bf16.xpose.msra.mxu0 0
        %1261 = vmatprep.subr.bf16.mxu0 0
        %1262 = vmatpush1.bf16.xpose.msra.mxu0 0
        %1263 = vmatprep.subr.bf16.mxu0 0
        %1264 = vmatpush1.bf16.xpose.msra.mxu0 0
        %1265 = vmatprep.subr.bf16.mxu0 0
        %1266 = vmatpush1.bf16.xpose.msra.mxu0 0
        %1267 = vmatprep.mubr.bf16.mxu0 0
        %1268 = vmatmul.mubr.bf16.gmra.mrb[0].mxu0 %v1230
        %v1269 = vpop.f32.mrb[0].mxu0
        %v1270 = vadd.f32 0.0, %v1269
        %v1271 = vpop.f32.mrb[0].mxu0
        %v1272 = vpop.f32.mrb[0].mxu0
        %v1273 = vpop.f32.mrb[0].mxu0
        %1274 = vdwg.mxu0
        %1276 = vrot.lane.b32.xlu0 %v1220, 96
        %v1277 = vpop.permute.xlu0 %1276
        %v1279 = vsel %vm734, %v1219, 0
        %v1282 = vsel %vm734, %v1277, 0
        %1284 = vmatprep.subr.bf16.mxu0 0
        %1285 = vmatpush1.bf16.xpose.msra.mxu0 %v1282
        %1286 = vmatprep.subr.bf16.mxu0 0
        %1287 = vmatpush1.bf16.xpose.msra.mxu0 0
        %1288 = vmatprep.subr.bf16.mxu0 0
        %1289 = vmatpush1.bf16.xpose.msra.mxu0 0
        %1290 = vmatprep.subr.bf16.mxu0 0
        %1291 = vmatpush1.bf16.xpose.msra.mxu0 0
        %1292 = vmatprep.subr.bf16.mxu0 0
        %1293 = vmatpush1.bf16.xpose.msra.mxu0 0
        %1294 = vmatprep.subr.bf16.mxu0 0
        %1295 = vmatpush1.bf16.xpose.msra.mxu0 0
        %1296 = vmatprep.subr.bf16.mxu0 0
        %1297 = vmatpush1.bf16.xpose.msra.mxu0 0
        %1298 = vmatprep.subr.bf16.mxu0 0
        %1299 = vmatpush1.bf16.xpose.msra.mxu0 0
        %1300 = vmatprep.subr.bf16.mxu0 0
        %1301 = vmatpush1.bf16.xpose.msra.mxu0 0
        %1302 = vmatprep.subr.bf16.mxu0 0
        %1303 = vmatpush1.bf16.xpose.msra.mxu0 0
        %1304 = vmatprep.subr.bf16.mxu0 0
        %1305 = vmatpush1.bf16.xpose.msra.mxu0 0
        %1306 = vmatprep.subr.bf16.mxu0 0
        %1307 = vmatpush1.bf16.xpose.msra.mxu0 0
        %1308 = vmatprep.subr.bf16.mxu0 0
        %1309 = vmatpush1.bf16.xpose.msra.mxu0 0
        %1310 = vmatprep.subr.bf16.mxu0 0
        %1311 = vmatpush1.bf16.xpose.msra.mxu0 0
        %1312 = vmatprep.subr.bf16.mxu0 0
        %1313 = vmatpush1.bf16.xpose.msra.mxu0 0
        %1314 = vmatprep.subr.bf16.mxu0 0
        %1315 = vmatpush1.bf16.xpose.msra.mxu0 0
        %1316 = vmatprep.mubr.bf16.mxu0 0
        %1317 = vmatmul.mubr.bf16.gmra.mrb[0].mxu0 %v1279
        %v1318 = vpop.f32.mrb[0].mxu0
        %v1319 = vadd.f32 %v1270, %v1318
        %v1320 = vpop.f32.mrb[0].mxu0
        %v1321 = vpop.f32.mrb[0].mxu0
        %v1322 = vpop.f32.mrb[0].mxu0
        %1323 = vdwg.mxu0
        %v1324 = vmul.f32 %v1319, 0.25
        %v1325 = vsel %vm734, %v1324, -inf
        %1326 = vmax.xlane.f32.xlu0 %v1325
        %v1327 = vpop.xlane.xlu0 %1326
        %v1328 = vsub.f32 %v1324, %v1327
        %v1329 = vmul.f32 %v1328, 1.442695
        %v1330 = vpow.pop %v1329
        %v1331 = vsel %vm734, %v1330, 0.0
        %1332 = vadd.xlane.f32.xlu0 %v1331
        %v1333 = vpop.xlane.xlu0 %1332
        %v1334 = vrcp.pop %v1333
        %v1335 = vmul.f32 %v1330, %v1334
        %v1336 = vpack.c.bf16 %v1335, %v1335
        %v1337 = vpack.c.bf16 %v669, %v669
        %1339 = vrot.lane.b32.xlu0 %v1337, 80
        %v1340 = vpop.permute.xlu0 %1339
        %v1342 = vsel %vm734, %v1336, 0
        %v1345 = vsel %vm850, %v1340, 0
        %1347 = vmatprep.subr.bf16.mxu0 0
        %1348 = vmatpush1.bf16.msra.mxu0 %v1345
        %1349 = vmatprep.subr.bf16.mxu0 0
        %1350 = vmatpush1.bf16.msra.mxu0 0
        %1351 = vmatprep.subr.bf16.mxu0 0
        %1352 = vmatpush1.bf16.msra.mxu0 0
        %1353 = vmatprep.subr.bf16.mxu0 0
        %1354 = vmatpush1.bf16.msra.mxu0 0
        %1355 = vmatprep.subr.bf16.mxu0 0
        %1356 = vmatpush1.bf16.msra.mxu0 0
        %1357 = vmatprep.subr.bf16.mxu0 0
        %1358 = vmatpush1.bf16.msra.mxu0 0
        %1359 = vmatprep.subr.bf16.mxu0 0
        %1360 = vmatpush1.bf16.msra.mxu0 0
        %1361 = vmatprep.subr.bf16.mxu0 0
        %1362 = vmatpush1.bf16.msra.mxu0 0
        %1363 = vmatprep.subr.bf16.mxu0 0
        %1364 = vmatpush1.bf16.msra.mxu0 0
        %1365 = vmatprep.subr.bf16.mxu0 0
        %1366 = vmatpush1.bf16.msra.mxu0 0
        %1367 = vmatprep.subr.bf16.mxu0 0
        %1368 = vmatpush1.bf16.msra.mxu0 0
        %1369 = vmatprep.subr.bf16.mxu0 0
        %1370 = vmatpush1.bf16.msra.mxu0 0
        %1371 = vmatprep.subr.bf16.mxu0 0
        %1372 = vmatpush1.bf16.msra.mxu0 0
        %1373 = vmatprep.subr.bf16.mxu0 0
        %1374 = vmatpush1.bf16.msra.mxu0 0
        %1375 = vmatprep.subr.bf16.mxu0 0
        %1376 = vmatpush1.bf16.msra.mxu0 0
        %1377 = vmatprep.subr.bf16.mxu0 0
        %1378 = vmatpush1.bf16.msra.mxu0 0
        %1379 = vmatprep.mubr.bf16.mxu0 0
        %1380 = vmatmul.mubr.bf16.gmra.mrb[0].mxu0 %v1342
        %v1381 = vpop.f32.mrb[0].mxu0
        %v1382 = vadd.f32 0.0, %v1381
        %v1383 = vpop.f32.mrb[0].mxu0
        %v1384 = vpop.f32.mrb[0].mxu0
        %v1385 = vpop.f32.mrb[0].mxu0
        %1386 = vdwg.mxu0
        %v1387 = vpack.c.bf16 %v1382, %v1382
        %1388 = vrot.lane.b32.xlu0 %v580, 16
        %v1389 = vpop.permute.xlu0 %1388
        %v1391 = vmul.f32 %v669, %v1389
        %1392 = vrot.lane.b32.xlu0 %v582, 24
        %v1393 = vpop.permute.xlu0 %1392
        %v1395 = vmul.f32 %v669, %v1393
        %1397 = vrot.lane.b32.xlu0 %v1395, 120
        %v1398 = vpop.permute.xlu0 %1397
        %v1400 = vsub.f32 %v1391, %v1398
        %1401 = vrot.lane.b32.xlu0 %v580, 24
        %v1402 = vpop.permute.xlu0 %1401
        %v1404 = vmul.f32 %v669, %v1402
        %1405 = vrot.lane.b32.xlu0 %v582, 16
        %v1406 = vpop.permute.xlu0 %1405
        %v1408 = vmul.f32 %v669, %v1406
        %1410 = vrot.lane.b32.xlu0 %v1408, 8
        %v1411 = vpop.permute.xlu0 %1410
        %v1413 = vadd.f32 %v1404, %v1411
        %v1414 = vpack.c.bf16 %v1400, %v1400
        %v1415 = vpack.c.bf16 %v1413, %v1413
        %1417 = vrot.lane.b32.xlu0 %v1415, 104
        %v1418 = vpop.permute.xlu0 %1417
        %v1420 = vsel %vm734, %v1418, 0
        %1422 = vmatprep.subr.bf16.mxu0 0
        %1423 = vmatpush1.bf16.xpose.msra.mxu0 %v1233
        %1424 = vmatprep.subr.bf16.mxu0 0
        %1425 = vmatpush1.bf16.xpose.msra.mxu0 0
        %1426 = vmatprep.subr.bf16.mxu0 0
        %1427 = vmatpush1.bf16.xpose.msra.mxu0 0
        %1428 = vmatprep.subr.bf16.mxu0 0
        %1429 = vmatpush1.bf16.xpose.msra.mxu0 0
        %1430 = vmatprep.subr.bf16.mxu0 0
        %1431 = vmatpush1.bf16.xpose.msra.mxu0 0
        %1432 = vmatprep.subr.bf16.mxu0 0
        %1433 = vmatpush1.bf16.xpose.msra.mxu0 0
        %1434 = vmatprep.subr.bf16.mxu0 0
        %1435 = vmatpush1.bf16.xpose.msra.mxu0 0
        %1436 = vmatprep.subr.bf16.mxu0 0
        %1437 = vmatpush1.bf16.xpose.msra.mxu0 0
        %1438 = vmatprep.subr.bf16.mxu0 0
        %1439 = vmatpush1.bf16.xpose.msra.mxu0 0
        %1440 = vmatprep.subr.bf16.mxu0 0
        %1441 = vmatpush1.bf16.xpose.msra.mxu0 0
        %1442 = vmatprep.subr.bf16.mxu0 0
        %1443 = vmatpush1.bf16.xpose.msra.mxu0 0
        %1444 = vmatprep.subr.bf16.mxu0 0
        %1445 = vmatpush1.bf16.xpose.msra.mxu0 0
        %1446 = vmatprep.subr.bf16.mxu0 0
        %1447 = vmatpush1.bf16.xpose.msra.mxu0 0
        %1448 = vmatprep.subr.bf16.mxu0 0
        %1449 = vmatpush1.bf16.xpose.msra.mxu0 0
        %1450 = vmatprep.subr.bf16.mxu0 0
        %1451 = vmatpush1.bf16.xpose.msra.mxu0 0
        %1452 = vmatprep.subr.bf16.mxu0 0
        %1453 = vmatpush1.bf16.xpose.msra.mxu0 0
        %1454 = vmatprep.mubr.bf16.mxu0 0
        %1455 = vmatmul.mubr.bf16.gmra.mrb[0].mxu0 %v1420
        %v1456 = vpop.f32.mrb[0].mxu0
        %v1457 = vadd.f32 0.0, %v1456
        %v1458 = vpop.f32.mrb[0].mxu0
        %v1459 = vpop.f32.mrb[0].mxu0
        %v1460 = vpop.f32.mrb[0].mxu0
        %1461 = vdwg.mxu0
        %1463 = vrot.lane.b32.xlu0 %v1414, 112
        %v1464 = vpop.permute.xlu0 %1463
        %v1466 = vsel %vm734, %v1464, 0
        %1468 = vmatprep.subr.bf16.mxu0 0
        %1469 = vmatpush1.bf16.xpose.msra.mxu0 %v1282
        %1470 = vmatprep.subr.bf16.mxu0 0
        %1471 = vmatpush1.bf16.xpose.msra.mxu0 0
        %1472 = vmatprep.subr.bf16.mxu0 0
        %1473 = vmatpush1.bf16.xpose.msra.mxu0 0
        %1474 = vmatprep.subr.bf16.mxu0 0
        %1475 = vmatpush1.bf16.xpose.msra.mxu0 0
        %1476 = vmatprep.subr.bf16.mxu0 0
        %1477 = vmatpush1.bf16.xpose.msra.mxu0 0
        %1478 = vmatprep.subr.bf16.mxu0 0
        %1479 = vmatpush1.bf16.xpose.msra.mxu0 0
        %1480 = vmatprep.subr.bf16.mxu0 0
        %1481 = vmatpush1.bf16.xpose.msra.mxu0 0
        %1482 = vmatprep.subr.bf16.mxu0 0
        %1483 = vmatpush1.bf16.xpose.msra.mxu0 0
        %1484 = vmatprep.subr.bf16.mxu0 0
        %1485 = vmatpush1.bf16.xpose.msra.mxu0 0
        %1486 = vmatprep.subr.bf16.mxu0 0
        %1487 = vmatpush1.bf16.xpose.msra.mxu0 0
        %1488 = vmatprep.subr.bf16.mxu0 0
        %1489 = vmatpush1.bf16.xpose.msra.mxu0 0
        %1490 = vmatprep.subr.bf16.mxu0 0
        %1491 = vmatpush1.bf16.xpose.msra.mxu0 0
        %1492 = vmatprep.subr.bf16.mxu0 0
        %1493 = vmatpush1.bf16.xpose.msra.mxu0 0
        %1494 = vmatprep.subr.bf16.mxu0 0
        %1495 = vmatpush1.bf16.xpose.msra.mxu0 0
        %1496 = vmatprep.subr.bf16.mxu0 0
        %1497 = vmatpush1.bf16.xpose.msra.mxu0 0
        %1498 = vmatprep.subr.bf16.mxu0 0
        %1499 = vmatpush1.bf16.xpose.msra.mxu0 0
        %1500 = vmatprep.mubr.bf16.mxu0 0
        %1501 = vmatmul.mubr.bf16.gmra.mrb[0].mxu0 %v1466
        %v1502 = vpop.f32.mrb[0].mxu0
        %v1503 = vadd.f32 %v1457, %v1502
        %v1504 = vpop.f32.mrb[0].mxu0
        %v1505 = vpop.f32.mrb[0].mxu0
        %v1506 = vpop.f32.mrb[0].mxu0
        %1507 = vdwg.mxu0
        %v1508 = vmul.f32 %v1503, 0.25
        %v1509 = vsel %vm734, %v1508, -inf
        %1510 = vmax.xlane.f32.xlu0 %v1509
        %v1511 = vpop.xlane.xlu0 %1510
        %v1512 = vsub.f32 %v1508, %v1511
        %v1513 = vmul.f32 %v1512, 1.442695
        %v1514 = vpow.pop %v1513
        %v1515 = vsel %vm734, %v1514, 0.0
        %1516 = vadd.xlane.f32.xlu0 %v1515
        %v1517 = vpop.xlane.xlu0 %1516
        %v1518 = vrcp.pop %v1517
        %v1519 = vmul.f32 %v1514, %v1518
        %v1520 = vpack.c.bf16 %v1519, %v1519
        %v1522 = vsel %vm734, %v1520, 0
        %1524 = vmatprep.subr.bf16.mxu0 0
        %1525 = vmatpush1.bf16.msra.mxu0 %v1345
        %1526 = vmatprep.subr.bf16.mxu0 0
        %1527 = vmatpush1.bf16.msra.mxu0 0
        %1528 = vmatprep.subr.bf16.mxu0 0
        %1529 = vmatpush1.bf16.msra.mxu0 0
        %1530 = vmatprep.subr.bf16.mxu0 0
        %1531 = vmatpush1.bf16.msra.mxu0 0
        %1532 = vmatprep.subr.bf16.mxu0 0
        %1533 = vmatpush1.bf16.msra.mxu0 0
        %1534 = vmatprep.subr.bf16.mxu0 0
        %1535 = vmatpush1.bf16.msra.mxu0 0
        %1536 = vmatprep.subr.bf16.mxu0 0
        %1537 = vmatpush1.bf16.msra.mxu0 0
        %1538 = vmatprep.subr.bf16.mxu0 0
        %1539 = vmatpush1.bf16.msra.mxu0 0
        %1540 = vmatprep.subr.bf16.mxu0 0
        %1541 = vmatpush1.bf16.msra.mxu0 0
        %1542 = vmatprep.subr.bf16.mxu0 0
        %1543 = vmatpush1.bf16.msra.mxu0 0
        %1544 = vmatprep.subr.bf16.mxu0 0
        %1545 = vmatpush1.bf16.msra.mxu0 0
        %1546 = vmatprep.subr.bf16.mxu0 0
        %1547 = vmatpush1.bf16.msra.mxu0 0
        %1548 = vmatprep.subr.bf16.mxu0 0
        %1549 = vmatpush1.bf16.msra.mxu0 0
        %1550 = vmatprep.subr.bf16.mxu0 0
        %1551 = vmatpush1.bf16.msra.mxu0 0
        %1552 = vmatprep.subr.bf16.mxu0 0
        %1553 = vmatpush1.bf16.msra.mxu0 0
        %1554 = vmatprep.subr.bf16.mxu0 0
        %1555 = vmatpush1.bf16.msra.mxu0 0
        %1556 = vmatprep.mubr.bf16.mxu0 0
        %1557 = vmatmul.mubr.bf16.gmra.mrb[0].mxu0 %v1522
        %v1558 = vpop.f32.mrb[0].mxu0
        %v1559 = vadd.f32 0.0, %v1558
        %v1560 = vpop.f32.mrb[0].mxu0
        %v1561 = vpop.f32.mrb[0].mxu0
        %v1562 = vpop.f32.mrb[0].mxu0
        %1563 = vdwg.mxu0
        %v1564 = vpack.c.bf16 %v1559, %v1559
        %v1566 = vsel %vm1078, %v1564, 0
        %1568 = vmatprep.subr.bf16.mxu0 0
        %1569 = vmatpush1.bf16.msra.mxu0 %v1076
        %1570 = vmatprep.subr.bf16.mxu0 0
        %1571 = vmatpush1.bf16.msra.mxu0 0
        %1572 = vmatprep.subr.bf16.mxu0 0
        %1573 = vmatpush1.bf16.msra.mxu0 0
        %1574 = vmatprep.subr.bf16.mxu0 0
        %1575 = vmatpush1.bf16.msra.mxu0 0
        %1576 = vmatprep.subr.bf16.mxu0 0
        %1577 = vmatpush1.bf16.msra.mxu0 0
        %1578 = vmatprep.subr.bf16.mxu0 0
        %1579 = vmatpush1.bf16.msra.mxu0 0
        %1580 = vmatprep.subr.bf16.mxu0 0
        %1581 = vmatpush1.bf16.msra.mxu0 0
        %1582 = vmatprep.subr.bf16.mxu0 0
        %1583 = vmatpush1.bf16.msra.mxu0 0
        %1584 = vmatprep.subr.bf16.mxu0 0
        %1585 = vmatpush1.bf16.msra.mxu0 0
        %1586 = vmatprep.subr.bf16.mxu0 0
        %1587 = vmatpush1.bf16.msra.mxu0 0
        %1588 = vmatprep.subr.bf16.mxu0 0
        %1589 = vmatpush1.bf16.msra.mxu0 0
        %1590 = vmatprep.subr.bf16.mxu0 0
        %1591 = vmatpush1.bf16.msra.mxu0 0
        %1592 = vmatprep.subr.bf16.mxu0 0
        %1593 = vmatpush1.bf16.msra.mxu0 0
        %1594 = vmatprep.subr.bf16.mxu0 0
        %1595 = vmatpush1.bf16.msra.mxu0 0
        %1596 = vmatprep.subr.bf16.mxu0 0
        %1597 = vmatpush1.bf16.msra.mxu0 0
        %1598 = vmatprep.subr.bf16.mxu0 0
        %1599 = vmatpush1.bf16.msra.mxu0 0
        %1600 = vmatprep.mubr.bf16.mxu0 0
        %1601 = vmatmul.mubr.bf16.gmra.mrb[0].mxu0 %v1566
        %v1602 = vpop.f32.mrb[0].mxu0
        %v1603 = vadd.f32 0.0, %v1602
        %v1604 = vpop.f32.mrb[0].mxu0
        %v1605 = vpop.f32.mrb[0].mxu0
        %v1606 = vpop.f32.mrb[0].mxu0
        %1607 = vdwg.mxu0
        %v1609 = vsel %vm1078, %v1387, 0
        %1611 = vmatprep.subr.bf16.mxu0 0
        %1612 = vmatpush1.bf16.msra.mxu0 %v1126
        %1613 = vmatprep.subr.bf16.mxu0 0
        %1614 = vmatpush1.bf16.msra.mxu0 0
        %1615 = vmatprep.subr.bf16.mxu0 0
        %1616 = vmatpush1.bf16.msra.mxu0 0
        %1617 = vmatprep.subr.bf16.mxu0 0
        %1618 = vmatpush1.bf16.msra.mxu0 0
        %1619 = vmatprep.subr.bf16.mxu0 0
        %1620 = vmatpush1.bf16.msra.mxu0 0
        %1621 = vmatprep.subr.bf16.mxu0 0
        %1622 = vmatpush1.bf16.msra.mxu0 0
        %1623 = vmatprep.subr.bf16.mxu0 0
        %1624 = vmatpush1.bf16.msra.mxu0 0
        %1625 = vmatprep.subr.bf16.mxu0 0
        %1626 = vmatpush1.bf16.msra.mxu0 0
        %1627 = vmatprep.subr.bf16.mxu0 0
        %1628 = vmatpush1.bf16.msra.mxu0 0
        %1629 = vmatprep.subr.bf16.mxu0 0
        %1630 = vmatpush1.bf16.msra.mxu0 0
        %1631 = vmatprep.subr.bf16.mxu0 0
        %1632 = vmatpush1.bf16.msra.mxu0 0
        %1633 = vmatprep.subr.bf16.mxu0 0
        %1634 = vmatpush1.bf16.msra.mxu0 0
        %1635 = vmatprep.subr.bf16.mxu0 0
        %1636 = vmatpush1.bf16.msra.mxu0 0
        %1637 = vmatprep.subr.bf16.mxu0 0
        %1638 = vmatpush1.bf16.msra.mxu0 0
        %1639 = vmatprep.subr.bf16.mxu0 0
        %1640 = vmatpush1.bf16.msra.mxu0 0
        %1641 = vmatprep.subr.bf16.mxu0 0
        %1642 = vmatpush1.bf16.msra.mxu0 0
        %1643 = vmatprep.mubr.bf16.mxu0 0
        %1644 = vmatmul.mubr.bf16.gmra.mrb[0].mxu0 %v1609
        %v1645 = vpop.f32.mrb[0].mxu0
        %v1646 = vadd.f32 %v1603, %v1645
        %v1647 = vpop.f32.mrb[0].mxu0
        %v1648 = vpop.f32.mrb[0].mxu0
        %v1649 = vpop.f32.mrb[0].mxu0
        %1650 = vdwg.mxu0
        %v1651 = vadd.f32 %v577, %v1166
        %v1652 = vadd.f32 %v578, %v1646
        %v1653 = vld [vmem:[%s504] sm:$0x1]
        %v1654 = vmul.f32 %v1651, %v1651
        %v1655 = vmul.f32 %v1652, %v1652
        %v1656 = vsel %vm586, %v1654, 0.0
        %1657 = vadd.xlane.f32.xlu0 %v1656
        %v1658 = vpop.xlane.xlu0 %1657
        %v1659 = vsel %vm586, %v1655, 0.0
        %1660 = vadd.xlane.f32.xlu0 %v1659
        %v1661 = vpop.xlane.xlu0 %1660
        %v1662 = vmul.f32 %v1658, %v593
        %v1663 = vmul.f32 %v1661, %v593
        %v1664 = vadd.f32 %v1662, 1e-06
        %v1665 = vadd.f32 %v1663, 1e-06
        %v1666 = vrsqrt.pop %v1664
        %v1667 = vrsqrt.pop %v1665
        %v1668 = vmul.f32 %v1651, %v1666
        %v1669 = vmul.f32 %v1652, %v1667
        %v1670 = vadd.f32 %v1653, 1.0
        %v1672 = vlaneseq
        %v1673 = vshrl.u32 %v1672, 7
        %v1674 = vsub.s32 0, %v1673
        %v1675 = vrot.slane %v1670, %v1674
        %v1677 = vmul.f32 %v1668, %v1675
        %v1678 = vmul.f32 %v1669, %v1675
        %v1679 = vld [vmem:[%s509] sm:$0xf]
        %v1680 = vld [vmem:[%s509 + $0x4] sm:$0xf]
        %v1681 = vld [vmem:[%s509 + $0x8] sm:$0xf]
        %v1682 = vld [vmem:[%s509 + $0xc] sm:$0xf]
        %v1683 = vpack.c.bf16 %v1678, %v1677
        %v1688 = vunpack.c.l.b16 %v1679
        %v1689 = vunpack.c.l.b16 %v1680
        %v1690 = vunpack.c.l.b16 %v1681
        %v1691 = vunpack.c.l.b16 %v1682
        %v1692 = vpack.c.b16 %v1689, %v1688
        %v1693 = vpack.c.b16 %v1691, %v1690
        %v1697 = vsel %vm586, %v1683, 0
        %1699 = vmatprep.subr.bf16.mxu0 0
        %1700 = vmatpush1.bf16.msra.mxu0 %v1692
        %1701 = vmatprep.subr.bf16.mxu0 0
        %1702 = vmatpush1.bf16.msra.mxu0 %v1693
        %1703 = vmatprep.subr.bf16.mxu0 0
        %1704 = vmatpush1.bf16.msra.mxu0 0
        %1705 = vmatprep.subr.bf16.mxu0 0
        %1706 = vmatpush1.bf16.msra.mxu0 0
        %1707 = vmatprep.subr.bf16.mxu0 0
        %1708 = vmatpush1.bf16.msra.mxu0 0
        %1709 = vmatprep.subr.bf16.mxu0 0
        %1710 = vmatpush1.bf16.msra.mxu0 0
        %1711 = vmatprep.subr.bf16.mxu0 0
        %1712 = vmatpush1.bf16.msra.mxu0 0
        %1713 = vmatprep.subr.bf16.mxu0 0
        %1714 = vmatpush1.bf16.msra.mxu0 0
        %1715 = vmatprep.subr.bf16.mxu0 0
        %1716 = vmatpush1.bf16.msra.mxu0 0
        %1717 = vmatprep.subr.bf16.mxu0 0
        %1718 = vmatpush1.bf16.msra.mxu0 0
        %1719 = vmatprep.subr.bf16.mxu0 0
        %1720 = vmatpush1.bf16.msra.mxu0 0
        %1721 = vmatprep.subr.bf16.mxu0 0
        %1722 = vmatpush1.bf16.msra.mxu0 0
        %1723 = vmatprep.subr.bf16.mxu0 0
        %1724 = vmatpush1.bf16.msra.mxu0 0
        %1725 = vmatprep.subr.bf16.mxu0 0
        %1726 = vmatpush1.bf16.msra.mxu0 0
        %1727 = vmatprep.subr.bf16.mxu0 0
        %1728 = vmatpush1.bf16.msra.mxu0 0
        %1729 = vmatprep.subr.bf16.mxu0 0
        %1730 = vmatpush1.bf16.msra.mxu0 0
        %1731 = vmatprep.mubr.bf16.mxu0 0
        %1732 = vmatmul.mubr.bf16.gmra.mrb[0].mxu0 %v1697
        %v1733 = vpop.f32.mrb[0].mxu0
        %v1734 = vadd.f32 0.0, %v1733
        %v1735 = vpop.f32.mrb[0].mxu0
        %v1736 = vpop.f32.mrb[0].mxu0
        %v1737 = vadd.f32 0.0, %v1736
        %v1738 = vpop.f32.mrb[0].mxu0
        %1739 = vdwg.mxu0
        %v1740 = vmul.f32 %v1734, %v1734
        %v1741 = vmul.f32 %v1737, %v1737
        %v1742 = vmul.f32 %v1734, %v1740
        %v1743 = vmul.f32 %v1737, %v1741
        %v1744 = vmul.f32 %v1742, 0.044715
        %v1745 = vmul.f32 %v1743, 0.044715
        %v1746 = vadd.f32 %v1734, %v1744
        %v1747 = vadd.f32 %v1737, %v1745
        %v1748 = vmul.f32 %v1746, 0.7978846
        %v1749 = vmul.f32 %v1747, 0.7978846
        %v1750 = vtanh.pop %v1748
        %v1751 = vtanh.pop %v1749
        %v1752 = vadd.f32 %v1750, 1.0
        %v1753 = vadd.f32 %v1751, 1.0
        %v1754 = vmul.f32 %v1752, 0.5
        %v1755 = vmul.f32 %v1753, 0.5
        %v1756 = vmul.f32 %v1734, %v1754
        %v1757 = vmul.f32 %v1737, %v1755
        %1760 = vrot.lane.b32.xlu0 %v1734, 64
        %v1761 = vpop.permute.xlu0 %1760
        %1762 = vrot.lane.b32.xlu0 %v1737, 64
        %v1763 = vpop.permute.xlu0 %1762
        %v1766 = vmul.f32 %v1756, %v1761
        %v1767 = vmul.f32 %v1757, %v1763
        %v1768 = vld [vmem:[%s514] sm:$0xf]
        %v1769 = vld [vmem:[%s514 + $0x4] sm:$0xf]
        %v1770 = vld [vmem:[%s514 + $0x8] sm:$0xf]
        %v1771 = vld [vmem:[%s514 + $0xc] sm:$0xf]
        %v1772 = vld [vmem:[%s514 + $0x10] sm:$0xf]
        %v1773 = vld [vmem:[%s514 + $0x14] sm:$0xf]
        %v1774 = vld [vmem:[%s514 + $0x18] sm:$0xf]
        %v1775 = vld [vmem:[%s514 + $0x1c] sm:$0xf]
        %v1776 = vpack.c.bf16 %v1767, %v1766
        %v1785 = vunpack.c.l.b16 %v1768
        %v1786 = vunpack.c.l.b16 %v1769
        %v1787 = vunpack.c.l.b16 %v1770
        %v1788 = vunpack.c.l.b16 %v1771
        %v1789 = vunpack.c.l.b16 %v1772
        %v1790 = vunpack.c.l.b16 %v1773
        %v1791 = vunpack.c.l.b16 %v1774
        %v1792 = vunpack.c.l.b16 %v1775
        %v1793 = vpack.c.b16 %v1786, %v1785
        %v1794 = vpack.c.b16 %v1788, %v1787
        %v1795 = vpack.c.b16 %v1790, %v1789
        %v1796 = vpack.c.b16 %v1792, %v1791
        %vm1801 = vcmask 523264
        %v1803 = vsel %vm1801, %v1776, 0
        %1805 = vmatprep.subr.bf16.mxu0 0
        %1806 = vmatpush1.bf16.msra.mxu0 %v1793
        %1807 = vmatprep.subr.bf16.mxu0 0
        %1808 = vmatpush1.bf16.msra.mxu0 %v1794
        %1809 = vmatprep.subr.bf16.mxu0 0
        %1810 = vmatpush1.bf16.msra.mxu0 %v1795
        %1811 = vmatprep.subr.bf16.mxu0 0
        %1812 = vmatpush1.bf16.msra.mxu0 %v1796
        %1813 = vmatprep.subr.bf16.mxu0 0
        %1814 = vmatpush1.bf16.msra.mxu0 0
        %1815 = vmatprep.subr.bf16.mxu0 0
        %1816 = vmatpush1.bf16.msra.mxu0 0
        %1817 = vmatprep.subr.bf16.mxu0 0
        %1818 = vmatpush1.bf16.msra.mxu0 0
        %1819 = vmatprep.subr.bf16.mxu0 0
        %1820 = vmatpush1.bf16.msra.mxu0 0
        %1821 = vmatprep.subr.bf16.mxu0 0
        %1822 = vmatpush1.bf16.msra.mxu0 0
        %1823 = vmatprep.subr.bf16.mxu0 0
        %1824 = vmatpush1.bf16.msra.mxu0 0
        %1825 = vmatprep.subr.bf16.mxu0 0
        %1826 = vmatpush1.bf16.msra.mxu0 0
        %1827 = vmatprep.subr.bf16.mxu0 0
        %1828 = vmatpush1.bf16.msra.mxu0 0
        %1829 = vmatprep.subr.bf16.mxu0 0
        %1830 = vmatpush1.bf16.msra.mxu0 0
        %1831 = vmatprep.subr.bf16.mxu0 0
        %1832 = vmatpush1.bf16.msra.mxu0 0
        %1833 = vmatprep.subr.bf16.mxu0 0
        %1834 = vmatpush1.bf16.msra.mxu0 0
        %1835 = vmatprep.subr.bf16.mxu0 0
        %1836 = vmatpush1.bf16.msra.mxu0 0
        %1837 = vmatprep.mubr.bf16.mxu0 0
        %1838 = vmatmul.mubr.bf16.gmra.mrb[0].mxu0 %v1803
        %v1839 = vpop.f32.mrb[0].mxu0
        %v1840 = vadd.f32 0.0, %v1839
        %v1841 = vpop.f32.mrb[0].mxu0
        %v1842 = vpop.f32.mrb[0].mxu0
        %v1843 = vadd.f32 0.0, %v1842
        %v1844 = vpop.f32.mrb[0].mxu0
        %1845 = vdwg.mxu0
        %v1846 = vadd.f32 %v1651, %v1840
        %v1847 = vadd.f32 %v1652, %v1843
        %1848 = vst.msk [vmem:[#allocation2] sm:$0xff] %vm586, %v1846
        %1849 = vst.msk [vmem:[#allocation2 + $0x8] sm:$0xff] %vm586, %v1847
        %p1850 = scmp.eq.s32.totalorder %s25, 1
        // Predicated region
        $region77: #{paligemma_forward.3} parent=71 // pred_check
          %p1851 = pneg %p1850
        $region78: #{paligemma_forward.3} parent=71 // pred_check_branch
          %1853 = sbr.rel (%p1851) target = $region80
        $region79: #{paligemma_forward.3} parent=71 // pred_region
          %v1854 = vld [vmem:[%s11] sm:$0x1]
          %v1855 = vmul.f32 %v1846, %v1846
          %v1856 = vmul.f32 %v1847, %v1847
          %v1857 = vsel %vm586, %v1855, 0.0
          %1858 = vadd.xlane.f32.xlu0 %v1857
          %v1859 = vpop.xlane.xlu0 %1858
          %v1860 = vsel %vm586, %v1856, 0.0
          %1861 = vadd.xlane.f32.xlu0 %v1860
          %v1862 = vpop.xlane.xlu0 %1861
          %v1863 = vmul.f32 %v1859, %v593
          %v1864 = vmul.f32 %v1862, %v593
          %v1865 = vadd.f32 %v1863, 1e-06
          %v1866 = vadd.f32 %v1864, 1e-06
          %v1867 = vrsqrt.pop %v1865
          %v1868 = vrsqrt.pop %v1866
          %v1869 = vmul.f32 %v1846, %v1867
          %v1870 = vmul.f32 %v1847, %v1868
          %v1871 = vadd.f32 %v1854, 1.0
          %v1873 = vlaneseq
          %v1874 = vshrl.u32 %v1873, 7
          %v1875 = vsub.s32 0, %v1874
          %v1876 = vrot.slane %v1871, %v1875
          %v1878 = vmul.f32 %v1869, %v1876
          %v1879 = vmul.f32 %v1870, %v1876
          %v1880 = vld [vmem:[%s12] sm:$0xf]
          %v1881 = vld [vmem:[%s12 + $0x4] sm:$0xf]
          %v1882 = vld [vmem:[%s12 + $0x8] sm:$0xf]
          %v1883 = vld [vmem:[%s12 + $0xc] sm:$0xf]
          %v1884 = vld [vmem:[%s12 + $0x10] sm:$0xf]
          %v1885 = vld [vmem:[%s12 + $0x14] sm:$0xf]
          %v1886 = vld [vmem:[%s12 + $0x18] sm:$0xf]
          %v1887 = vld [vmem:[%s12 + $0x1c] sm:$0xf]
          %v1888 = vld [vmem:[%s12 + $0x20] sm:$0xf]
          %v1889 = vld [vmem:[%s12 + $0x24] sm:$0xf]
          %v1890 = vld [vmem:[%s12 + $0x28] sm:$0xf]
          %v1891 = vld [vmem:[%s12 + $0x2c] sm:$0xf]
          %v1892 = vld [vmem:[%s12 + $0x30] sm:$0xf]
          %v1893 = vld [vmem:[%s12 + $0x34] sm:$0xf]
          %v1894 = vld [vmem:[%s12 + $0x38] sm:$0xf]
          %v1895 = vld [vmem:[%s12 + $0x3c] sm:$0xf]
          %v1896 = vpack.c.bf16 %v1879, %v1878
          %v1913 = vunpack.c.l.b16 %v1880
          %v1914 = vunpack.c.l.b16 %v1881
          %v1915 = vunpack.c.l.b16 %v1882
          %v1916 = vunpack.c.l.b16 %v1883
          %v1917 = vunpack.c.l.b16 %v1884
          %v1918 = vunpack.c.l.b16 %v1885
          %v1919 = vunpack.c.l.b16 %v1886
          %v1920 = vunpack.c.l.b16 %v1887
          %v1921 = vunpack.c.l.b16 %v1888
          %v1922 = vunpack.c.l.b16 %v1889
          %v1923 = vunpack.c.l.b16 %v1890
          %v1924 = vunpack.c.l.b16 %v1891
          %v1925 = vunpack.c.l.b16 %v1892
          %v1926 = vunpack.c.l.b16 %v1893
          %v1927 = vunpack.c.l.b16 %v1894
          %v1928 = vunpack.c.l.b16 %v1895
          %v1929 = vpack.c.b16 %v1914, %v1913
          %v1930 = vpack.c.b16 %v1916, %v1915
          %v1931 = vpack.c.b16 %v1918, %v1917
          %v1932 = vpack.c.b16 %v1920, %v1919
          %v1933 = vpack.c.b16 %v1922, %v1921
          %v1934 = vpack.c.b16 %v1924, %v1923
          %v1935 = vpack.c.b16 %v1926, %v1925
          %v1936 = vpack.c.b16 %v1928, %v1927
          %v1938 = vsel %vm586, %v1896, 0
          %v1941 = vsel %vm586, %v1929, 0
          %v1944 = vsel %vm586, %v1930, 0
          %v1947 = vsel %vm586, %v1931, 0
          %v1950 = vsel %vm586, %v1932, 0
          %v1953 = vsel %vm586, %v1933, 0
          %v1956 = vsel %vm586, %v1934, 0
          %v1959 = vsel %vm586, %v1935, 0
          %v1962 = vsel %vm586, %v1936, 0
          %1964 = vmatprep.subr.bf16.mxu0 0
          %1965 = vmatpush1.bf16.xpose.msra.mxu0 %v1941
          %1966 = vmatprep.subr.bf16.mxu0 0
          %1967 = vmatpush1.bf16.xpose.msra.mxu0 %v1944
          %1968 = vmatprep.subr.bf16.mxu0 0
          %1969 = vmatpush1.bf16.xpose.msra.mxu0 %v1947
          %1970 = vmatprep.subr.bf16.mxu0 0
          %1971 = vmatpush1.bf16.xpose.msra.mxu0 %v1950
          %1972 = vmatprep.subr.bf16.mxu0 0
          %1973 = vmatpush1.bf16.xpose.msra.mxu0 %v1953
          %1974 = vmatprep.subr.bf16.mxu0 0
          %1975 = vmatpush1.bf16.xpose.msra.mxu0 %v1956
          %1976 = vmatprep.subr.bf16.mxu0 0
          %1977 = vmatpush1.bf16.xpose.msra.mxu0 %v1959
          %1978 = vmatprep.subr.bf16.mxu0 0
          %1979 = vmatpush1.bf16.xpose.msra.mxu0 %v1962
          %1980 = vmatprep.subr.bf16.mxu0 0
          %1981 = vmatpush1.bf16.xpose.msra.mxu0 0
          %1982 = vmatprep.subr.bf16.mxu0 0
          %1983 = vmatpush1.bf16.xpose.msra.mxu0 0
          %1984 = vmatprep.subr.bf16.mxu0 0
          %1985 = vmatpush1.bf16.xpose.msra.mxu0 0
          %1986 = vmatprep.subr.bf16.mxu0 0
          %1987 = vmatpush1.bf16.xpose.msra.mxu0 0
          %1988 = vmatprep.subr.bf16.mxu0 0
          %1989 = vmatpush1.bf16.xpose.msra.mxu0 0
          %1990 = vmatprep.subr.bf16.mxu0 0
          %1991 = vmatpush1.bf16.xpose.msra.mxu0 0
          %1992 = vmatprep.subr.bf16.mxu0 0
          %1993 = vmatpush1.bf16.xpose.msra.mxu0 0
          %1994 = vmatprep.subr.bf16.mxu0 0
          %1995 = vmatpush1.bf16.xpose.msra.mxu0 0
          %1996 = vmatprep.mubr.bf16.mxu0 0
          %1997 = vmatmul.mubr.bf16.gmra.mrb[0].mxu0 %v1938
          %v1998 = vpop.f32.mrb[0].mxu0
          %v1999 = vadd.f32 0.0, %v1998
          %v2000 = vpop.f32.mrb[0].mxu0
          %v2001 = vpop.f32.mrb[0].mxu0
          %v2002 = vadd.f32 0.0, %v2001
          %v2003 = vpop.f32.mrb[0].mxu0
          %2004 = vdwg.mxu0
          %2005 = vst [vmem:[#allocation3] sm:$0xff] %v1999
          %2006 = vst [vmem:[#allocation3 + $0x8] sm:$0xff] %v2002
        $region80: #{paligemma_forward.3} parent=71 // pred_fallthru
          _
        // Predicated region
        $region81: #{paligemma_forward.3} parent=71 // pred_check
          %p2007 = pneg %p341
        $region82: #{paligemma_forward.3} parent=71 // pred_check_branch
          %2009 = sbr.rel (%p2007) target = $region84
        $region83: #{paligemma_forward.3} parent=71 // pred_region
          %s2011 = ssub.s32 256, 256
          %2012 = vsyncadd [#allocation4], %s2011
          %s2013 = sshll.u32 [#allocation3], 4
          %s2014 = int_to_ptr.vmem [resolvable:$true] %s2013
          %2019 = dma.vmem_to_hbm [thread:$0]  %s2014, 256, %s13, [#allocation4], 128, 128, 8
        $region84: #{paligemma_forward.3} parent=71 // pred_fallthru
          _
        // Predicated region
        $region85: #{paligemma_forward.3} parent=71 // pred_check
          %p2020 = pneg %p341
        $region86: #{paligemma_forward.3} parent=71 // pred_check_branch
          %2022 = sbr.rel (%p2020) target = $region88
        $region87: #{paligemma_forward.3} parent=71 // pred_region
          %2023 = dma.done [#allocation4], 256
        $region88: #{paligemma_forward.3} parent=71 // pred_fallthru
          _
      $region72: #{paligemma_forward.3} parent=5 // pred_fallthru
        _
      %p2024 = scmp.le.s32.totalorder 2, %s20
      // Predicated region
      $region89: #{paligemma_forward.3} parent=5 // pred_check
        %p2025 = pneg %p2024
      $region90: #{paligemma_forward.3} parent=5 // pred_check_branch
        %2027 = sbr.rel (%p2025) target = $region92
      $region91: #{paligemma_forward.3} parent=5 // pred_region
        %s2028 = ssub.s32 %s20, 2
      $region92: #{paligemma_forward.3} parent=5 // pred_fallthru
        _
    $region6: #{paligemma_forward.3} parent=1 // loop_footer
      %s24 = sadd.s32 1, %s20
    $region7: #{paligemma_forward.3} parent=1 // loop_footer_branch
      %19 = sbr.rel target = $region3
    $region8: #{paligemma_forward.3} parent=1 // loop_exit
      _
    %2029 = vsyncpa [#allocation4], 1
    %s2030 = scalar_lea.sflag [#allocation4], 1
    %2031 = vsyncpa %s2030, 1

</llo_original>
